<compile_context>
chip_gen: v5e
topology: v5e:2x2
jax: 0.10.0
libtpu: 0.0.40
codegen_flags: <defaults>
</compile_context>

<pallas_src>
import functools

import numpy as np
import jax
import jax.numpy as jnp
from jax import lax
from jax.experimental import pallas as pl
from jax.experimental.pallas import tpu as pltpu


def _decoder_kernel(p_ref, pn_ref, cfeat_ref, wl_ref, hl_ref,
                    wp_ref, bp_ref,
                    wc_ref, bc_ref,
                    w0_ref, b0_ref,
                    w1_ref, b1_ref,
                    wout_ref, bout_ref,
                    out_ref,
                    *, n_blocks, n_planes, plane_h, plane_w, hw_padded, hidden):
    tT = p_ref.shape[1]
    C = cfeat_ref.shape[1]
    feat_dtype = cfeat_ref.dtype

    wl = wl_ref[...]                         # (1, HWp) f32: column index of each pixel lane
    hl = hl_ref[...]                         # (1, HWp) f32: row index of each pixel lane

    # --- bilinear grid_sample(border, align_corners=True), summed over planes ------------
    # Hat-function weights give exactly the 4-corner bilinear weights for clipped coords.
    c_sum = None
    for pi in range(n_planes):
        xy = pn_ref[0, pi]                                                   # (tT, 2)
        ix = jnp.clip(xy[:, 0:1] * (plane_w - 1), 0.0, plane_w - 1.0)        # (tT, 1)
        iy = jnp.clip(xy[:, 1:2] * (plane_h - 1), 0.0, plane_h - 1.0)
        wx = jnp.maximum(1.0 - jnp.abs(wl - ix), 0.0)                        # (tT, HWp)
        wy = jnp.maximum(1.0 - jnp.abs(hl - iy), 0.0)
        wgt = (wx * wy).astype(feat_dtype)
        feat = cfeat_ref[0, :, pi * hw_padded:(pi + 1) * hw_padded]          # (C, HWp)
        contrib = lax.dot_general(wgt, feat,
                                  dimension_numbers=(((1,), (1,)), ((), ())),
                                  preferred_element_type=jnp.float32)        # (tT, C)
        c_sum = contrib if c_sum is None else c_sum + contrib

    # --- fc_p on the VPU (K=dim is tiny; overlaps with interpolation-weight VALU work) ----
    p_blk = p_ref[0]                                                         # (tT, dim)
    net = p_blk[:, 0:1] * wp_ref[0:1, :] + bp_ref[...]
    for d in range(1, p_blk.shape[1]):
        net = net + p_blk[:, d:d + 1] * wp_ref[d:d + 1, :]                   # (tT, Hp)

    # --- all fc_c contributions at once (c is loop-invariant across the residual blocks) --
    c_all = jnp.dot(c_sum.astype(wc_ref.dtype), wc_ref[...],
                    preferred_element_type=jnp.float32) + bc_ref[...]        # (tT, nb*Hp)

    # --- ResnetBlockFC x n_blocks (identity shortcut since size_in == size_out) -----------
    for i in range(n_blocks):
        net = net + c_all[:, i * hidden:(i + 1) * hidden]
        h = jnp.maximum(net, 0.0).astype(w0_ref.dtype)
        h = jnp.dot(h, w0_ref[i], preferred_element_type=jnp.float32) + b0_ref[i]
        h = jnp.maximum(h, 0.0).astype(w1_ref.dtype)
        net = net + jnp.dot(h, w1_ref[i],
                            preferred_element_type=jnp.float32) + b1_ref[i]

    # --- fc_out, lane-dense (1, tT) with no explicit transpose of net ---------------------
    net_act = jnp.maximum(net, 0.0)
    out_row = lax.dot_general(wout_ref[...], net_act,
                              dimension_numbers=(((1,), (1,)), ((), ())),
                              preferred_element_type=jnp.float32) + bout_ref[...]
    out_ref[0] = out_row                                                     # (1, tT)


def patch_local_decoder(p, p_n_planes, c_planes, params, *, n_blocks=5, tile_t=256,
                        mm_dtype=jnp.bfloat16):
    """p: (B,T,3); p_n_planes: {plane: (B,T,2)} normalized to [0,1] (grid_sample (x,y) order,
    align_corners=True / border semantics); c_planes: {plane: (B,C,H,W)} NCHW.
    mm_dtype: storage dtype of the feature slab and the large MLP weights (bf16 recommended
    on TPU; accumulation stays f32)."""
    assert tile_t % 128 == 0, "tile_t must be a multiple of 128 (lane-dense output)"
    keys = [k for k in ("xz", "xy", "yz") if k in c_planes]
    B, T, dim = p.shape
    C = c_planes[keys[0]].shape[1]
    H, W = c_planes[keys[0]].shape[2], c_planes[keys[0]].shape[3]
    P = len(keys)
    hid = params["wp"].shape[1]
    Hp = max(128, -(-hid // 128) * 128)            # pad hidden to a multiple of 128 (exactly 128
    pad_h = Hp - hid                               #   for the default hidden sizes; ideal on v5e)

    HW = H * W
    HWp = max(128, -(-HW // 128) * 128)            # lane-align each plane's pixel axis
    pad_hw = HWp - HW

    # --- pack / pad inputs ---------------------------------------------------
    Tp = -(-T // tile_t) * tile_t
    p_f = p.astype(jnp.float32)
    pn = jnp.stack([p_n_planes[k].astype(jnp.float32) for k in keys], axis=1)   # (B,P,T,2)
    if Tp != T:
        p_f = jnp.pad(p_f, ((0, 0), (0, Tp - T), (0, 0)))
        pn = jnp.pad(pn, ((0, 0), (0, 0), (0, Tp - T), (0, 0)))
    # Channel-major fused feature slab (B, C, P*HWp): no NCHW transpose, lane-dense DMA.
    cf = jnp.concatenate(
        [jnp.pad(c_planes[k].reshape(B, C, HW).astype(mm_dtype),
                 ((0, 0), (0, 0), (0, pad_hw))) for k in keys],
        axis=2)                                                                  # (B, C, P*HWp)

    # Per-pixel lane constants; padded lanes get sentinel -2 so hat weights are exactly 0.
    wl_np = np.full((1, HWp), -2.0, np.float32)
    hl_np = np.full((1, HWp), -2.0, np.float32)
    wl_np[0, :HW] = np.arange(HW) % W
    hl_np[0, :HW] = np.arange(HW) // W
    wl = jnp.asarray(wl_np)
    hl = jnp.asarray(hl_np)

    # --- pack / pad weights (hidden -> Hp; fuse fc_c layers; large mats in mm_dtype) -------
    wp = jnp.pad(params["wp"], ((0, 0), (0, pad_h))).astype(jnp.float32)         # (dim, Hp)
    bp = jnp.pad(params["bp"], ((0, 0), (0, pad_h))).astype(jnp.float32)         # (1, Hp)
    wc_all = jnp.transpose(jnp.pad(params["wc"], ((0, 0), (0, 0), (0, pad_h))),
                           (1, 0, 2)).reshape(C, n_blocks * Hp).astype(mm_dtype)  # (C, nb*Hp)
    bc_all = jnp.pad(params["bc"], ((0, 0), (0, 0), (0, pad_h))
                     ).reshape(1, n_blocks * Hp).astype(jnp.float32)
    w0 = jnp.pad(params["w0"], ((0, 0), (0, pad_h), (0, pad_h))).astype(mm_dtype)  # (nb, Hp, Hp)
    b0 = jnp.pad(params["b0"], ((0, 0), (0, 0), (0, pad_h))).astype(jnp.float32)   # (nb, 1, Hp)
    w1 = jnp.pad(params["w1"], ((0, 0), (0, pad_h), (0, pad_h))).astype(mm_dtype)
    b1 = jnp.pad(params["b1"], ((0, 0), (0, 0), (0, pad_h))).astype(jnp.float32)
    wout_t = jnp.pad(params["wout"].T, ((0, 0), (0, pad_h))).astype(jnp.float32)   # (1, Hp)
    bout = params["bout"].astype(jnp.float32)                                      # (1, 1)

    # --- grid / specs --------------------------------------------------------
    grid = (B, Tp // tile_t)

    def full_spec(arr):
        nd = arr.ndim
        return pl.BlockSpec(arr.shape, lambda b, ti, _nd=nd: (0,) * _nd)

    in_specs = [
        pl.BlockSpec((1, tile_t, dim), lambda b, ti: (b, ti, 0)),
        pl.BlockSpec((1, P, tile_t, 2), lambda b, ti: (b, 0, ti, 0)),
        pl.BlockSpec((1, C, P * HWp), lambda b, ti: (b, 0, 0)),
        full_spec(wl), full_spec(hl),
        full_spec(wp), full_spec(bp),
        full_spec(wc_all), full_spec(bc_all),
        full_spec(w0), full_spec(b0),
        full_spec(w1), full_spec(b1),
        full_spec(wout_t), full_spec(bout),
    ]
    out_spec = pl.BlockSpec((1, 1, tile_t), lambda b, ti: (b, 0, ti))

    # Advisory cost estimate so XLA schedules the wrapper's pad/concat around the call.
    n_steps = int(np.prod(grid))
    mm_bytes = jnp.dtype(mm_dtype).itemsize
    flops_step = 2 * tile_t * (P * HWp * C + C * n_blocks * Hp
                               + n_blocks * 2 * Hp * Hp + Hp + dim * Hp)
    bytes_step = tile_t * (dim + 2 * P + 1) * 4 + C * P * HWp * mm_bytes
    weight_bytes = ((wc_all.size + w0.size + w1.size) * mm_bytes
                    + (wp.size + bp.size + bc_all.size + b0.size + b1.size
                       + wout_t.size + bout.size) * 4)
    cost = pl.CostEstimate(flops=int(n_steps * flops_step),
                           transcendentals=0,
                           bytes_accessed=int(n_steps * bytes_step + weight_bytes))

    kernel = functools.partial(_decoder_kernel, n_blocks=n_blocks, n_planes=P,
                               plane_h=H, plane_w=W, hw_padded=HWp, hidden=Hp)
    out = pl.pallas_call(
        kernel,
        out_shape=jax.ShapeDtypeStruct((B, 1, Tp), jnp.float32),
        grid=grid,
        in_specs=in_specs,
        out_specs=out_spec,
        compiler_params=pltpu.CompilerParams(
            dimension_semantics=("parallel", "parallel"),
            vmem_limit_bytes=64 * 1024 * 1024),
        cost_estimate=cost,
    )(p_f, pn, cf, wl, hl,
      wp, bp, wc_all, bc_all, w0, b0, w1, b1, wout_t, bout)
    return out[:, 0, :T]                                                        # (B, T)


# ---------------- pure-JAX reference (for correctness check) ----------------
def _ref_sample_2d(c_nchw, pn):
    B, C, H, W = c_nchw.shape
    cfeat = jnp.transpose(c_nchw, (0, 2, 3, 1)).reshape(B, H * W, C)
    ix = jnp.clip(pn[..., 0] * (W - 1), 0.0, W - 1.0)
    iy = jnp.clip(pn[..., 1] * (H - 1), 0.0, H - 1.0)
    x0 = jnp.floor(ix); dx = ix - x0
    y0 = jnp.floor(iy); dy = iy - y0
    x0i = x0.astype(jnp.int32); y0i = y0.astype(jnp.int32)
    x1i = jnp.minimum(x0i + 1, W - 1); y1i = jnp.minimum(y0i + 1, H - 1)

    def g(yi, xi):
        idx = yi * W + xi
        idx = jnp.broadcast_to(idx[..., None], idx.shape + (C,))
        return jnp.take_along_axis(cfeat, idx, axis=1)

    return (g(y0i, x0i) * ((1 - dx) * (1 - dy))[..., None]
            + g(y0i, x1i) * (dx * (1 - dy))[..., None]
            + g(y1i, x0i) * ((1 - dx) * dy)[..., None]
            + g(y1i, x1i) * (dx * dy)[..., None])                               # (B, T, C)


def ref_forward(p, p_n_planes, c_planes, params, n_blocks=5):
    keys = [k for k in ("xz", "xy", "yz") if k in c_planes]
    c = 0.0
    for k in keys:
        c = c + _ref_sample_2d(c_planes[k], p_n_planes[k])
    net = p @ params["wp"] + params["bp"]
    for i in range(n_blocks):
        net = net + c @ params["wc"][i] + params["bc"][i]
        h = jax.nn.relu(net) @ params["w0"][i] + params["b0"][i]
        d = jax.nn.relu(h) @ params["w1"][i] + params["b1"][i]
        net = net + d
    out = jax.nn.relu(net) @ params["wout"] + params["bout"]
    return out[..., 0]


def init_params(key, dim=3, c_dim=32, hidden=64, n_blocks=5):
    def lin(k, fan_in, shape):
        bound = 1.0 / np.sqrt(fan_in)
        return jax.random.uniform(k, shape, jnp.float32, -bound, bound)

    ks = jax.random.split(key, 10)
    # NOTE: torch zero-inits ResnetBlockFC.fc_1.weight; we use small random values
    # here so the whole hot path is numerically exercised (synthetic init).
    return dict(
        wp=lin(ks[0], dim, (dim, hidden)),       bp=lin(ks[1], dim, (1, hidden)),
        wc=lin(ks[2], c_dim, (n_blocks, c_dim, hidden)),
        bc=lin(ks[3], c_dim, (n_blocks, 1, hidden)),
        w0=lin(ks[4], hidden, (n_blocks, hidden, hidden)),
        b0=lin(ks[5], hidden, (n_blocks, 1, hidden)),
        w1=lin(ks[6], hidden, (n_blocks, hidden, hidden)),
        b1=lin(ks[7], hidden, (n_blocks, 1, hidden)),
        wout=lin(ks[8], hidden, (hidden, 1)),    bout=lin(ks[9], hidden, (1, 1)),
    )


if __name__ == "__main__":
    key = jax.random.PRNGKey(0)
    B, T, dim = 2, 256, 3
    c_dim, hidden, n_blocks = 32, 64, 5
    H = W = 8

    k = jax.random.split(key, 8)
    p = jax.random.uniform(k[0], (B, T, dim), jnp.float32, -0.55, 0.55)
    plane_names = ("xz", "xy", "yz")
    # slightly outside [0,1] to exercise padding_mode='border'
    p_n = {name: jax.random.uniform(kk, (B, T, 2), jnp.float32, -0.05, 1.05)
           for name, kk in zip(plane_names, (k[1], k[2], k[3]))}
    c_plane = {name: jax.random.normal(kk, (B, c_dim, H, W), jnp.float32)
               for name, kk in zip(plane_names, (k[4], k[5], k[6]))}
    params = init_params(k[7], dim=dim, c_dim=c_dim, hidden=hidden, n_blocks=n_blocks)

    ref = jax.block_until_ready(ref_forward(p, p_n, c_plane, params, n_blocks=n_blocks))

    # tile_t=128 -> grid (B=2, T-tiles=2): >=2 even parallel tiles (keeps both v7x TCs busy).
    # 1) all-f32 storage: tight numerical check against the f32 reference.
    out_f32 = patch_local_decoder(p, p_n, c_plane, params, n_blocks=n_blocks,
                                  tile_t=128, mm_dtype=jnp.float32)
    out_f32 = jax.block_until_ready(out_f32)
    assert out_f32.shape == (B, T)
    np.testing.assert_allclose(np.asarray(out_f32), np.asarray(ref), atol=2e-3, rtol=2e-3)

    # 2) bf16 feature-slab / MLP-weight storage (f32 accumulation): production path,
    #    looser tolerance against the f32 reference.
    out_bf16 = patch_local_decoder(p, p_n, c_plane, params, n_blocks=n_blocks,
                                   tile_t=128, mm_dtype=jnp.bfloat16)
    out_bf16 = jax.block_until_ready(out_bf16)
    assert out_bf16.shape == (B, T)
    np.testing.assert_allclose(np.asarray(out_bf16), np.asarray(ref), atol=1e-1, rtol=1e-1)

    print("KERNEL_OK")
</pallas_src>

<mosaic_0001>
module attributes {stable_mosaic.version = 11 : i64} {
  func.func @_decoder_kernel(%arg0: i32, %arg1: i32, %arg2: memref<1x128x3xf32, #tpu.memory_space<vmem>>, %arg3: memref<1x3x128x2xf32, #tpu.memory_space<vmem>>, %arg4: memref<1x32x384xf32, #tpu.memory_space<vmem>>, %arg5: memref<1x128xf32, #tpu.memory_space<vmem>>, %arg6: memref<1x128xf32, #tpu.memory_space<vmem>>, %arg7: memref<3x128xf32, #tpu.memory_space<vmem>>, %arg8: memref<1x128xf32, #tpu.memory_space<vmem>>, %arg9: memref<32x640xf32, #tpu.memory_space<vmem>>, %arg10: memref<1x640xf32, #tpu.memory_space<vmem>>, %arg11: memref<5x128x128xf32, #tpu.memory_space<vmem>>, %arg12: memref<5x1x128xf32, #tpu.memory_space<vmem>>, %arg13: memref<5x128x128xf32, #tpu.memory_space<vmem>>, %arg14: memref<5x1x128xf32, #tpu.memory_space<vmem>>, %arg15: memref<1x128xf32, #tpu.memory_space<vmem>>, %arg16: memref<1x1xf32, #tpu.memory_space<vmem>>, %arg17: memref<1x1x128xf32, #tpu.memory_space<vmem>>) attributes {dimension_semantics = [#tpu.dimension_semantics<parallel>, #tpu.dimension_semantics<parallel>], iteration_bounds = array<i64: 2, 2>, scalar_prefetch = 0 : i64, scratch_operands = 0 : i64, tpu.core_type = #tpu.core_type<tc>, window_params = [{transform_indices = @transform_0, window_bounds = array<i64: 1, 128, 3>}, {transform_indices = @transform_1, window_bounds = array<i64: 1, 3, 128, 2>}, {transform_indices = @transform_2, window_bounds = array<i64: 1, 32, 384>}, {pipeline_mode = #tpu.pipeline_mode<synchronous>, transform_indices = @transform_3, window_bounds = array<i64: 1, 128>}, {pipeline_mode = #tpu.pipeline_mode<synchronous>, transform_indices = @transform_4, window_bounds = array<i64: 1, 128>}, {pipeline_mode = #tpu.pipeline_mode<synchronous>, transform_indices = @transform_5, window_bounds = array<i64: 3, 128>}, {pipeline_mode = #tpu.pipeline_mode<synchronous>, transform_indices = @transform_6, window_bounds = array<i64: 1, 128>}, {pipeline_mode = #tpu.pipeline_mode<synchronous>, transform_indices = @transform_7, window_bounds = array<i64: 32, 640>}, {pipeline_mode = #tpu.pipeline_mode<synchronous>, transform_indices = @transform_8, window_bounds = array<i64: 1, 640>}, {pipeline_mode = #tpu.pipeline_mode<synchronous>, transform_indices = @transform_9, window_bounds = array<i64: 5, 128, 128>}, {pipeline_mode = #tpu.pipeline_mode<synchronous>, transform_indices = @transform_10, window_bounds = array<i64: 5, 1, 128>}, {pipeline_mode = #tpu.pipeline_mode<synchronous>, transform_indices = @transform_11, window_bounds = array<i64: 5, 128, 128>}, {pipeline_mode = #tpu.pipeline_mode<synchronous>, transform_indices = @transform_12, window_bounds = array<i64: 5, 1, 128>}, {pipeline_mode = #tpu.pipeline_mode<synchronous>, transform_indices = @transform_13, window_bounds = array<i64: 1, 128>}, {pipeline_mode = #tpu.pipeline_mode<synchronous>, transform_indices = @transform_14, window_bounds = array<i64: 1, 1>}, {transform_indices = @transform_15, window_bounds = array<i64: 1, 1, 128>}]} {
    %c0 = arith.constant 0 : index
    %c0_0 = arith.constant 0 : index
    %0 = vector.load %arg5[%c0, %c0_0] : memref<1x128xf32, #tpu.memory_space<vmem>>, vector<1x128xf32>
    %c0_1 = arith.constant 0 : index
    %c0_2 = arith.constant 0 : index
    %1 = vector.load %arg6[%c0_1, %c0_2] : memref<1x128xf32, #tpu.memory_space<vmem>>, vector<1x128xf32>
    %c0_3 = arith.constant 0 : index
    %c0_4 = arith.constant 0 : index
    %c0_5 = arith.constant 0 : index
    %c0_6 = arith.constant 0 : index
    %2 = vector.load %arg3[%c0_3, %c0_4, %c0_5, %c0_6] : memref<1x3x128x2xf32, #tpu.memory_space<vmem>>, vector<1x1x128x2xf32>
    %3 = vector.shape_cast %2 : vector<1x1x128x2xf32> to vector<128x2xf32>
    %4 = vector.extract_strided_slice %3 {offsets = [0, 0], sizes = [128, 1], strides = [1, 1]} : vector<128x2xf32> to vector<128x1xf32>
    %cst = arith.constant 7.000000e+00 : f32
    %5 = vector.broadcast %cst : f32 to vector<128x1xf32>
    %6 = arith.mulf %4, %5 : vector<128x1xf32>
    %cst_7 = arith.constant 0.000000e+00 : f32
    %cst_8 = arith.constant 7.000000e+00 : f32
    %7 = vector.broadcast %cst_7 : f32 to vector<128x1xf32>
    %8 = arith.maximumf %7, %6 : vector<128x1xf32>
    %9 = vector.broadcast %cst_8 : f32 to vector<128x1xf32>
    %10 = arith.minimumf %9, %8 : vector<128x1xf32>
    %11 = vector.extract_strided_slice %3 {offsets = [0, 1], sizes = [128, 1], strides = [1, 1]} : vector<128x2xf32> to vector<128x1xf32>
    %cst_9 = arith.constant 7.000000e+00 : f32
    %12 = vector.broadcast %cst_9 : f32 to vector<128x1xf32>
    %13 = arith.mulf %11, %12 : vector<128x1xf32>
    %cst_10 = arith.constant 0.000000e+00 : f32
    %cst_11 = arith.constant 7.000000e+00 : f32
    %14 = vector.broadcast %cst_10 : f32 to vector<128x1xf32>
    %15 = arith.maximumf %14, %13 : vector<128x1xf32>
    %16 = vector.broadcast %cst_11 : f32 to vector<128x1xf32>
    %17 = arith.minimumf %16, %15 : vector<128x1xf32>
    %18 = vector.broadcast %0 : vector<1x128xf32> to vector<128x128xf32>
    %19 = vector.broadcast %10 : vector<128x1xf32> to vector<128x128xf32>
    %20 = arith.subf %18, %19 : vector<128x128xf32>
    %21 = math.absf %20 : vector<128x128xf32>
    %cst_12 = arith.constant 1.000000e+00 : f32
    %22 = vector.broadcast %cst_12 : f32 to vector<128x128xf32>
    %23 = arith.subf %22, %21 : vector<128x128xf32>
    %cst_13 = arith.constant 0.000000e+00 : f32
    %24 = vector.broadcast %cst_13 : f32 to vector<128x128xf32>
    %25 = arith.maximumf %23, %24 : vector<128x128xf32>
    %26 = vector.broadcast %1 : vector<1x128xf32> to vector<128x128xf32>
    %27 = vector.broadcast %17 : vector<128x1xf32> to vector<128x128xf32>
    %28 = arith.subf %26, %27 : vector<128x128xf32>
    %29 = math.absf %28 : vector<128x128xf32>
    %cst_14 = arith.constant 1.000000e+00 : f32
    %30 = vector.broadcast %cst_14 : f32 to vector<128x128xf32>
    %31 = arith.subf %30, %29 : vector<128x128xf32>
    %cst_15 = arith.constant 0.000000e+00 : f32
    %32 = vector.broadcast %cst_15 : f32 to vector<128x128xf32>
    %33 = arith.maximumf %31, %32 : vector<128x128xf32>
    %34 = arith.mulf %25, %33 : vector<128x128xf32>
    %c0_16 = arith.constant 0 : index
    %c0_17 = arith.constant 0 : index
    %c0_18 = arith.constant 0 : index
    %35 = vector.load %arg4[%c0_16, %c0_17, %c0_18] : memref<1x32x384xf32, #tpu.memory_space<vmem>>, vector<1x32x128xf32>
    %36 = vector.shape_cast %35 : vector<1x32x128xf32> to vector<32x128xf32>
    %cst_19 = arith.constant dense<0.000000e+00> : vector<128x32xf32>
    %37 = tpu.matmul %34, %36, %cst_19 {dimension_numbers = #tpu.dot_dimension_numbers<[1], [1], [0], [0], [0, 0, 1, 0], [], []>} : vector<128x128xf32>, vector<32x128xf32>, vector<128x32xf32> -> vector<128x32xf32>
    %c0_20 = arith.constant 0 : index
    %c1 = arith.constant 1 : index
    %c0_21 = arith.constant 0 : index
    %c0_22 = arith.constant 0 : index
    %38 = vector.load %arg3[%c0_20, %c1, %c0_21, %c0_22] : memref<1x3x128x2xf32, #tpu.memory_space<vmem>>, vector<1x1x128x2xf32>
    %39 = vector.shape_cast %38 : vector<1x1x128x2xf32> to vector<128x2xf32>
    %40 = vector.extract_strided_slice %39 {offsets = [0, 0], sizes = [128, 1], strides = [1, 1]} : vector<128x2xf32> to vector<128x1xf32>
    %cst_23 = arith.constant 7.000000e+00 : f32
    %41 = vector.broadcast %cst_23 : f32 to vector<128x1xf32>
    %42 = arith.mulf %40, %41 : vector<128x1xf32>
    %cst_24 = arith.constant 0.000000e+00 : f32
    %cst_25 = arith.constant 7.000000e+00 : f32
    %43 = vector.broadcast %cst_24 : f32 to vector<128x1xf32>
    %44 = arith.maximumf %43, %42 : vector<128x1xf32>
    %45 = vector.broadcast %cst_25 : f32 to vector<128x1xf32>
    %46 = arith.minimumf %45, %44 : vector<128x1xf32>
    %47 = vector.extract_strided_slice %39 {offsets = [0, 1], sizes = [128, 1], strides = [1, 1]} : vector<128x2xf32> to vector<128x1xf32>
    %cst_26 = arith.constant 7.000000e+00 : f32
    %48 = vector.broadcast %cst_26 : f32 to vector<128x1xf32>
    %49 = arith.mulf %47, %48 : vector<128x1xf32>
    %cst_27 = arith.constant 0.000000e+00 : f32
    %cst_28 = arith.constant 7.000000e+00 : f32
    %50 = vector.broadcast %cst_27 : f32 to vector<128x1xf32>
    %51 = arith.maximumf %50, %49 : vector<128x1xf32>
    %52 = vector.broadcast %cst_28 : f32 to vector<128x1xf32>
    %53 = arith.minimumf %52, %51 : vector<128x1xf32>
    %54 = vector.broadcast %0 : vector<1x128xf32> to vector<128x128xf32>
    %55 = vector.broadcast %46 : vector<128x1xf32> to vector<128x128xf32>
    %56 = arith.subf %54, %55 : vector<128x128xf32>
    %57 = math.absf %56 : vector<128x128xf32>
    %cst_29 = arith.constant 1.000000e+00 : f32
    %58 = vector.broadcast %cst_29 : f32 to vector<128x128xf32>
    %59 = arith.subf %58, %57 : vector<128x128xf32>
    %cst_30 = arith.constant 0.000000e+00 : f32
    %60 = vector.broadcast %cst_30 : f32 to vector<128x128xf32>
    %61 = arith.maximumf %59, %60 : vector<128x128xf32>
    %62 = vector.broadcast %1 : vector<1x128xf32> to vector<128x128xf32>
    %63 = vector.broadcast %53 : vector<128x1xf32> to vector<128x128xf32>
    %64 = arith.subf %62, %63 : vector<128x128xf32>
    %65 = math.absf %64 : vector<128x128xf32>
    %cst_31 = arith.constant 1.000000e+00 : f32
    %66 = vector.broadcast %cst_31 : f32 to vector<128x128xf32>
    %67 = arith.subf %66, %65 : vector<128x128xf32>
    %cst_32 = arith.constant 0.000000e+00 : f32
    %68 = vector.broadcast %cst_32 : f32 to vector<128x128xf32>
    %69 = arith.maximumf %67, %68 : vector<128x128xf32>
    %70 = arith.mulf %61, %69 : vector<128x128xf32>
    %c0_33 = arith.constant 0 : index
    %c0_34 = arith.constant 0 : index
    %c128 = arith.constant 128 : index
    %71 = vector.load %arg4[%c0_33, %c0_34, %c128] : memref<1x32x384xf32, #tpu.memory_space<vmem>>, vector<1x32x128xf32>
    %72 = vector.shape_cast %71 : vector<1x32x128xf32> to vector<32x128xf32>
    %cst_35 = arith.constant dense<0.000000e+00> : vector<128x32xf32>
    %73 = tpu.matmul %70, %72, %cst_35 {dimension_numbers = #tpu.dot_dimension_numbers<[1], [1], [0], [0], [0, 0, 1, 0], [], []>} : vector<128x128xf32>, vector<32x128xf32>, vector<128x32xf32> -> vector<128x32xf32>
    %74 = arith.addf %37, %73 : vector<128x32xf32>
    %c0_36 = arith.constant 0 : index
    %c2 = arith.constant 2 : index
    %c0_37 = arith.constant 0 : index
    %c0_38 = arith.constant 0 : index
    %75 = vector.load %arg3[%c0_36, %c2, %c0_37, %c0_38] : memref<1x3x128x2xf32, #tpu.memory_space<vmem>>, vector<1x1x128x2xf32>
    %76 = vector.shape_cast %75 : vector<1x1x128x2xf32> to vector<128x2xf32>
    %77 = vector.extract_strided_slice %76 {offsets = [0, 0], sizes = [128, 1], strides = [1, 1]} : vector<128x2xf32> to vector<128x1xf32>
    %cst_39 = arith.constant 7.000000e+00 : f32
    %78 = vector.broadcast %cst_39 : f32 to vector<128x1xf32>
    %79 = arith.mulf %77, %78 : vector<128x1xf32>
    %cst_40 = arith.constant 0.000000e+00 : f32
    %cst_41 = arith.constant 7.000000e+00 : f32
    %80 = vector.broadcast %cst_40 : f32 to vector<128x1xf32>
    %81 = arith.maximumf %80, %79 : vector<128x1xf32>
    %82 = vector.broadcast %cst_41 : f32 to vector<128x1xf32>
    %83 = arith.minimumf %82, %81 : vector<128x1xf32>
    %84 = vector.extract_strided_slice %76 {offsets = [0, 1], sizes = [128, 1], strides = [1, 1]} : vector<128x2xf32> to vector<128x1xf32>
    %cst_42 = arith.constant 7.000000e+00 : f32
    %85 = vector.broadcast %cst_42 : f32 to vector<128x1xf32>
    %86 = arith.mulf %84, %85 : vector<128x1xf32>
    %cst_43 = arith.constant 0.000000e+00 : f32
    %cst_44 = arith.constant 7.000000e+00 : f32
    %87 = vector.broadcast %cst_43 : f32 to vector<128x1xf32>
    %88 = arith.maximumf %87, %86 : vector<128x1xf32>
    %89 = vector.broadcast %cst_44 : f32 to vector<128x1xf32>
    %90 = arith.minimumf %89, %88 : vector<128x1xf32>
    %91 = vector.broadcast %0 : vector<1x128xf32> to vector<128x128xf32>
    %92 = vector.broadcast %83 : vector<128x1xf32> to vector<128x128xf32>
    %93 = arith.subf %91, %92 : vector<128x128xf32>
    %94 = math.absf %93 : vector<128x128xf32>
    %cst_45 = arith.constant 1.000000e+00 : f32
    %95 = vector.broadcast %cst_45 : f32 to vector<128x128xf32>
    %96 = arith.subf %95, %94 : vector<128x128xf32>
    %cst_46 = arith.constant 0.000000e+00 : f32
    %97 = vector.broadcast %cst_46 : f32 to vector<128x128xf32>
    %98 = arith.maximumf %96, %97 : vector<128x128xf32>
    %99 = vector.broadcast %1 : vector<1x128xf32> to vector<128x128xf32>
    %100 = vector.broadcast %90 : vector<128x1xf32> to vector<128x128xf32>
    %101 = arith.subf %99, %100 : vector<128x128xf32>
    %102 = math.absf %101 : vector<128x128xf32>
    %cst_47 = arith.constant 1.000000e+00 : f32
    %103 = vector.broadcast %cst_47 : f32 to vector<128x128xf32>
    %104 = arith.subf %103, %102 : vector<128x128xf32>
    %cst_48 = arith.constant 0.000000e+00 : f32
    %105 = vector.broadcast %cst_48 : f32 to vector<128x128xf32>
    %106 = arith.maximumf %104, %105 : vector<128x128xf32>
    %107 = arith.mulf %98, %106 : vector<128x128xf32>
    %c0_49 = arith.constant 0 : index
    %c0_50 = arith.constant 0 : index
    %c256 = arith.constant 256 : index
    %108 = vector.load %arg4[%c0_49, %c0_50, %c256] : memref<1x32x384xf32, #tpu.memory_space<vmem>>, vector<1x32x128xf32>
    %109 = vector.shape_cast %108 : vector<1x32x128xf32> to vector<32x128xf32>
    %cst_51 = arith.constant dense<0.000000e+00> : vector<128x32xf32>
    %110 = tpu.matmul %107, %109, %cst_51 {dimension_numbers = #tpu.dot_dimension_numbers<[1], [1], [0], [0], [0, 0, 1, 0], [], []>} : vector<128x128xf32>, vector<32x128xf32>, vector<128x32xf32> -> vector<128x32xf32>
    %111 = arith.addf %74, %110 : vector<128x32xf32>
    %c0_52 = arith.constant 0 : index
    %c0_53 = arith.constant 0 : index
    %c0_54 = arith.constant 0 : index
    %112 = vector.load %arg2[%c0_52, %c0_53, %c0_54] : memref<1x128x3xf32, #tpu.memory_space<vmem>>, vector<1x128x3xf32>
    %113 = vector.shape_cast %112 : vector<1x128x3xf32> to vector<128x3xf32>
    %114 = vector.extract_strided_slice %113 {offsets = [0, 0], sizes = [128, 1], strides = [1, 1]} : vector<128x3xf32> to vector<128x1xf32>
    %c0_55 = arith.constant 0 : index
    %c0_56 = arith.constant 0 : index
    %115 = vector.load %arg7[%c0_55, %c0_56] : memref<3x128xf32, #tpu.memory_space<vmem>>, vector<1x128xf32>
    %116 = vector.broadcast %114 : vector<128x1xf32> to vector<128x128xf32>
    %117 = vector.broadcast %115 : vector<1x128xf32> to vector<128x128xf32>
    %118 = arith.mulf %116, %117 : vector<128x128xf32>
    %c0_57 = arith.constant 0 : index
    %c0_58 = arith.constant 0 : index
    %119 = vector.load %arg8[%c0_57, %c0_58] : memref<1x128xf32, #tpu.memory_space<vmem>>, vector<1x128xf32>
    %120 = vector.broadcast %119 : vector<1x128xf32> to vector<128x128xf32>
    %121 = arith.addf %118, %120 : vector<128x128xf32>
    %122 = vector.extract_strided_slice %113 {offsets = [0, 1], sizes = [128, 1], strides = [1, 1]} : vector<128x3xf32> to vector<128x1xf32>
    %c1_59 = arith.constant 1 : index
    %c0_60 = arith.constant 0 : index
    %123 = vector.load %arg7[%c1_59, %c0_60] : memref<3x128xf32, #tpu.memory_space<vmem>>, vector<1x128xf32>
    %124 = vector.broadcast %122 : vector<128x1xf32> to vector<128x128xf32>
    %125 = vector.broadcast %123 : vector<1x128xf32> to vector<128x128xf32>
    %126 = arith.mulf %124, %125 : vector<128x128xf32>
    %127 = arith.addf %121, %126 : vector<128x128xf32>
    %128 = vector.extract_strided_slice %113 {offsets = [0, 2], sizes = [128, 1], strides = [1, 1]} : vector<128x3xf32> to vector<128x1xf32>
    %c2_61 = arith.constant 2 : index
    %c0_62 = arith.constant 0 : index
    %129 = vector.load %arg7[%c2_61, %c0_62] : memref<3x128xf32, #tpu.memory_space<vmem>>, vector<1x128xf32>
    %130 = vector.broadcast %128 : vector<128x1xf32> to vector<128x128xf32>
    %131 = vector.broadcast %129 : vector<1x128xf32> to vector<128x128xf32>
    %132 = arith.mulf %130, %131 : vector<128x128xf32>
    %133 = arith.addf %127, %132 : vector<128x128xf32>
    %c0_63 = arith.constant 0 : index
    %c0_64 = arith.constant 0 : index
    %134 = vector.load %arg9[%c0_63, %c0_64] : memref<32x640xf32, #tpu.memory_space<vmem>>, vector<32x640xf32>
    %cst_65 = arith.constant dense<0.000000e+00> : vector<128x640xf32>
    %135 = tpu.matmul %111, %134, %cst_65 {dimension_numbers = #tpu.dot_dimension_numbers<[1], [0], [0], [1], [0, 0, 1, 1], [], []>} : vector<128x32xf32>, vector<32x640xf32>, vector<128x640xf32> -> vector<128x640xf32>
    %c0_66 = arith.constant 0 : index
    %c0_67 = arith.constant 0 : index
    %136 = vector.load %arg10[%c0_66, %c0_67] : memref<1x640xf32, #tpu.memory_space<vmem>>, vector<1x640xf32>
    %137 = vector.broadcast %136 : vector<1x640xf32> to vector<128x640xf32>
    %138 = arith.addf %135, %137 : vector<128x640xf32>
    %139 = vector.extract_strided_slice %138 {offsets = [0, 0], sizes = [128, 128], strides = [1, 1]} : vector<128x640xf32> to vector<128x128xf32>
    %140 = arith.addf %133, %139 : vector<128x128xf32>
    %cst_68 = arith.constant 0.000000e+00 : f32
    %141 = vector.broadcast %cst_68 : f32 to vector<128x128xf32>
    %142 = arith.maximumf %140, %141 : vector<128x128xf32>
    %c0_69 = arith.constant 0 : index
    %c0_70 = arith.constant 0 : index
    %c0_71 = arith.constant 0 : index
    %143 = vector.load %arg11[%c0_69, %c0_70, %c0_71] : memref<5x128x128xf32, #tpu.memory_space<vmem>>, vector<1x128x128xf32>
    %144 = vector.shape_cast %143 : vector<1x128x128xf32> to vector<128x128xf32>
    %cst_72 = arith.constant dense<0.000000e+00> : vector<128x128xf32>
    %145 = tpu.matmul %142, %144, %cst_72 {dimension_numbers = #tpu.dot_dimension_numbers<[1], [0], [0], [1], [0, 0, 1, 1], [], []>} : vector<128x128xf32>, vector<128x128xf32>, vector<128x128xf32> -> vector<128x128xf32>
    %c0_73 = arith.constant 0 : index
    %c0_74 = arith.constant 0 : index
    %c0_75 = arith.constant 0 : index
    %146 = vector.load %arg12[%c0_73, %c0_74, %c0_75] : memref<5x1x128xf32, #tpu.memory_space<vmem>>, vector<1x1x128xf32>
    %147 = vector.shape_cast %146 : vector<1x1x128xf32> to vector<1x128xf32>
    %148 = vector.broadcast %147 : vector<1x128xf32> to vector<128x128xf32>
    %149 = arith.addf %145, %148 : vector<128x128xf32>
    %cst_76 = arith.constant 0.000000e+00 : f32
    %150 = vector.broadcast %cst_76 : f32 to vector<128x128xf32>
    %151 = arith.maximumf %149, %150 : vector<128x128xf32>
    %c0_77 = arith.constant 0 : index
    %c0_78 = arith.constant 0 : index
    %c0_79 = arith.constant 0 : index
    %152 = vector.load %arg13[%c0_77, %c0_78, %c0_79] : memref<5x128x128xf32, #tpu.memory_space<vmem>>, vector<1x128x128xf32>
    %153 = vector.shape_cast %152 : vector<1x128x128xf32> to vector<128x128xf32>
    %cst_80 = arith.constant dense<0.000000e+00> : vector<128x128xf32>
    %154 = tpu.matmul %151, %153, %cst_80 {dimension_numbers = #tpu.dot_dimension_numbers<[1], [0], [0], [1], [0, 0, 1, 1], [], []>} : vector<128x128xf32>, vector<128x128xf32>, vector<128x128xf32> -> vector<128x128xf32>
    %155 = arith.addf %140, %154 : vector<128x128xf32>
    %c0_81 = arith.constant 0 : index
    %c0_82 = arith.constant 0 : index
    %c0_83 = arith.constant 0 : index
    %156 = vector.load %arg14[%c0_81, %c0_82, %c0_83] : memref<5x1x128xf32, #tpu.memory_space<vmem>>, vector<1x1x128xf32>
    %157 = vector.shape_cast %156 : vector<1x1x128xf32> to vector<1x128xf32>
    %158 = vector.broadcast %157 : vector<1x128xf32> to vector<128x128xf32>
    %159 = arith.addf %155, %158 : vector<128x128xf32>
    %160 = vector.extract_strided_slice %138 {offsets = [0, 128], sizes = [128, 128], strides = [1, 1]} : vector<128x640xf32> to vector<128x128xf32>
    %161 = arith.addf %159, %160 : vector<128x128xf32>
    %cst_84 = arith.constant 0.000000e+00 : f32
    %162 = vector.broadcast %cst_84 : f32 to vector<128x128xf32>
    %163 = arith.maximumf %161, %162 : vector<128x128xf32>
    %c1_85 = arith.constant 1 : index
    %c0_86 = arith.constant 0 : index
    %c0_87 = arith.constant 0 : index
    %164 = vector.load %arg11[%c1_85, %c0_86, %c0_87] : memref<5x128x128xf32, #tpu.memory_space<vmem>>, vector<1x128x128xf32>
    %165 = vector.shape_cast %164 : vector<1x128x128xf32> to vector<128x128xf32>
    %cst_88 = arith.constant dense<0.000000e+00> : vector<128x128xf32>
    %166 = tpu.matmul %163, %165, %cst_88 {dimension_numbers = #tpu.dot_dimension_numbers<[1], [0], [0], [1], [0, 0, 1, 1], [], []>} : vector<128x128xf32>, vector<128x128xf32>, vector<128x128xf32> -> vector<128x128xf32>
    %c1_89 = arith.constant 1 : index
    %c0_90 = arith.constant 0 : index
    %c0_91 = arith.constant 0 : index
    %167 = vector.load %arg12[%c1_89, %c0_90, %c0_91] : memref<5x1x128xf32, #tpu.memory_space<vmem>>, vector<1x1x128xf32>
    %168 = vector.shape_cast %167 : vector<1x1x128xf32> to vector<1x128xf32>
    %169 = vector.broadcast %168 : vector<1x128xf32> to vector<128x128xf32>
    %170 = arith.addf %166, %169 : vector<128x128xf32>
    %cst_92 = arith.constant 0.000000e+00 : f32
    %171 = vector.broadcast %cst_92 : f32 to vector<128x128xf32>
    %172 = arith.maximumf %170, %171 : vector<128x128xf32>
    %c1_93 = arith.constant 1 : index
    %c0_94 = arith.constant 0 : index
    %c0_95 = arith.constant 0 : index
    %173 = vector.load %arg13[%c1_93, %c0_94, %c0_95] : memref<5x128x128xf32, #tpu.memory_space<vmem>>, vector<1x128x128xf32>
    %174 = vector.shape_cast %173 : vector<1x128x128xf32> to vector<128x128xf32>
    %cst_96 = arith.constant dense<0.000000e+00> : vector<128x128xf32>
    %175 = tpu.matmul %172, %174, %cst_96 {dimension_numbers = #tpu.dot_dimension_numbers<[1], [0], [0], [1], [0, 0, 1, 1], [], []>} : vector<128x128xf32>, vector<128x128xf32>, vector<128x128xf32> -> vector<128x128xf32>
    %176 = arith.addf %161, %175 : vector<128x128xf32>
    %c1_97 = arith.constant 1 : index
    %c0_98 = arith.constant 0 : index
    %c0_99 = arith.constant 0 : index
    %177 = vector.load %arg14[%c1_97, %c0_98, %c0_99] : memref<5x1x128xf32, #tpu.memory_space<vmem>>, vector<1x1x128xf32>
    %178 = vector.shape_cast %177 : vector<1x1x128xf32> to vector<1x128xf32>
    %179 = vector.broadcast %178 : vector<1x128xf32> to vector<128x128xf32>
    %180 = arith.addf %176, %179 : vector<128x128xf32>
    %181 = vector.extract_strided_slice %138 {offsets = [0, 256], sizes = [128, 128], strides = [1, 1]} : vector<128x640xf32> to vector<128x128xf32>
    %182 = arith.addf %180, %181 : vector<128x128xf32>
    %cst_100 = arith.constant 0.000000e+00 : f32
    %183 = vector.broadcast %cst_100 : f32 to vector<128x128xf32>
    %184 = arith.maximumf %182, %183 : vector<128x128xf32>
    %c2_101 = arith.constant 2 : index
    %c0_102 = arith.constant 0 : index
    %c0_103 = arith.constant 0 : index
    %185 = vector.load %arg11[%c2_101, %c0_102, %c0_103] : memref<5x128x128xf32, #tpu.memory_space<vmem>>, vector<1x128x128xf32>
    %186 = vector.shape_cast %185 : vector<1x128x128xf32> to vector<128x128xf32>
    %cst_104 = arith.constant dense<0.000000e+00> : vector<128x128xf32>
    %187 = tpu.matmul %184, %186, %cst_104 {dimension_numbers = #tpu.dot_dimension_numbers<[1], [0], [0], [1], [0, 0, 1, 1], [], []>} : vector<128x128xf32>, vector<128x128xf32>, vector<128x128xf32> -> vector<128x128xf32>
    %c2_105 = arith.constant 2 : index
    %c0_106 = arith.constant 0 : index
    %c0_107 = arith.constant 0 : index
    %188 = vector.load %arg12[%c2_105, %c0_106, %c0_107] : memref<5x1x128xf32, #tpu.memory_space<vmem>>, vector<1x1x128xf32>
    %189 = vector.shape_cast %188 : vector<1x1x128xf32> to vector<1x128xf32>
    %190 = vector.broadcast %189 : vector<1x128xf32> to vector<128x128xf32>
    %191 = arith.addf %187, %190 : vector<128x128xf32>
    %cst_108 = arith.constant 0.000000e+00 : f32
    %192 = vector.broadcast %cst_108 : f32 to vector<128x128xf32>
    %193 = arith.maximumf %191, %192 : vector<128x128xf32>
    %c2_109 = arith.constant 2 : index
    %c0_110 = arith.constant 0 : index
    %c0_111 = arith.constant 0 : index
    %194 = vector.load %arg13[%c2_109, %c0_110, %c0_111] : memref<5x128x128xf32, #tpu.memory_space<vmem>>, vector<1x128x128xf32>
    %195 = vector.shape_cast %194 : vector<1x128x128xf32> to vector<128x128xf32>
    %cst_112 = arith.constant dense<0.000000e+00> : vector<128x128xf32>
    %196 = tpu.matmul %193, %195, %cst_112 {dimension_numbers = #tpu.dot_dimension_numbers<[1], [0], [0], [1], [0, 0, 1, 1], [], []>} : vector<128x128xf32>, vector<128x128xf32>, vector<128x128xf32> -> vector<128x128xf32>
    %197 = arith.addf %182, %196 : vector<128x128xf32>
    %c2_113 = arith.constant 2 : index
    %c0_114 = arith.constant 0 : index
    %c0_115 = arith.constant 0 : index
    %198 = vector.load %arg14[%c2_113, %c0_114, %c0_115] : memref<5x1x128xf32, #tpu.memory_space<vmem>>, vector<1x1x128xf32>
    %199 = vector.shape_cast %198 : vector<1x1x128xf32> to vector<1x128xf32>
    %200 = vector.broadcast %199 : vector<1x128xf32> to vector<128x128xf32>
    %201 = arith.addf %197, %200 : vector<128x128xf32>
    %202 = vector.extract_strided_slice %138 {offsets = [0, 384], sizes = [128, 128], strides = [1, 1]} : vector<128x640xf32> to vector<128x128xf32>
    %203 = arith.addf %201, %202 : vector<128x128xf32>
    %cst_116 = arith.constant 0.000000e+00 : f32
    %204 = vector.broadcast %cst_116 : f32 to vector<128x128xf32>
    %205 = arith.maximumf %203, %204 : vector<128x128xf32>
    %c3 = arith.constant 3 : index
    %c0_117 = arith.constant 0 : index
    %c0_118 = arith.constant 0 : index
    %206 = vector.load %arg11[%c3, %c0_117, %c0_118] : memref<5x128x128xf32, #tpu.memory_space<vmem>>, vector<1x128x128xf32>
    %207 = vector.shape_cast %206 : vector<1x128x128xf32> to vector<128x128xf32>
    %cst_119 = arith.constant dense<0.000000e+00> : vector<128x128xf32>
    %208 = tpu.matmul %205, %207, %cst_119 {dimension_numbers = #tpu.dot_dimension_numbers<[1], [0], [0], [1], [0, 0, 1, 1], [], []>} : vector<128x128xf32>, vector<128x128xf32>, vector<128x128xf32> -> vector<128x128xf32>
    %c3_120 = arith.constant 3 : index
    %c0_121 = arith.constant 0 : index
    %c0_122 = arith.constant 0 : index
    %209 = vector.load %arg12[%c3_120, %c0_121, %c0_122] : memref<5x1x128xf32, #tpu.memory_space<vmem>>, vector<1x1x128xf32>
    %210 = vector.shape_cast %209 : vector<1x1x128xf32> to vector<1x128xf32>
    %211 = vector.broadcast %210 : vector<1x128xf32> to vector<128x128xf32>
    %212 = arith.addf %208, %211 : vector<128x128xf32>
    %cst_123 = arith.constant 0.000000e+00 : f32
    %213 = vector.broadcast %cst_123 : f32 to vector<128x128xf32>
    %214 = arith.maximumf %212, %213 : vector<128x128xf32>
    %c3_124 = arith.constant 3 : index
    %c0_125 = arith.constant 0 : index
    %c0_126 = arith.constant 0 : index
    %215 = vector.load %arg13[%c3_124, %c0_125, %c0_126] : memref<5x128x128xf32, #tpu.memory_space<vmem>>, vector<1x128x128xf32>
    %216 = vector.shape_cast %215 : vector<1x128x128xf32> to vector<128x128xf32>
    %cst_127 = arith.constant dense<0.000000e+00> : vector<128x128xf32>
    %217 = tpu.matmul %214, %216, %cst_127 {dimension_numbers = #tpu.dot_dimension_numbers<[1], [0], [0], [1], [0, 0, 1, 1], [], []>} : vector<128x128xf32>, vector<128x128xf32>, vector<128x128xf32> -> vector<128x128xf32>
    %218 = arith.addf %203, %217 : vector<128x128xf32>
    %c3_128 = arith.constant 3 : index
    %c0_129 = arith.constant 0 : index
    %c0_130 = arith.constant 0 : index
    %219 = vector.load %arg14[%c3_128, %c0_129, %c0_130] : memref<5x1x128xf32, #tpu.memory_space<vmem>>, vector<1x1x128xf32>
    %220 = vector.shape_cast %219 : vector<1x1x128xf32> to vector<1x128xf32>
    %221 = vector.broadcast %220 : vector<1x128xf32> to vector<128x128xf32>
    %222 = arith.addf %218, %221 : vector<128x128xf32>
    %223 = vector.extract_strided_slice %138 {offsets = [0, 512], sizes = [128, 128], strides = [1, 1]} : vector<128x640xf32> to vector<128x128xf32>
    %224 = arith.addf %222, %223 : vector<128x128xf32>
    %cst_131 = arith.constant 0.000000e+00 : f32
    %225 = vector.broadcast %cst_131 : f32 to vector<128x128xf32>
    %226 = arith.maximumf %224, %225 : vector<128x128xf32>
    %c4 = arith.constant 4 : index
    %c0_132 = arith.constant 0 : index
    %c0_133 = arith.constant 0 : index
    %227 = vector.load %arg11[%c4, %c0_132, %c0_133] : memref<5x128x128xf32, #tpu.memory_space<vmem>>, vector<1x128x128xf32>
    %228 = vector.shape_cast %227 : vector<1x128x128xf32> to vector<128x128xf32>
    %cst_134 = arith.constant dense<0.000000e+00> : vector<128x128xf32>
    %229 = tpu.matmul %226, %228, %cst_134 {dimension_numbers = #tpu.dot_dimension_numbers<[1], [0], [0], [1], [0, 0, 1, 1], [], []>} : vector<128x128xf32>, vector<128x128xf32>, vector<128x128xf32> -> vector<128x128xf32>
    %c4_135 = arith.constant 4 : index
    %c0_136 = arith.constant 0 : index
    %c0_137 = arith.constant 0 : index
    %230 = vector.load %arg12[%c4_135, %c0_136, %c0_137] : memref<5x1x128xf32, #tpu.memory_space<vmem>>, vector<1x1x128xf32>
    %231 = vector.shape_cast %230 : vector<1x1x128xf32> to vector<1x128xf32>
    %232 = vector.broadcast %231 : vector<1x128xf32> to vector<128x128xf32>
    %233 = arith.addf %229, %232 : vector<128x128xf32>
    %cst_138 = arith.constant 0.000000e+00 : f32
    %234 = vector.broadcast %cst_138 : f32 to vector<128x128xf32>
    %235 = arith.maximumf %233, %234 : vector<128x128xf32>
    %c4_139 = arith.constant 4 : index
    %c0_140 = arith.constant 0 : index
    %c0_141 = arith.constant 0 : index
    %236 = vector.load %arg13[%c4_139, %c0_140, %c0_141] : memref<5x128x128xf32, #tpu.memory_space<vmem>>, vector<1x128x128xf32>
    %237 = vector.shape_cast %236 : vector<1x128x128xf32> to vector<128x128xf32>
    %cst_142 = arith.constant dense<0.000000e+00> : vector<128x128xf32>
    %238 = tpu.matmul %235, %237, %cst_142 {dimension_numbers = #tpu.dot_dimension_numbers<[1], [0], [0], [1], [0, 0, 1, 1], [], []>} : vector<128x128xf32>, vector<128x128xf32>, vector<128x128xf32> -> vector<128x128xf32>
    %239 = arith.addf %224, %238 : vector<128x128xf32>
    %c4_143 = arith.constant 4 : index
    %c0_144 = arith.constant 0 : index
    %c0_145 = arith.constant 0 : index
    %240 = vector.load %arg14[%c4_143, %c0_144, %c0_145] : memref<5x1x128xf32, #tpu.memory_space<vmem>>, vector<1x1x128xf32>
    %241 = vector.shape_cast %240 : vector<1x1x128xf32> to vector<1x128xf32>
    %242 = vector.broadcast %241 : vector<1x128xf32> to vector<128x128xf32>
    %243 = arith.addf %239, %242 : vector<128x128xf32>
    %cst_146 = arith.constant 0.000000e+00 : f32
    %244 = vector.broadcast %cst_146 : f32 to vector<128x128xf32>
    %245 = arith.maximumf %243, %244 : vector<128x128xf32>
    %c0_147 = arith.constant 0 : index
    %c0_148 = arith.constant 0 : index
    %246 = vector.load %arg15[%c0_147, %c0_148] : memref<1x128xf32, #tpu.memory_space<vmem>>, vector<1x128xf32>
    %cst_149 = arith.constant dense<0.000000e+00> : vector<1x128xf32>
    %247 = tpu.matmul %246, %245, %cst_149 {dimension_numbers = #tpu.dot_dimension_numbers<[1], [1], [0], [0], [0, 0, 1, 0], [], []>} : vector<1x128xf32>, vector<128x128xf32>, vector<1x128xf32> -> vector<1x128xf32>
    %c0_150 = arith.constant 0 : index
    %c0_151 = arith.constant 0 : index
    %248 = vector.load %arg16[%c0_150, %c0_151] : memref<1x1xf32, #tpu.memory_space<vmem>>, vector<1x1xf32>
    %249 = vector.broadcast %248 : vector<1x1xf32> to vector<1x128xf32>
    %250 = arith.addf %247, %249 : vector<1x128xf32>
    %c0_152 = arith.constant 0 : index
    %c0_153 = arith.constant 0 : index
    %c0_154 = arith.constant 0 : index
    %251 = vector.load %arg17[%c0_152, %c0_153, %c0_154] : memref<1x1x128xf32, #tpu.memory_space<vmem>>, vector<1x1x128xf32>
    %252 = vector.shape_cast %251 : vector<1x1x128xf32> to vector<1x128xf32>
    %253 = vector.shape_cast %250 : vector<1x128xf32> to vector<1x1x128xf32>
    tpu.vector_store %arg17[%c0_152, %c0_153, %c0_154], %253 {strides = array<i32>} : memref<1x1x128xf32, #tpu.memory_space<vmem>>, vector<1x1x128xf32>,
    return
  }
  func.func @transform_0(%arg0: i32, %arg1: i32) -> (i32, i32, i32) {
    %c0_i32 = arith.constant 0 : i32
    %c0_i32_0 = arith.constant 0 : i32
    return %arg0, %arg1, %c0_i32 : i32, i32, i32
  }
  func.func @transform_1(%arg0: i32, %arg1: i32) -> (i32, i32, i32, i32) {
    %c0_i32 = arith.constant 0 : i32
    %c0_i32_0 = arith.constant 0 : i32
    %c0_i32_1 = arith.constant 0 : i32
    return %arg0, %c0_i32, %arg1, %c0_i32_0 : i32, i32, i32, i32
  }
  func.func @transform_2(%arg0: i32, %arg1: i32) -> (i32, i32, i32) {
    %c0_i32 = arith.constant 0 : i32
    %c0_i32_0 = arith.constant 0 : i32
    %c0_i32_1 = arith.constant 0 : i32
    return %arg0, %c0_i32, %c0_i32_0 : i32, i32, i32
  }
  func.func @transform_3(%arg0: i32, %arg1: i32) -> (i32, i32) {
    %c0_i32 = arith.constant 0 : i32
    %c0_i32_0 = arith.constant 0 : i32
    %c0_i32_1 = arith.constant 0 : i32
    return %c0_i32, %c0_i32_0 : i32, i32
  }
  func.func @transform_4(%arg0: i32, %arg1: i32) -> (i32, i32) {
    %c0_i32 = arith.constant 0 : i32
    %c0_i32_0 = arith.constant 0 : i32
    %c0_i32_1 = arith.constant 0 : i32
    return %c0_i32, %c0_i32_0 : i32, i32
  }
  func.func @transform_5(%arg0: i32, %arg1: i32) -> (i32, i32) {
    %c0_i32 = arith.constant 0 : i32
    %c0_i32_0 = arith.constant 0 : i32
    %c0_i32_1 = arith.constant 0 : i32
    return %c0_i32, %c0_i32_0 : i32, i32
  }
  func.func @transform_6(%arg0: i32, %arg1: i32) -> (i32, i32) {
    %c0_i32 = arith.constant 0 : i32
    %c0_i32_0 = arith.constant 0 : i32
    %c0_i32_1 = arith.constant 0 : i32
    return %c0_i32, %c0_i32_0 : i32, i32
  }
  func.func @transform_7(%arg0: i32, %arg1: i32) -> (i32, i32) {
    %c0_i32 = arith.constant 0 : i32
    %c0_i32_0 = arith.constant 0 : i32
    %c0_i32_1 = arith.constant 0 : i32
    return %c0_i32, %c0_i32_0 : i32, i32
  }
  func.func @transform_8(%arg0: i32, %arg1: i32) -> (i32, i32) {
    %c0_i32 = arith.constant 0 : i32
    %c0_i32_0 = arith.constant 0 : i32
    %c0_i32_1 = arith.constant 0 : i32
    return %c0_i32, %c0_i32_0 : i32, i32
  }
  func.func @transform_9(%arg0: i32, %arg1: i32) -> (i32, i32, i32) {
    %c0_i32 = arith.constant 0 : i32
    %c0_i32_0 = arith.constant 0 : i32
    %c0_i32_1 = arith.constant 0 : i32
    %c0_i32_2 = arith.constant 0 : i32
    return %c0_i32, %c0_i32_0, %c0_i32_1 : i32, i32, i32
  }
  func.func @transform_10(%arg0: i32, %arg1: i32) -> (i32, i32, i32) {
    %c0_i32 = arith.constant 0 : i32
    %c0_i32_0 = arith.constant 0 : i32
    %c0_i32_1 = arith.constant 0 : i32
    %c0_i32_2 = arith.constant 0 : i32
    return %c0_i32, %c0_i32_0, %c0_i32_1 : i32, i32, i32
  }
  func.func @transform_11(%arg0: i32, %arg1: i32) -> (i32, i32, i32) {
    %c0_i32 = arith.constant 0 : i32
    %c0_i32_0 = arith.constant 0 : i32
    %c0_i32_1 = arith.constant 0 : i32
    %c0_i32_2 = arith.constant 0 : i32
    return %c0_i32, %c0_i32_0, %c0_i32_1 : i32, i32, i32
  }
  func.func @transform_12(%arg0: i32, %arg1: i32) -> (i32, i32, i32) {
    %c0_i32 = arith.constant 0 : i32
    %c0_i32_0 = arith.constant 0 : i32
    %c0_i32_1 = arith.constant 0 : i32
    %c0_i32_2 = arith.constant 0 : i32
    return %c0_i32, %c0_i32_0, %c0_i32_1 : i32, i32, i32
  }
  func.func @transform_13(%arg0: i32, %arg1: i32) -> (i32, i32) {
    %c0_i32 = arith.constant 0 : i32
    %c0_i32_0 = arith.constant 0 : i32
    %c0_i32_1 = arith.constant 0 : i32
    return %c0_i32, %c0_i32_0 : i32, i32
  }
  func.func @transform_14(%arg0: i32, %arg1: i32) -> (i32, i32) {
    %c0_i32 = arith.constant 0 : i32
    %c0_i32_0 = arith.constant 0 : i32
    %c0_i32_1 = arith.constant 0 : i32
    return %c0_i32, %c0_i32_0 : i32, i32
  }
  func.func @transform_15(%arg0: i32, %arg1: i32) -> (i32, i32, i32) {
    %c0_i32 = arith.constant 0 : i32
    %c0_i32_0 = arith.constant 0 : i32
    return %arg0, %c0_i32, %arg1 : i32, i32, i32
  }
}

</mosaic_0001>

<llo_original>
// kernel: tpu_custom_call.1
$region0: #{tpu_custom_call.1}
  #allocation0 [shape = 'u32[]', space=smem, size = 0x4, offset = 0x4, fixed_abs, tag = 'smem constant byte address 0x4 - core index']
  #allocation1 [shape = 'u32[72,128]{1,0:T(1,128)}', space=vmem, size = 0x9000, scoped, tag = 'internal scratch']
  #allocation2 [shape = 'f32[1,1]{1,0:T(1,128)S(1)}', space=vmem, size = 0x200, scoped, tag = 'scoped memory for tpu_custom_call.1']
  %s0 = inlined_call_operand.vmem [shape: f32[2,256,3], index: 0, kind: input, shape index: {}]
  %s1 = inlined_call_operand.vmem [shape: f32[2,3,256,2], index: 1, kind: input, shape index: {}]
  %s2 = inlined_call_operand.vmem [shape: f32[2,32,384], index: 2, kind: input, shape index: {}]
  %s3 = inlined_call_operand.vmem [shape: f32[1,128], index: 3, kind: input, shape index: {}]
  %s4 = inlined_call_operand.vmem [shape: f32[1,128], index: 4, kind: input, shape index: {}]
  %s5 = inlined_call_operand.vmem [shape: f32[3,128], index: 5, kind: input, shape index: {}]
  %s6 = inlined_call_operand.vmem [shape: f32[1,128], index: 6, kind: input, shape index: {}]
  %s7 = inlined_call_operand.vmem [shape: f32[32,640], index: 7, kind: input, shape index: {}]
  %s8 = inlined_call_operand.vmem [shape: f32[1,640], index: 8, kind: input, shape index: {}]
  %s9 = inlined_call_operand.vmem [shape: f32[5,128,128], index: 9, kind: input, shape index: {}]
  %s10 = inlined_call_operand.vmem [shape: f32[5,1,128], index: 10, kind: input, shape index: {}]
  %s11 = inlined_call_operand.vmem [shape: f32[5,128,128], index: 11, kind: input, shape index: {}]
  %s12 = inlined_call_operand.vmem [shape: f32[5,1,128], index: 12, kind: input, shape index: {}]
  %s13 = inlined_call_operand.vmem [shape: f32[1,128], index: 13, kind: input, shape index: {}]
  %s14 = inlined_call_operand.<no memory space> [shape: f32[1,1], index: 14, kind: input, shape index: {}]
  %s15 = inlined_call_operand.hbm [shape: f32[2,1,256], index: 15, kind: output, shape index: {}]
  %s16 = sld [smem:[#allocation0]]
  $region131: #{tpu_custom_call.1} parent=0
    _
  %s18 = ssub.s32 1, %s16
  %s19 = scalar_select 0, %s18, %s16
  %v20 = vstv %s14
  %21 = vst [vmem:[#allocation2] sm:$0x1] %v20
  $region1: #{tpu_custom_call.1} parent=0
    #allocation3 [shape = 'u8[393216]{0}', space=vmem, size = 0x60000, scoped, tag = 'input window, operand 1']
    #allocation4 [shape = 'u8[1024]{0}', space=vmem, size = 0x400, scoped, tag = 'output window, operand 0']
    #allocation5 [shape = 's32[2]{0}', space=sflag, size = 0x8, scoped, tag = 'scoped memory for tpu_custom_call.1']
    %22 = vsyncpa [#allocation5], 0
    %s23 = scalar_lea.sflag [#allocation5], 1
    %24 = vsyncpa %s23, 0
    loop: start=0, step=1, limit=6
    $region2: #{tpu_custom_call.1} parent=1 // loop_pre_header
      _
    $region3: #{tpu_custom_call.1} parent=1 // loop_header
      %s26 = sphi 0, %s30
      %p27 = scmp.ge.s32.totalorder %s26, 6
      %s33 = sphi 0, %s45
      %s34 = sphi 0, %s41
      %s35 = sphi 0, %s33
      %s36 = sphi 0, %s34
      %s37 = sphi 0, %s35
      %s38 = sphi 0, %s36
      %s50 = sphi 0, %s52
      %s53 = sphi 0, %s50
      %s54 = sphi 0, %s53
      %s70 = sphi 0, %s54
      %s78 = sphi 0, %s80
      %s81 = sphi 0, %s78
      %s82 = sphi 0, %s81
      %s98 = sphi 0, %s82
      %s104 = sphi 0, %s106
      %s107 = sphi 0, %s104
      %s108 = sphi 0, %s107
      %s124 = sphi 0, %s108
      %s128 = sphi 0, %s128
      %s130 = sphi 0, %s128
      %s131 = sphi 0, %s130
      %s145 = sphi 0, %s131
      %s149 = sphi 0, %s149
      %s151 = sphi 0, %s149
      %s152 = sphi 0, %s151
      %s166 = sphi 0, %s152
      %s170 = sphi 0, %s170
      %s172 = sphi 0, %s170
      %s173 = sphi 0, %s172
      %s187 = sphi 0, %s173
      %s191 = sphi 0, %s191
      %s193 = sphi 0, %s191
      %s194 = sphi 0, %s193
      %s208 = sphi 0, %s194
      %s212 = sphi 0, %s212
      %s214 = sphi 0, %s212
      %s215 = sphi 0, %s214
      %s229 = sphi 0, %s215
      %s233 = sphi 0, %s233
      %s235 = sphi 0, %s233
      %s236 = sphi 0, %s235
      %s250 = sphi 0, %s236
      %s254 = sphi 0, %s254
      %s256 = sphi 0, %s254
      %s257 = sphi 0, %s256
      %s271 = sphi 0, %s257
      %s275 = sphi 0, %s275
      %s277 = sphi 0, %s275
      %s278 = sphi 0, %s277
      %s292 = sphi 0, %s278
      %s296 = sphi 0, %s296
      %s298 = sphi 0, %s296
      %s299 = sphi 0, %s298
      %s313 = sphi 0, %s299
      %s317 = sphi 0, %s317
      %s319 = sphi 0, %s317
      %s320 = sphi 0, %s319
      %s334 = sphi 0, %s320
      %s338 = sphi 0, %s338
      %s340 = sphi 0, %s338
      %s341 = sphi 0, %s340
      %s355 = sphi 0, %s341
      %s359 = sphi 0, %s359
      %s361 = sphi 0, %s359
      %s362 = sphi 0, %s361
      %s376 = sphi 0, %s362
      %s384 = sphi 0, %s386
      %s387 = sphi 0, %s384
      %s388 = sphi 0, %s387
      %s404 = sphi 0, %s388
    $region4: #{tpu_custom_call.1} parent=1 // loop_header_branch
      %29 = sbr.rel (%p27) target = $region8
    $region5: #{tpu_custom_call.1} parent=1 // loop_body
      %s31 = ssub.s32 %s26, 1
      %s32 = ssub.s32 %s26, 2
      %s39 = sadd.s32 1, %s34
      %p40 = scmp.ge.s32.totalorder %s39, 2
      %s41 = scalar_select %p40, 0, %s39
      %s42 = sadd.s32 1, %s33
      %s43 = scalar_select %p40, %s42, %s33
      %p44 = scmp.ge.s32.totalorder %s43, 2
      %s45 = scalar_select %p44, 0, %s43
      %s46 = ssub.s32 %s33, %s45
      %s47 = ssub.s32 %s34, %s41
      %s48 = sor.u32 %s46, %s47
      %p49 = scmp.eq.s32.totalorder %s48, 0
      %s51 = sadd.s32 %s50, 1
      %s52 = scalar_select %p49, %s50, %s51
      %p55 = pneg %p49
      %p56 = scmp.eq.s32.totalorder %s26, 3
      %p57 = por %p55, %p56
      %p58 = scmp.ne.s32.totalorder %s50, %s53
      %p59 = scmp.eq.s32.totalorder %s26, 0
      %p60 = por %p58, %p59
      %p61 = scmp.ne.s32.totalorder %s50, %s53
      %p62 = scmp.eq.s32.totalorder %s31, 3
      %p63 = por %p61, %p62
      %p64 = scmp.ne.s32.totalorder %s53, %s54
      %p65 = scmp.eq.s32.totalorder %s31, 0
      %p66 = por %p64, %p65
      %p67 = scmp.ne.s32.totalorder %s53, %s54
      %p68 = scmp.eq.s32.totalorder %s32, 3
      %p69 = por %p67, %p68
      %p71 = scmp.ne.s32.totalorder %s54, %s70
      %p72 = scmp.eq.s32.totalorder %s32, 0
      %p73 = por %p71, %p72
      %s74 = ssub.s32 %s33, %s45
      %s75 = ssub.s32 %s34, %s41
      %s76 = sor.u32 %s74, %s75
      %p77 = scmp.eq.s32.totalorder %s76, 0
      %s79 = sadd.s32 %s78, 1
      %s80 = scalar_select %p77, %s78, %s79
      %p83 = pneg %p77
      %p84 = scmp.eq.s32.totalorder %s26, 3
      %p85 = por %p83, %p84
      %p86 = scmp.ne.s32.totalorder %s78, %s81
      %p87 = scmp.eq.s32.totalorder %s26, 0
      %p88 = por %p86, %p87
      %p89 = scmp.ne.s32.totalorder %s78, %s81
      %p90 = scmp.eq.s32.totalorder %s31, 3
      %p91 = por %p89, %p90
      %p92 = scmp.ne.s32.totalorder %s81, %s82
      %p93 = scmp.eq.s32.totalorder %s31, 0
      %p94 = por %p92, %p93
      %p95 = scmp.ne.s32.totalorder %s81, %s82
      %p96 = scmp.eq.s32.totalorder %s32, 3
      %p97 = por %p95, %p96
      %p99 = scmp.ne.s32.totalorder %s82, %s98
      %p100 = scmp.eq.s32.totalorder %s32, 0
      %p101 = por %p99, %p100
      %s102 = ssub.s32 %s33, %s45
      %p103 = scmp.eq.s32.totalorder %s102, 0
      %s105 = sadd.s32 %s104, 1
      %s106 = scalar_select %p103, %s104, %s105
      %p109 = pneg %p103
      %p110 = scmp.eq.s32.totalorder %s26, 3
      %p111 = por %p109, %p110
      %p112 = scmp.ne.s32.totalorder %s104, %s107
      %p113 = scmp.eq.s32.totalorder %s26, 0
      %p114 = por %p112, %p113
      %p115 = scmp.ne.s32.totalorder %s104, %s107
      %p116 = scmp.eq.s32.totalorder %s31, 3
      %p117 = por %p115, %p116
      %p118 = scmp.ne.s32.totalorder %s107, %s108
      %p119 = scmp.eq.s32.totalorder %s31, 0
      %p120 = por %p118, %p119
      %p121 = scmp.ne.s32.totalorder %s107, %s108
      %p122 = scmp.eq.s32.totalorder %s32, 3
      %p123 = por %p121, %p122
      %p125 = scmp.ne.s32.totalorder %s108, %s124
      %p126 = scmp.eq.s32.totalorder %s32, 0
      %p127 = por %p125, %p126
      %s129 = sadd.s32 %s128, 1
      %p132 = scmp.eq.s32.totalorder %s26, 3
      %p133 = scmp.ne.s32.totalorder %s128, %s130
      %p134 = scmp.eq.s32.totalorder %s26, 0
      %p135 = por %p133, %p134
      %p136 = scmp.ne.s32.totalorder %s128, %s130
      %p137 = scmp.eq.s32.totalorder %s31, 3
      %p138 = por %p136, %p137
      %p139 = scmp.ne.s32.totalorder %s130, %s131
      %p140 = scmp.eq.s32.totalorder %s31, 0
      %p141 = por %p139, %p140
      %p142 = scmp.ne.s32.totalorder %s130, %s131
      %p143 = scmp.eq.s32.totalorder %s32, 3
      %p144 = por %p142, %p143
      %p146 = scmp.ne.s32.totalorder %s131, %s145
      %p147 = scmp.eq.s32.totalorder %s32, 0
      %p148 = por %p146, %p147
      %s150 = sadd.s32 %s149, 1
      %p153 = scmp.eq.s32.totalorder %s26, 3
      %p154 = scmp.ne.s32.totalorder %s149, %s151
      %p155 = scmp.eq.s32.totalorder %s26, 0
      %p156 = por %p154, %p155
      %p157 = scmp.ne.s32.totalorder %s149, %s151
      %p158 = scmp.eq.s32.totalorder %s31, 3
      %p159 = por %p157, %p158
      %p160 = scmp.ne.s32.totalorder %s151, %s152
      %p161 = scmp.eq.s32.totalorder %s31, 0
      %p162 = por %p160, %p161
      %p163 = scmp.ne.s32.totalorder %s151, %s152
      %p164 = scmp.eq.s32.totalorder %s32, 3
      %p165 = por %p163, %p164
      %p167 = scmp.ne.s32.totalorder %s152, %s166
      %p168 = scmp.eq.s32.totalorder %s32, 0
      %p169 = por %p167, %p168
      %s171 = sadd.s32 %s170, 1
      %p174 = scmp.eq.s32.totalorder %s26, 3
      %p175 = scmp.ne.s32.totalorder %s170, %s172
      %p176 = scmp.eq.s32.totalorder %s26, 0
      %p177 = por %p175, %p176
      %p178 = scmp.ne.s32.totalorder %s170, %s172
      %p179 = scmp.eq.s32.totalorder %s31, 3
      %p180 = por %p178, %p179
      %p181 = scmp.ne.s32.totalorder %s172, %s173
      %p182 = scmp.eq.s32.totalorder %s31, 0
      %p183 = por %p181, %p182
      %p184 = scmp.ne.s32.totalorder %s172, %s173
      %p185 = scmp.eq.s32.totalorder %s32, 3
      %p186 = por %p184, %p185
      %p188 = scmp.ne.s32.totalorder %s173, %s187
      %p189 = scmp.eq.s32.totalorder %s32, 0
      %p190 = por %p188, %p189
      %s192 = sadd.s32 %s191, 1
      %p195 = scmp.eq.s32.totalorder %s26, 3
      %p196 = scmp.ne.s32.totalorder %s191, %s193
      %p197 = scmp.eq.s32.totalorder %s26, 0
      %p198 = por %p196, %p197
      %p199 = scmp.ne.s32.totalorder %s191, %s193
      %p200 = scmp.eq.s32.totalorder %s31, 3
      %p201 = por %p199, %p200
      %p202 = scmp.ne.s32.totalorder %s193, %s194
      %p203 = scmp.eq.s32.totalorder %s31, 0
      %p204 = por %p202, %p203
      %p205 = scmp.ne.s32.totalorder %s193, %s194
      %p206 = scmp.eq.s32.totalorder %s32, 3
      %p207 = por %p205, %p206
      %p209 = scmp.ne.s32.totalorder %s194, %s208
      %p210 = scmp.eq.s32.totalorder %s32, 0
      %p211 = por %p209, %p210
      %s213 = sadd.s32 %s212, 1
      %p216 = scmp.eq.s32.totalorder %s26, 3
      %p217 = scmp.ne.s32.totalorder %s212, %s214
      %p218 = scmp.eq.s32.totalorder %s26, 0
      %p219 = por %p217, %p218
      %p220 = scmp.ne.s32.totalorder %s212, %s214
      %p221 = scmp.eq.s32.totalorder %s31, 3
      %p222 = por %p220, %p221
      %p223 = scmp.ne.s32.totalorder %s214, %s215
      %p224 = scmp.eq.s32.totalorder %s31, 0
      %p225 = por %p223, %p224
      %p226 = scmp.ne.s32.totalorder %s214, %s215
      %p227 = scmp.eq.s32.totalorder %s32, 3
      %p228 = por %p226, %p227
      %p230 = scmp.ne.s32.totalorder %s215, %s229
      %p231 = scmp.eq.s32.totalorder %s32, 0
      %p232 = por %p230, %p231
      %s234 = sadd.s32 %s233, 1
      %p237 = scmp.eq.s32.totalorder %s26, 3
      %p238 = scmp.ne.s32.totalorder %s233, %s235
      %p239 = scmp.eq.s32.totalorder %s26, 0
      %p240 = por %p238, %p239
      %p241 = scmp.ne.s32.totalorder %s233, %s235
      %p242 = scmp.eq.s32.totalorder %s31, 3
      %p243 = por %p241, %p242
      %p244 = scmp.ne.s32.totalorder %s235, %s236
      %p245 = scmp.eq.s32.totalorder %s31, 0
      %p246 = por %p244, %p245
      %p247 = scmp.ne.s32.totalorder %s235, %s236
      %p248 = scmp.eq.s32.totalorder %s32, 3
      %p249 = por %p247, %p248
      %p251 = scmp.ne.s32.totalorder %s236, %s250
      %p252 = scmp.eq.s32.totalorder %s32, 0
      %p253 = por %p251, %p252
      %s255 = sadd.s32 %s254, 1
      %p258 = scmp.eq.s32.totalorder %s26, 3
      %p259 = scmp.ne.s32.totalorder %s254, %s256
      %p260 = scmp.eq.s32.totalorder %s26, 0
      %p261 = por %p259, %p260
      %p262 = scmp.ne.s32.totalorder %s254, %s256
      %p263 = scmp.eq.s32.totalorder %s31, 3
      %p264 = por %p262, %p263
      %p265 = scmp.ne.s32.totalorder %s256, %s257
      %p266 = scmp.eq.s32.totalorder %s31, 0
      %p267 = por %p265, %p266
      %p268 = scmp.ne.s32.totalorder %s256, %s257
      %p269 = scmp.eq.s32.totalorder %s32, 3
      %p270 = por %p268, %p269
      %p272 = scmp.ne.s32.totalorder %s257, %s271
      %p273 = scmp.eq.s32.totalorder %s32, 0
      %p274 = por %p272, %p273
      %s276 = sadd.s32 %s275, 1
      %p279 = scmp.eq.s32.totalorder %s26, 3
      %p280 = scmp.ne.s32.totalorder %s275, %s277
      %p281 = scmp.eq.s32.totalorder %s26, 0
      %p282 = por %p280, %p281
      %p283 = scmp.ne.s32.totalorder %s275, %s277
      %p284 = scmp.eq.s32.totalorder %s31, 3
      %p285 = por %p283, %p284
      %p286 = scmp.ne.s32.totalorder %s277, %s278
      %p287 = scmp.eq.s32.totalorder %s31, 0
      %p288 = por %p286, %p287
      %p289 = scmp.ne.s32.totalorder %s277, %s278
      %p290 = scmp.eq.s32.totalorder %s32, 3
      %p291 = por %p289, %p290
      %p293 = scmp.ne.s32.totalorder %s278, %s292
      %p294 = scmp.eq.s32.totalorder %s32, 0
      %p295 = por %p293, %p294
      %s297 = sadd.s32 %s296, 1
      %p300 = scmp.eq.s32.totalorder %s26, 3
      %p301 = scmp.ne.s32.totalorder %s296, %s298
      %p302 = scmp.eq.s32.totalorder %s26, 0
      %p303 = por %p301, %p302
      %p304 = scmp.ne.s32.totalorder %s296, %s298
      %p305 = scmp.eq.s32.totalorder %s31, 3
      %p306 = por %p304, %p305
      %p307 = scmp.ne.s32.totalorder %s298, %s299
      %p308 = scmp.eq.s32.totalorder %s31, 0
      %p309 = por %p307, %p308
      %p310 = scmp.ne.s32.totalorder %s298, %s299
      %p311 = scmp.eq.s32.totalorder %s32, 3
      %p312 = por %p310, %p311
      %p314 = scmp.ne.s32.totalorder %s299, %s313
      %p315 = scmp.eq.s32.totalorder %s32, 0
      %p316 = por %p314, %p315
      %s318 = sadd.s32 %s317, 1
      %p321 = scmp.eq.s32.totalorder %s26, 3
      %p322 = scmp.ne.s32.totalorder %s317, %s319
      %p323 = scmp.eq.s32.totalorder %s26, 0
      %p324 = por %p322, %p323
      %p325 = scmp.ne.s32.totalorder %s317, %s319
      %p326 = scmp.eq.s32.totalorder %s31, 3
      %p327 = por %p325, %p326
      %p328 = scmp.ne.s32.totalorder %s319, %s320
      %p329 = scmp.eq.s32.totalorder %s31, 0
      %p330 = por %p328, %p329
      %p331 = scmp.ne.s32.totalorder %s319, %s320
      %p332 = scmp.eq.s32.totalorder %s32, 3
      %p333 = por %p331, %p332
      %p335 = scmp.ne.s32.totalorder %s320, %s334
      %p336 = scmp.eq.s32.totalorder %s32, 0
      %p337 = por %p335, %p336
      %s339 = sadd.s32 %s338, 1
      %p342 = scmp.eq.s32.totalorder %s26, 3
      %p343 = scmp.ne.s32.totalorder %s338, %s340
      %p344 = scmp.eq.s32.totalorder %s26, 0
      %p345 = por %p343, %p344
      %p346 = scmp.ne.s32.totalorder %s338, %s340
      %p347 = scmp.eq.s32.totalorder %s31, 3
      %p348 = por %p346, %p347
      %p349 = scmp.ne.s32.totalorder %s340, %s341
      %p350 = scmp.eq.s32.totalorder %s31, 0
      %p351 = por %p349, %p350
      %p352 = scmp.ne.s32.totalorder %s340, %s341
      %p353 = scmp.eq.s32.totalorder %s32, 3
      %p354 = por %p352, %p353
      %p356 = scmp.ne.s32.totalorder %s341, %s355
      %p357 = scmp.eq.s32.totalorder %s32, 0
      %p358 = por %p356, %p357
      %s360 = sadd.s32 %s359, 1
      %p363 = scmp.eq.s32.totalorder %s26, 3
      %p364 = scmp.ne.s32.totalorder %s359, %s361
      %p365 = scmp.eq.s32.totalorder %s26, 0
      %p366 = por %p364, %p365
      %p367 = scmp.ne.s32.totalorder %s359, %s361
      %p368 = scmp.eq.s32.totalorder %s31, 3
      %p369 = por %p367, %p368
      %p370 = scmp.ne.s32.totalorder %s361, %s362
      %p371 = scmp.eq.s32.totalorder %s31, 0
      %p372 = por %p370, %p371
      %p373 = scmp.ne.s32.totalorder %s361, %s362
      %p374 = scmp.eq.s32.totalorder %s32, 3
      %p375 = por %p373, %p374
      %p377 = scmp.ne.s32.totalorder %s362, %s376
      %p378 = scmp.eq.s32.totalorder %s32, 0
      %p379 = por %p377, %p378
      %s380 = ssub.s32 %s33, %s45
      %s381 = ssub.s32 %s34, %s41
      %s382 = sor.u32 %s380, %s381
      %p383 = scmp.eq.s32.totalorder %s382, 0
      %s385 = sadd.s32 %s384, 1
      %s386 = scalar_select %p383, %s384, %s385
      %p389 = pneg %p383
      %p390 = scmp.eq.s32.totalorder %s26, 3
      %p391 = por %p389, %p390
      %p392 = scmp.ne.s32.totalorder %s384, %s387
      %p393 = scmp.eq.s32.totalorder %s26, 0
      %p394 = por %p392, %p393
      %p395 = scmp.ne.s32.totalorder %s384, %s387
      %p396 = scmp.eq.s32.totalorder %s31, 3
      %p397 = por %p395, %p396
      %p398 = scmp.ne.s32.totalorder %s387, %s388
      %p399 = scmp.eq.s32.totalorder %s31, 0
      %p400 = por %p398, %p399
      %p401 = scmp.ne.s32.totalorder %s387, %s388
      %p402 = scmp.eq.s32.totalorder %s32, 3
      %p403 = por %p401, %p402
      %p405 = scmp.ne.s32.totalorder %s388, %s404
      %p406 = scmp.eq.s32.totalorder %s32, 0
      %p407 = por %p405, %p406
      %p408 = scmp.le.s32.totalorder 1, %s26
      %p409 = scmp.lt.s32.totalorder %s26, 5
      %p410 = pnand %p408, %p409
      %p411 = pneg %p410
      // Predicated region
      $region9: #{tpu_custom_call.1} parent=5 // pred_check
        _
      $region10: #{tpu_custom_call.1} parent=5 // pred_check_branch
        %413 = sbr.rel (%p410) target = $region12
      $region11: #{tpu_custom_call.1} parent=5 // pred_region
        %s414 = ssub.s32 %s26, 1
        // Predicated region
        $region13: #{tpu_custom_call.1} parent=11 // pred_check
          %p415 = pneg %p141
        $region14: #{tpu_custom_call.1} parent=11 // pred_check_branch
          %417 = sbr.rel (%p415) target = $region16
        $region15: #{tpu_custom_call.1} parent=11 // pred_region
          _
        $region16: #{tpu_custom_call.1} parent=11 // pred_fallthru
          _
        // Predicated region
        $region17: #{tpu_custom_call.1} parent=11 // pred_check
          %p418 = pneg %p162
        $region18: #{tpu_custom_call.1} parent=11 // pred_check_branch
          %420 = sbr.rel (%p418) target = $region20
        $region19: #{tpu_custom_call.1} parent=11 // pred_region
          _
        $region20: #{tpu_custom_call.1} parent=11 // pred_fallthru
          _
        // Predicated region
        $region21: #{tpu_custom_call.1} parent=11 // pred_check
          %p421 = pneg %p183
        $region22: #{tpu_custom_call.1} parent=11 // pred_check_branch
          %423 = sbr.rel (%p421) target = $region24
        $region23: #{tpu_custom_call.1} parent=11 // pred_region
          _
        $region24: #{tpu_custom_call.1} parent=11 // pred_fallthru
          _
        // Predicated region
        $region25: #{tpu_custom_call.1} parent=11 // pred_check
          %p424 = pneg %p204
        $region26: #{tpu_custom_call.1} parent=11 // pred_check_branch
          %426 = sbr.rel (%p424) target = $region28
        $region27: #{tpu_custom_call.1} parent=11 // pred_region
          _
        $region28: #{tpu_custom_call.1} parent=11 // pred_fallthru
          _
        // Predicated region
        $region29: #{tpu_custom_call.1} parent=11 // pred_check
          %p427 = pneg %p225
        $region30: #{tpu_custom_call.1} parent=11 // pred_check_branch
          %429 = sbr.rel (%p427) target = $region32
        $region31: #{tpu_custom_call.1} parent=11 // pred_region
          _
        $region32: #{tpu_custom_call.1} parent=11 // pred_fallthru
          _
        // Predicated region
        $region33: #{tpu_custom_call.1} parent=11 // pred_check
          %p430 = pneg %p246
        $region34: #{tpu_custom_call.1} parent=11 // pred_check_branch
          %432 = sbr.rel (%p430) target = $region36
        $region35: #{tpu_custom_call.1} parent=11 // pred_region
          _
        $region36: #{tpu_custom_call.1} parent=11 // pred_fallthru
          _
        // Predicated region
        $region37: #{tpu_custom_call.1} parent=11 // pred_check
          %p433 = pneg %p267
        $region38: #{tpu_custom_call.1} parent=11 // pred_check_branch
          %435 = sbr.rel (%p433) target = $region40
        $region39: #{tpu_custom_call.1} parent=11 // pred_region
          _
        $region40: #{tpu_custom_call.1} parent=11 // pred_fallthru
          _
        // Predicated region
        $region41: #{tpu_custom_call.1} parent=11 // pred_check
          %p436 = pneg %p288
        $region42: #{tpu_custom_call.1} parent=11 // pred_check_branch
          %438 = sbr.rel (%p436) target = $region44
        $region43: #{tpu_custom_call.1} parent=11 // pred_region
          _
        $region44: #{tpu_custom_call.1} parent=11 // pred_fallthru
          _
        // Predicated region
        $region45: #{tpu_custom_call.1} parent=11 // pred_check
          %p439 = pneg %p309
        $region46: #{tpu_custom_call.1} parent=11 // pred_check_branch
          %441 = sbr.rel (%p439) target = $region48
        $region47: #{tpu_custom_call.1} parent=11 // pred_region
          _
        $region48: #{tpu_custom_call.1} parent=11 // pred_fallthru
          _
        // Predicated region
        $region49: #{tpu_custom_call.1} parent=11 // pred_check
          %p442 = pneg %p330
        $region50: #{tpu_custom_call.1} parent=11 // pred_check_branch
          %444 = sbr.rel (%p442) target = $region52
        $region51: #{tpu_custom_call.1} parent=11 // pred_region
          _
        $region52: #{tpu_custom_call.1} parent=11 // pred_fallthru
          _
        // Predicated region
        $region53: #{tpu_custom_call.1} parent=11 // pred_check
          %p445 = pneg %p351
        $region54: #{tpu_custom_call.1} parent=11 // pred_check_branch
          %447 = sbr.rel (%p445) target = $region56
        $region55: #{tpu_custom_call.1} parent=11 // pred_region
          _
        $region56: #{tpu_custom_call.1} parent=11 // pred_fallthru
          _
        // Predicated region
        $region57: #{tpu_custom_call.1} parent=11 // pred_check
          %p448 = pneg %p372
        $region58: #{tpu_custom_call.1} parent=11 // pred_check_branch
          %450 = sbr.rel (%p448) target = $region60
        $region59: #{tpu_custom_call.1} parent=11 // pred_region
          _
        $region60: #{tpu_custom_call.1} parent=11 // pred_fallthru
          _
      $region12: #{tpu_custom_call.1} parent=5 // pred_fallthru
        _
      %p451 = scmp.lt.s32.totalorder %s26, 4
      // Predicated region
      $region61: #{tpu_custom_call.1} parent=5 // pred_check
        %p452 = pneg %p451
      $region62: #{tpu_custom_call.1} parent=5 // pred_check_branch
        %454 = sbr.rel (%p452) target = $region64
      $region63: #{tpu_custom_call.1} parent=5 // pred_region
        // Predicated region
        $region65: #{tpu_custom_call.1} parent=63 // pred_check
          %p455 = pneg %p60
        $region66: #{tpu_custom_call.1} parent=63 // pred_check_branch
          %457 = sbr.rel (%p455) target = $region68
        $region67: #{tpu_custom_call.1} parent=63 // pred_region
          %s458 = smul.u32 16, %s34
          %p459 = scmp.lt.s32.totalorder %s33, 1
          %s460 = scalar_select %p459, %s33, 1
          %p461 = scmp.lt.s32.totalorder %s458, 31
          %s462 = scalar_select %p461, %s458, 31
          %s463 = smul.addr %s460, 32
          %s464 = sadd.s32 %s462, %s463
          %s465 = smul.addr %s464, 8
          %s466 = scalar_lea.vmem %s0, %s465
          %s467 = smul.u32 16, %s34
        $region68: #{tpu_custom_call.1} parent=63 // pred_fallthru
          _
        // Predicated region
        $region69: #{tpu_custom_call.1} parent=63 // pred_check
          %p468 = pneg %p88
        $region70: #{tpu_custom_call.1} parent=63 // pred_check_branch
          %470 = sbr.rel (%p468) target = $region72
        $region71: #{tpu_custom_call.1} parent=63 // pred_region
          %s471 = sand.u32 %s78, 1
          %s472 = sand.u32 %s78, 1
          %s473 = smul.addr %s472, 384
          %s474 = scalar_lea.vmem [#allocation3], %s473
          %s475 = smul.u32 16, %s34
          %s476 = smul.addr %s33, 96
          %s477 = sadd.s32 %s475, %s476
          %s478 = smul.addr %s477, 8
          %s479 = scalar_lea.vmem %s1, %s478
          // Predicated region
          $region73: #{tpu_custom_call.1} parent=71 // pred_check
            _
          $region74: #{tpu_custom_call.1} parent=71 // pred_check_branch
            %481 = sbr.rel (0) target = $region76
          $region75: #{tpu_custom_call.1} parent=71 // pred_region
            // Predicated region
            $region77: #{tpu_custom_call.1} parent=75 // pred_check
              _
            $region78: #{tpu_custom_call.1} parent=75 // pred_check_branch
              %483 = sbr.rel (0) target = $region80
            $region79: #{tpu_custom_call.1} parent=75 // pred_region
              // Predicated region
              $region92: #{tpu_custom_call.1} parent=79 // pred_check
                _
              $region93: #{tpu_custom_call.1} parent=79 // pred_check_branch
                %593 = sbr.rel (0) target = $region95
              $region94: #{tpu_custom_call.1} parent=79 // pred_region
                loop: start=0, step=1, limit=1
                $region96: #{tpu_custom_call.1} parent=94 // loop_pre_header
                  _
                $region97: #{tpu_custom_call.1} parent=94 // loop_header
                  %s595 = sphi 0, %s599
                  %p596 = scmp.ge.s32.totalorder %s595, 1
                  %s600 = sphi %s479, %s479
                  %s601 = sphi %s474, %s474
                $region98: #{tpu_custom_call.1} parent=94 // loop_header_branch
                  %598 = sbr.rel (%p596) target = $region102
                $region99: #{tpu_custom_call.1} parent=94 // loop_body
                  %v602 = vld [vmem:[%s600] sm:$0xff]
                  %603 = vst [vmem:[%s601] sm:$0xff] %v602
                  %v604 = vld [vmem:[%s600 + $0x8] sm:$0xff]
                  %605 = vst [vmem:[%s601 + $0x8] sm:$0xff] %v604
                  %v606 = vld [vmem:[%s600 + $0x10] sm:$0xff]
                  %607 = vst [vmem:[%s601 + $0x10] sm:$0xff] %v606
                  %v608 = vld [vmem:[%s600 + $0x18] sm:$0xff]
                  %609 = vst [vmem:[%s601 + $0x18] sm:$0xff] %v608
                  %v610 = vld [vmem:[%s600 + $0x20] sm:$0xff]
                  %611 = vst [vmem:[%s601 + $0x20] sm:$0xff] %v610
                  %v612 = vld [vmem:[%s600 + $0x28] sm:$0xff]
                  %613 = vst [vmem:[%s601 + $0x28] sm:$0xff] %v612
                  %v614 = vld [vmem:[%s600 + $0x30] sm:$0xff]
                  %615 = vst [vmem:[%s601 + $0x30] sm:$0xff] %v614
                  %v616 = vld [vmem:[%s600 + $0x38] sm:$0xff]
                  %617 = vst [vmem:[%s601 + $0x38] sm:$0xff] %v616
                  %v618 = vld [vmem:[%s600 + $0x40] sm:$0xff]
                  %619 = vst [vmem:[%s601 + $0x40] sm:$0xff] %v618
                  %v620 = vld [vmem:[%s600 + $0x48] sm:$0xff]
                  %621 = vst [vmem:[%s601 + $0x48] sm:$0xff] %v620
                  %v622 = vld [vmem:[%s600 + $0x50] sm:$0xff]
                  %623 = vst [vmem:[%s601 + $0x50] sm:$0xff] %v622
                  %v624 = vld [vmem:[%s600 + $0x58] sm:$0xff]
                  %625 = vst [vmem:[%s601 + $0x58] sm:$0xff] %v624
                  %v626 = vld [vmem:[%s600 + $0x60] sm:$0xff]
                  %627 = vst [vmem:[%s601 + $0x60] sm:$0xff] %v626
                  %v628 = vld [vmem:[%s600 + $0x68] sm:$0xff]
                  %629 = vst [vmem:[%s601 + $0x68] sm:$0xff] %v628
                  %v630 = vld [vmem:[%s600 + $0x70] sm:$0xff]
                  %631 = vst [vmem:[%s601 + $0x70] sm:$0xff] %v630
                  %v632 = vld [vmem:[%s600 + $0x78] sm:$0xff]
                  %633 = vst [vmem:[%s601 + $0x78] sm:$0xff] %v632
                  %v634 = vld [vmem:[%s600 + $0x100] sm:$0xff]
                  %635 = vst [vmem:[%s601 + $0x80] sm:$0xff] %v634
                  %v636 = vld [vmem:[%s600 + $0x108] sm:$0xff]
                  %637 = vst [vmem:[%s601 + $0x88] sm:$0xff] %v636
                  %v638 = vld [vmem:[%s600 + $0x110] sm:$0xff]
                  %639 = vst [vmem:[%s601 + $0x90] sm:$0xff] %v638
                  %v640 = vld [vmem:[%s600 + $0x118] sm:$0xff]
                  %641 = vst [vmem:[%s601 + $0x98] sm:$0xff] %v640
                  %v642 = vld [vmem:[%s600 + $0x120] sm:$0xff]
                  %643 = vst [vmem:[%s601 + $0xa0] sm:$0xff] %v642
                  %v644 = vld [vmem:[%s600 + $0x128] sm:$0xff]
                  %645 = vst [vmem:[%s601 + $0xa8] sm:$0xff] %v644
                  %v646 = vld [vmem:[%s600 + $0x130] sm:$0xff]
                  %647 = vst [vmem:[%s601 + $0xb0] sm:$0xff] %v646
                  %v648 = vld [vmem:[%s600 + $0x138] sm:$0xff]
                  %649 = vst [vmem:[%s601 + $0xb8] sm:$0xff] %v648
                  %v650 = vld [vmem:[%s600 + $0x140] sm:$0xff]
                  %651 = vst [vmem:[%s601 + $0xc0] sm:$0xff] %v650
                  %v652 = vld [vmem:[%s600 + $0x148] sm:$0xff]
                  %653 = vst [vmem:[%s601 + $0xc8] sm:$0xff] %v652
                  %v654 = vld [vmem:[%s600 + $0x150] sm:$0xff]
                  %655 = vst [vmem:[%s601 + $0xd0] sm:$0xff] %v654
                  %v656 = vld [vmem:[%s600 + $0x158] sm:$0xff]
                  %657 = vst [vmem:[%s601 + $0xd8] sm:$0xff] %v656
                  %v658 = vld [vmem:[%s600 + $0x160] sm:$0xff]
                  %659 = vst [vmem:[%s601 + $0xe0] sm:$0xff] %v658
                  %v660 = vld [vmem:[%s600 + $0x168] sm:$0xff]
                  %661 = vst [vmem:[%s601 + $0xe8] sm:$0xff] %v660
                  %v662 = vld [vmem:[%s600 + $0x170] sm:$0xff]
                  %663 = vst [vmem:[%s601 + $0xf0] sm:$0xff] %v662
                  %v664 = vld [vmem:[%s600 + $0x178] sm:$0xff]
                  %665 = vst [vmem:[%s601 + $0xf8] sm:$0xff] %v664
                  %v666 = vld [vmem:[%s600 + $0x200] sm:$0xff]
                  %667 = vst [vmem:[%s601 + $0x100] sm:$0xff] %v666
                  %v668 = vld [vmem:[%s600 + $0x208] sm:$0xff]
                  %669 = vst [vmem:[%s601 + $0x108] sm:$0xff] %v668
                  %v670 = vld [vmem:[%s600 + $0x210] sm:$0xff]
                  %671 = vst [vmem:[%s601 + $0x110] sm:$0xff] %v670
                  %v672 = vld [vmem:[%s600 + $0x218] sm:$0xff]
                  %673 = vst [vmem:[%s601 + $0x118] sm:$0xff] %v672
                  %v674 = vld [vmem:[%s600 + $0x220] sm:$0xff]
                  %675 = vst [vmem:[%s601 + $0x120] sm:$0xff] %v674
                  %v676 = vld [vmem:[%s600 + $0x228] sm:$0xff]
                  %677 = vst [vmem:[%s601 + $0x128] sm:$0xff] %v676
                  %v678 = vld [vmem:[%s600 + $0x230] sm:$0xff]
                  %679 = vst [vmem:[%s601 + $0x130] sm:$0xff] %v678
                  %v680 = vld [vmem:[%s600 + $0x238] sm:$0xff]
                  %681 = vst [vmem:[%s601 + $0x138] sm:$0xff] %v680
                  %v682 = vld [vmem:[%s600 + $0x240] sm:$0xff]
                  %683 = vst [vmem:[%s601 + $0x140] sm:$0xff] %v682
                  %v684 = vld [vmem:[%s600 + $0x248] sm:$0xff]
                  %685 = vst [vmem:[%s601 + $0x148] sm:$0xff] %v684
                  %v686 = vld [vmem:[%s600 + $0x250] sm:$0xff]
                  %687 = vst [vmem:[%s601 + $0x150] sm:$0xff] %v686
                  %v688 = vld [vmem:[%s600 + $0x258] sm:$0xff]
                  %689 = vst [vmem:[%s601 + $0x158] sm:$0xff] %v688
                  %v690 = vld [vmem:[%s600 + $0x260] sm:$0xff]
                  %691 = vst [vmem:[%s601 + $0x160] sm:$0xff] %v690
                  %v692 = vld [vmem:[%s600 + $0x268] sm:$0xff]
                  %693 = vst [vmem:[%s601 + $0x168] sm:$0xff] %v692
                  %v694 = vld [vmem:[%s600 + $0x270] sm:$0xff]
                  %695 = vst [vmem:[%s601 + $0x170] sm:$0xff] %v694
                  %v696 = vld [vmem:[%s600 + $0x278] sm:$0xff]
                  %697 = vst [vmem:[%s601 + $0x178] sm:$0xff] %v696
                $region100: #{tpu_custom_call.1} parent=94 // loop_footer
                  %s599 = sadd.s32 1, %s595
                $region101: #{tpu_custom_call.1} parent=94 // loop_footer_branch
                  %594 = sbr.rel target = $region97
                $region102: #{tpu_custom_call.1} parent=94 // loop_exit
                  _
              $region95: #{tpu_custom_call.1} parent=79 // pred_fallthru
                _
              // Predicated region
              $region103: #{tpu_custom_call.1} parent=79 // pred_check
                _
              $region104: #{tpu_custom_call.1} parent=79 // pred_check_branch
                %699 = sbr.rel target = $region106
              $region105: #{tpu_custom_call.1} parent=79 // pred_region
                _
              $region106: #{tpu_custom_call.1} parent=79 // pred_fallthru
                _
            $region80: #{tpu_custom_call.1} parent=75 // pred_fallthru
              _
            // Predicated region
            $region81: #{tpu_custom_call.1} parent=75 // pred_check
              _
            $region82: #{tpu_custom_call.1} parent=75 // pred_check_branch
              %485 = sbr.rel target = $region84
            $region83: #{tpu_custom_call.1} parent=75 // pred_region
              %s487 = ssub.s32 256, 1
              loop: start=0, step=1, limit=1
              $region85: #{tpu_custom_call.1} parent=83 // loop_pre_header
                _
              $region86: #{tpu_custom_call.1} parent=83 // loop_header
                %s489 = sphi 0, %s493
                %p490 = scmp.ge.s32.totalorder %s489, 1
                %s494 = sphi %s479, %s479
                %s495 = sphi %s474, %s474
              $region87: #{tpu_custom_call.1} parent=83 // loop_header_branch
                %492 = sbr.rel (%p490) target = $region91
              $region88: #{tpu_custom_call.1} parent=83 // loop_body
                %v496 = vld [vmem:[%s494] sm:%s487]
                %497 = vst [vmem:[%s495] sm:%s487] %v496
                %v498 = vld [vmem:[%s494 + $0x8] sm:%s487]
                %499 = vst [vmem:[%s495 + $0x8] sm:%s487] %v498
                %v500 = vld [vmem:[%s494 + $0x10] sm:%s487]
                %501 = vst [vmem:[%s495 + $0x10] sm:%s487] %v500
                %v502 = vld [vmem:[%s494 + $0x18] sm:%s487]
                %503 = vst [vmem:[%s495 + $0x18] sm:%s487] %v502
                %v504 = vld [vmem:[%s494 + $0x20] sm:%s487]
                %505 = vst [vmem:[%s495 + $0x20] sm:%s487] %v504
                %v506 = vld [vmem:[%s494 + $0x28] sm:%s487]
                %507 = vst [vmem:[%s495 + $0x28] sm:%s487] %v506
                %v508 = vld [vmem:[%s494 + $0x30] sm:%s487]
                %509 = vst [vmem:[%s495 + $0x30] sm:%s487] %v508
                %v510 = vld [vmem:[%s494 + $0x38] sm:%s487]
                %511 = vst [vmem:[%s495 + $0x38] sm:%s487] %v510
                %v512 = vld [vmem:[%s494 + $0x40] sm:%s487]
                %513 = vst [vmem:[%s495 + $0x40] sm:%s487] %v512
                %v514 = vld [vmem:[%s494 + $0x48] sm:%s487]
                %515 = vst [vmem:[%s495 + $0x48] sm:%s487] %v514
                %v516 = vld [vmem:[%s494 + $0x50] sm:%s487]
                %517 = vst [vmem:[%s495 + $0x50] sm:%s487] %v516
                %v518 = vld [vmem:[%s494 + $0x58] sm:%s487]
                %519 = vst [vmem:[%s495 + $0x58] sm:%s487] %v518
                %v520 = vld [vmem:[%s494 + $0x60] sm:%s487]
                %521 = vst [vmem:[%s495 + $0x60] sm:%s487] %v520
                %v522 = vld [vmem:[%s494 + $0x68] sm:%s487]
                %523 = vst [vmem:[%s495 + $0x68] sm:%s487] %v522
                %v524 = vld [vmem:[%s494 + $0x70] sm:%s487]
                %525 = vst [vmem:[%s495 + $0x70] sm:%s487] %v524
                %v526 = vld [vmem:[%s494 + $0x78] sm:%s487]
                %527 = vst [vmem:[%s495 + $0x78] sm:%s487] %v526
                %v528 = vld [vmem:[%s494 + $0x100] sm:%s487]
                %529 = vst [vmem:[%s495 + $0x80] sm:%s487] %v528
                %v530 = vld [vmem:[%s494 + $0x108] sm:%s487]
                %531 = vst [vmem:[%s495 + $0x88] sm:%s487] %v530
                %v532 = vld [vmem:[%s494 + $0x110] sm:%s487]
                %533 = vst [vmem:[%s495 + $0x90] sm:%s487] %v532
                %v534 = vld [vmem:[%s494 + $0x118] sm:%s487]
                %535 = vst [vmem:[%s495 + $0x98] sm:%s487] %v534
                %v536 = vld [vmem:[%s494 + $0x120] sm:%s487]
                %537 = vst [vmem:[%s495 + $0xa0] sm:%s487] %v536
                %v538 = vld [vmem:[%s494 + $0x128] sm:%s487]
                %539 = vst [vmem:[%s495 + $0xa8] sm:%s487] %v538
                %v540 = vld [vmem:[%s494 + $0x130] sm:%s487]
                %541 = vst [vmem:[%s495 + $0xb0] sm:%s487] %v540
                %v542 = vld [vmem:[%s494 + $0x138] sm:%s487]
                %543 = vst [vmem:[%s495 + $0xb8] sm:%s487] %v542
                %v544 = vld [vmem:[%s494 + $0x140] sm:%s487]
                %545 = vst [vmem:[%s495 + $0xc0] sm:%s487] %v544
                %v546 = vld [vmem:[%s494 + $0x148] sm:%s487]
                %547 = vst [vmem:[%s495 + $0xc8] sm:%s487] %v546
                %v548 = vld [vmem:[%s494 + $0x150] sm:%s487]
                %549 = vst [vmem:[%s495 + $0xd0] sm:%s487] %v548
                %v550 = vld [vmem:[%s494 + $0x158] sm:%s487]
                %551 = vst [vmem:[%s495 + $0xd8] sm:%s487] %v550
                %v552 = vld [vmem:[%s494 + $0x160] sm:%s487]
                %553 = vst [vmem:[%s495 + $0xe0] sm:%s487] %v552
                %v554 = vld [vmem:[%s494 + $0x168] sm:%s487]
                %555 = vst [vmem:[%s495 + $0xe8] sm:%s487] %v554
                %v556 = vld [vmem:[%s494 + $0x170] sm:%s487]
                %557 = vst [vmem:[%s495 + $0xf0] sm:%s487] %v556
                %v558 = vld [vmem:[%s494 + $0x178] sm:%s487]
                %559 = vst [vmem:[%s495 + $0xf8] sm:%s487] %v558
                %v560 = vld [vmem:[%s494 + $0x200] sm:%s487]
                %561 = vst [vmem:[%s495 + $0x100] sm:%s487] %v560
                %v562 = vld [vmem:[%s494 + $0x208] sm:%s487]
                %563 = vst [vmem:[%s495 + $0x108] sm:%s487] %v562
                %v564 = vld [vmem:[%s494 + $0x210] sm:%s487]
                %565 = vst [vmem:[%s495 + $0x110] sm:%s487] %v564
                %v566 = vld [vmem:[%s494 + $0x218] sm:%s487]
                %567 = vst [vmem:[%s495 + $0x118] sm:%s487] %v566
                %v568 = vld [vmem:[%s494 + $0x220] sm:%s487]
                %569 = vst [vmem:[%s495 + $0x120] sm:%s487] %v568
                %v570 = vld [vmem:[%s494 + $0x228] sm:%s487]
                %571 = vst [vmem:[%s495 + $0x128] sm:%s487] %v570
                %v572 = vld [vmem:[%s494 + $0x230] sm:%s487]
                %573 = vst [vmem:[%s495 + $0x130] sm:%s487] %v572
                %v574 = vld [vmem:[%s494 + $0x238] sm:%s487]
                %575 = vst [vmem:[%s495 + $0x138] sm:%s487] %v574
                %v576 = vld [vmem:[%s494 + $0x240] sm:%s487]
                %577 = vst [vmem:[%s495 + $0x140] sm:%s487] %v576
                %v578 = vld [vmem:[%s494 + $0x248] sm:%s487]
                %579 = vst [vmem:[%s495 + $0x148] sm:%s487] %v578
                %v580 = vld [vmem:[%s494 + $0x250] sm:%s487]
                %581 = vst [vmem:[%s495 + $0x150] sm:%s487] %v580
                %v582 = vld [vmem:[%s494 + $0x258] sm:%s487]
                %583 = vst [vmem:[%s495 + $0x158] sm:%s487] %v582
                %v584 = vld [vmem:[%s494 + $0x260] sm:%s487]
                %585 = vst [vmem:[%s495 + $0x160] sm:%s487] %v584
                %v586 = vld [vmem:[%s494 + $0x268] sm:%s487]
                %587 = vst [vmem:[%s495 + $0x168] sm:%s487] %v586
                %v588 = vld [vmem:[%s494 + $0x270] sm:%s487]
                %589 = vst [vmem:[%s495 + $0x170] sm:%s487] %v588
                %v590 = vld [vmem:[%s494 + $0x278] sm:%s487]
                %591 = vst [vmem:[%s495 + $0x178] sm:%s487] %v590
              $region89: #{tpu_custom_call.1} parent=83 // loop_footer
                %s493 = sadd.s32 1, %s489
              $region90: #{tpu_custom_call.1} parent=83 // loop_footer_branch
                %488 = sbr.rel target = $region86
              $region91: #{tpu_custom_call.1} parent=83 // loop_exit
                _
            $region84: #{tpu_custom_call.1} parent=75 // pred_fallthru
              _
          $region76: #{tpu_custom_call.1} parent=71 // pred_fallthru
            _
          %700 = vnop
        $region72: #{tpu_custom_call.1} parent=63 // pred_fallthru
          _
        // Predicated region
        $region107: #{tpu_custom_call.1} parent=63 // pred_check
          %p701 = pneg %p114
        $region108: #{tpu_custom_call.1} parent=63 // pred_check_branch
          %703 = sbr.rel (%p701) target = $region110
        $region109: #{tpu_custom_call.1} parent=63 // pred_region
          %p704 = scmp.lt.s32.totalorder %s33, 1
          %s705 = scalar_select %p704, %s33, 1
          %s706 = smul.addr %s705, 12
          %s707 = smul.addr %s706, 8
          %s708 = scalar_lea.vmem %s2, %s707
        $region110: #{tpu_custom_call.1} parent=63 // pred_fallthru
          _
      $region64: #{tpu_custom_call.1} parent=5 // pred_fallthru
        _
      %p709 = scmp.le.s32.totalorder 1, %s26
      %p710 = scmp.lt.s32.totalorder %s26, 5
      %p711 = pnand %p709, %p710
      %p712 = pneg %p711
      // Predicated region
      $region111: #{tpu_custom_call.1} parent=5 // pred_check
        _
      $region112: #{tpu_custom_call.1} parent=5 // pred_check_branch
        %714 = sbr.rel (%p711) target = $region114
      $region113: #{tpu_custom_call.1} parent=5 // pred_region
        %s715 = ssub.s32 %s26, 1
        %s716 = sand.u32 %s81, 1
        %s717 = sand.u32 %s81, 1
        %s718 = smul.addr %s717, 384
        %s719 = scalar_lea.vmem [#allocation3], %s718
        // Predicated region
        $region115: #{tpu_custom_call.1} parent=113 // pred_check
          %p720 = pneg %p94
        $region116: #{tpu_custom_call.1} parent=113 // pred_check_branch
          %722 = sbr.rel (%p720) target = $region118
        $region117: #{tpu_custom_call.1} parent=113 // pred_region
          _
        $region118: #{tpu_custom_call.1} parent=113 // pred_fallthru
          _
        %s723 = smul.u32 16, %s36
        %p724 = scmp.lt.s32.totalorder %s35, 1
        %s725 = scalar_select %p724, %s35, 1
        %p726 = scmp.lt.s32.totalorder %s723, 31
        %s727 = scalar_select %p726, %s723, 31
        %s728 = smul.addr %s725, 32
        %s729 = sadd.s32 %s727, %s728
        %s730 = smul.addr %s729, 8
        %s731 = scalar_lea.vmem %s0, %s730
        %p732 = pneg %p66
        %p733 = pneg %p63
        %s734 = sand.u32 %s81, 1
        %s735 = sand.u32 %s81, 1
        %s736 = smul.addr %s735, 384
        %s737 = scalar_lea.vmem [#allocation3], %s736
        %p738 = pneg %p94
        %p739 = pneg %p91
        %p740 = scmp.lt.s32.totalorder %s35, 1
        %s741 = scalar_select %p740, %s35, 1
        %s742 = smul.addr %s741, 12
        %s743 = smul.addr %s742, 8
        %s744 = scalar_lea.vmem %s2, %s743
        %p745 = pneg %p120
        %p746 = pneg %p117
        %p747 = pneg %p141
        %p748 = pneg %p138
        %p749 = pneg %p162
        %p750 = pneg %p159
        %p751 = pneg %p183
        %p752 = pneg %p180
        %p753 = pneg %p204
        %p754 = pneg %p201
        %p755 = pneg %p225
        %p756 = pneg %p222
        %p757 = pneg %p246
        %p758 = pneg %p243
        %p759 = pneg %p267
        %p760 = pneg %p264
        %p761 = pneg %p288
        %p762 = pneg %p285
        %p763 = pneg %p309
        %p764 = pneg %p306
        %p765 = pneg %p330
        %p766 = pneg %p327
        %p767 = pneg %p351
        %p768 = pneg %p348
        %p769 = pneg %p372
        %p770 = pneg %p369
        %p771 = pneg %p400
        %p772 = pneg %p397
        %s773 = sand.u32 %s387, 1
        %s774 = scalar_lea.sflag [#allocation5], %s773
        %s775 = sand.u32 %s387, 1
        %s776 = scalar_lea.vmem [#allocation4], %s775
        %s777 = smul.u32 16, %s36
        %p778 = scmp.lt.s32.totalorder %s35, 1
        %s779 = scalar_select %p778, %s35, 1
        %p780 = scmp.lt.s32.totalorder %s777, 31
        %s781 = scalar_select %p780, %s777, 31
        %s782 = smul.addr %s779, 32
        %s783 = sadd.s32 %s781, %s782
        %s784 = smul.addr %s783, 8
        %s785 = scalar_lea.vmem %s0, %s784
        %s786 = smul.u32 16, %s36
        %s787 = smul.u32 16, %s36
        %p788 = scmp.lt.s32.totalorder %s35, 1
        %s789 = scalar_select %p788, %s35, 1
        %s790 = smul.addr %s789, 12
        %s791 = smul.addr %s790, 8
        %s792 = scalar_lea.vmem %s2, %s791
        %v793 = vld [vmem:[%s3] sm:$0x1]
        %v794 = vld [vmem:[%s4] sm:$0x1]
        %v795 = vld [vmem:[%s719] sm:$0xff]
        %v796 = vld [vmem:[%s719 + $0x8] sm:$0xff]
        %v797 = vld [vmem:[%s719 + $0x10] sm:$0xff]
        %v798 = vld [vmem:[%s719 + $0x18] sm:$0xff]
        %v799 = vld [vmem:[%s719 + $0x20] sm:$0xff]
        %v800 = vld [vmem:[%s719 + $0x28] sm:$0xff]
        %v801 = vld [vmem:[%s719 + $0x30] sm:$0xff]
        %v802 = vld [vmem:[%s719 + $0x38] sm:$0xff]
        %v803 = vld [vmem:[%s719 + $0x40] sm:$0xff]
        %v804 = vld [vmem:[%s719 + $0x48] sm:$0xff]
        %v805 = vld [vmem:[%s719 + $0x50] sm:$0xff]
        %v806 = vld [vmem:[%s719 + $0x58] sm:$0xff]
        %v807 = vld [vmem:[%s719 + $0x60] sm:$0xff]
        %v808 = vld [vmem:[%s719 + $0x68] sm:$0xff]
        %v809 = vld [vmem:[%s719 + $0x70] sm:$0xff]
        %v810 = vld [vmem:[%s719 + $0x78] sm:$0xff]
        %v811 = vmul.f32 %v795, 7.0
        %v812 = vmul.f32 %v796, 7.0
        %v813 = vmul.f32 %v797, 7.0
        %v814 = vmul.f32 %v798, 7.0
        %v815 = vmul.f32 %v799, 7.0
        %v816 = vmul.f32 %v800, 7.0
        %v817 = vmul.f32 %v801, 7.0
        %v818 = vmul.f32 %v802, 7.0
        %v819 = vmul.f32 %v803, 7.0
        %v820 = vmul.f32 %v804, 7.0
        %v821 = vmul.f32 %v805, 7.0
        %v822 = vmul.f32 %v806, 7.0
        %v823 = vmul.f32 %v807, 7.0
        %v824 = vmul.f32 %v808, 7.0
        %v825 = vmul.f32 %v809, 7.0
        %v826 = vmul.f32 %v810, 7.0
        %v827 = vmax.f32 %v811, 0.0
        %v828 = vmax.f32 %v812, 0.0
        %v829 = vmax.f32 %v813, 0.0
        %v830 = vmax.f32 %v814, 0.0
        %v831 = vmax.f32 %v815, 0.0
        %v832 = vmax.f32 %v816, 0.0
        %v833 = vmax.f32 %v817, 0.0
        %v834 = vmax.f32 %v818, 0.0
        %v835 = vmax.f32 %v819, 0.0
        %v836 = vmax.f32 %v820, 0.0
        %v837 = vmax.f32 %v821, 0.0
        %v838 = vmax.f32 %v822, 0.0
        %v839 = vmax.f32 %v823, 0.0
        %v840 = vmax.f32 %v824, 0.0
        %v841 = vmax.f32 %v825, 0.0
        %v842 = vmax.f32 %v826, 0.0
        %v843 = vmin.f32 %v827, 7.0
        %v844 = vmin.f32 %v828, 7.0
        %v845 = vmin.f32 %v829, 7.0
        %v846 = vmin.f32 %v830, 7.0
        %v847 = vmin.f32 %v831, 7.0
        %v848 = vmin.f32 %v832, 7.0
        %v849 = vmin.f32 %v833, 7.0
        %v850 = vmin.f32 %v834, 7.0
        %v851 = vmin.f32 %v835, 7.0
        %v852 = vmin.f32 %v836, 7.0
        %v853 = vmin.f32 %v837, 7.0
        %v854 = vmin.f32 %v838, 7.0
        %v855 = vmin.f32 %v839, 7.0
        %v856 = vmin.f32 %v840, 7.0
        %v857 = vmin.f32 %v841, 7.0
        %v858 = vmin.f32 %v842, 7.0
        %v860 = vperm.slane %v793, 0
        %863 = vset.pattern.permute.xlu0 0
        %864 = vperm.xlu0 %863, %v843
        %v865 = vpop.permute.xlu0 %864
        %868 = vset.pattern.permute.xlu0 0
        %869 = vperm.xlu0 %868, %v844
        %v870 = vpop.permute.xlu0 %869
        %873 = vset.pattern.permute.xlu0 0
        %874 = vperm.xlu0 %873, %v845
        %v875 = vpop.permute.xlu0 %874
        %878 = vset.pattern.permute.xlu0 0
        %879 = vperm.xlu0 %878, %v846
        %v880 = vpop.permute.xlu0 %879
        %883 = vset.pattern.permute.xlu0 0
        %884 = vperm.xlu0 %883, %v847
        %v885 = vpop.permute.xlu0 %884
        %888 = vset.pattern.permute.xlu0 0
        %889 = vperm.xlu0 %888, %v848
        %v890 = vpop.permute.xlu0 %889
        %893 = vset.pattern.permute.xlu0 0
        %894 = vperm.xlu0 %893, %v849
        %v895 = vpop.permute.xlu0 %894
        %898 = vset.pattern.permute.xlu0 0
        %899 = vperm.xlu0 %898, %v850
        %v900 = vpop.permute.xlu0 %899
        %903 = vset.pattern.permute.xlu0 0
        %904 = vperm.xlu0 %903, %v851
        %v905 = vpop.permute.xlu0 %904
        %908 = vset.pattern.permute.xlu0 0
        %909 = vperm.xlu0 %908, %v852
        %v910 = vpop.permute.xlu0 %909
        %913 = vset.pattern.permute.xlu0 0
        %914 = vperm.xlu0 %913, %v853
        %v915 = vpop.permute.xlu0 %914
        %918 = vset.pattern.permute.xlu0 0
        %919 = vperm.xlu0 %918, %v854
        %v920 = vpop.permute.xlu0 %919
        %923 = vset.pattern.permute.xlu0 0
        %924 = vperm.xlu0 %923, %v855
        %v925 = vpop.permute.xlu0 %924
        %928 = vset.pattern.permute.xlu0 0
        %929 = vperm.xlu0 %928, %v856
        %v930 = vpop.permute.xlu0 %929
        %933 = vset.pattern.permute.xlu0 0
        %934 = vperm.xlu0 %933, %v857
        %v935 = vpop.permute.xlu0 %934
        %938 = vset.pattern.permute.xlu0 0
        %939 = vperm.xlu0 %938, %v858
        %v940 = vpop.permute.xlu0 %939
        %v942 = vsub.f32 %v860, %v865
        %v943 = vsub.f32 %v860, %v870
        %v944 = vsub.f32 %v860, %v875
        %v945 = vsub.f32 %v860, %v880
        %v946 = vsub.f32 %v860, %v885
        %v947 = vsub.f32 %v860, %v890
        %v948 = vsub.f32 %v860, %v895
        %v949 = vsub.f32 %v860, %v900
        %v950 = vsub.f32 %v860, %v905
        %v951 = vsub.f32 %v860, %v910
        %v952 = vsub.f32 %v860, %v915
        %v953 = vsub.f32 %v860, %v920
        %v954 = vsub.f32 %v860, %v925
        %v955 = vsub.f32 %v860, %v930
        %v956 = vsub.f32 %v860, %v935
        %v957 = vsub.f32 %v860, %v940
        %v958 = vand.u32 2147483647, %v942
        %v959 = vand.u32 2147483647, %v943
        %v960 = vand.u32 2147483647, %v944
        %v961 = vand.u32 2147483647, %v945
        %v962 = vand.u32 2147483647, %v946
        %v963 = vand.u32 2147483647, %v947
        %v964 = vand.u32 2147483647, %v948
        %v965 = vand.u32 2147483647, %v949
        %v966 = vand.u32 2147483647, %v950
        %v967 = vand.u32 2147483647, %v951
        %v968 = vand.u32 2147483647, %v952
        %v969 = vand.u32 2147483647, %v953
        %v970 = vand.u32 2147483647, %v954
        %v971 = vand.u32 2147483647, %v955
        %v972 = vand.u32 2147483647, %v956
        %v973 = vand.u32 2147483647, %v957
        %v974 = vsub.f32 1.0, %v958
        %v975 = vsub.f32 1.0, %v959
        %v976 = vsub.f32 1.0, %v960
        %v977 = vsub.f32 1.0, %v961
        %v978 = vsub.f32 1.0, %v962
        %v979 = vsub.f32 1.0, %v963
        %v980 = vsub.f32 1.0, %v964
        %v981 = vsub.f32 1.0, %v965
        %v982 = vsub.f32 1.0, %v966
        %v983 = vsub.f32 1.0, %v967
        %v984 = vsub.f32 1.0, %v968
        %v985 = vsub.f32 1.0, %v969
        %v986 = vsub.f32 1.0, %v970
        %v987 = vsub.f32 1.0, %v971
        %v988 = vsub.f32 1.0, %v972
        %v989 = vsub.f32 1.0, %v973
        %v990 = vmax.f32 %v974, 0.0
        %v991 = vmax.f32 %v975, 0.0
        %v992 = vmax.f32 %v976, 0.0
        %v993 = vmax.f32 %v977, 0.0
        %v994 = vmax.f32 %v978, 0.0
        %v995 = vmax.f32 %v979, 0.0
        %v996 = vmax.f32 %v980, 0.0
        %v997 = vmax.f32 %v981, 0.0
        %v998 = vmax.f32 %v982, 0.0
        %v999 = vmax.f32 %v983, 0.0
        %v1000 = vmax.f32 %v984, 0.0
        %v1001 = vmax.f32 %v985, 0.0
        %v1002 = vmax.f32 %v986, 0.0
        %v1003 = vmax.f32 %v987, 0.0
        %v1004 = vmax.f32 %v988, 0.0
        %v1005 = vmax.f32 %v989, 0.0
        %v1007 = vperm.slane %v794, 0
        %1009 = vset.pattern.permute.xlu0 1
        %1010 = vperm.xlu0 %1009, %v843
        %v1011 = vpop.permute.xlu0 %1010
        %1013 = vset.pattern.permute.xlu0 1
        %1014 = vperm.xlu0 %1013, %v844
        %v1015 = vpop.permute.xlu0 %1014
        %1017 = vset.pattern.permute.xlu0 1
        %1018 = vperm.xlu0 %1017, %v845
        %v1019 = vpop.permute.xlu0 %1018
        %1021 = vset.pattern.permute.xlu0 1
        %1022 = vperm.xlu0 %1021, %v846
        %v1023 = vpop.permute.xlu0 %1022
        %1025 = vset.pattern.permute.xlu0 1
        %1026 = vperm.xlu0 %1025, %v847
        %v1027 = vpop.permute.xlu0 %1026
        %1029 = vset.pattern.permute.xlu0 1
        %1030 = vperm.xlu0 %1029, %v848
        %v1031 = vpop.permute.xlu0 %1030
        %1033 = vset.pattern.permute.xlu0 1
        %1034 = vperm.xlu0 %1033, %v849
        %v1035 = vpop.permute.xlu0 %1034
        %1037 = vset.pattern.permute.xlu0 1
        %1038 = vperm.xlu0 %1037, %v850
        %v1039 = vpop.permute.xlu0 %1038
        %1041 = vset.pattern.permute.xlu0 1
        %1042 = vperm.xlu0 %1041, %v851
        %v1043 = vpop.permute.xlu0 %1042
        %1045 = vset.pattern.permute.xlu0 1
        %1046 = vperm.xlu0 %1045, %v852
        %v1047 = vpop.permute.xlu0 %1046
        %1049 = vset.pattern.permute.xlu0 1
        %1050 = vperm.xlu0 %1049, %v853
        %v1051 = vpop.permute.xlu0 %1050
        %1053 = vset.pattern.permute.xlu0 1
        %1054 = vperm.xlu0 %1053, %v854
        %v1055 = vpop.permute.xlu0 %1054
        %1057 = vset.pattern.permute.xlu0 1
        %1058 = vperm.xlu0 %1057, %v855
        %v1059 = vpop.permute.xlu0 %1058
        %1061 = vset.pattern.permute.xlu0 1
        %1062 = vperm.xlu0 %1061, %v856
        %v1063 = vpop.permute.xlu0 %1062
        %1065 = vset.pattern.permute.xlu0 1
        %1066 = vperm.xlu0 %1065, %v857
        %v1067 = vpop.permute.xlu0 %1066
        %1069 = vset.pattern.permute.xlu0 1
        %1070 = vperm.xlu0 %1069, %v858
        %v1071 = vpop.permute.xlu0 %1070
        %v1073 = vsub.f32 %v1007, %v1011
        %v1074 = vsub.f32 %v1007, %v1015
        %v1075 = vsub.f32 %v1007, %v1019
        %v1076 = vsub.f32 %v1007, %v1023
        %v1077 = vsub.f32 %v1007, %v1027
        %v1078 = vsub.f32 %v1007, %v1031
        %v1079 = vsub.f32 %v1007, %v1035
        %v1080 = vsub.f32 %v1007, %v1039
        %v1081 = vsub.f32 %v1007, %v1043
        %v1082 = vsub.f32 %v1007, %v1047
        %v1083 = vsub.f32 %v1007, %v1051
        %v1084 = vsub.f32 %v1007, %v1055
        %v1085 = vsub.f32 %v1007, %v1059
        %v1086 = vsub.f32 %v1007, %v1063
        %v1087 = vsub.f32 %v1007, %v1067
        %v1088 = vsub.f32 %v1007, %v1071
        %v1089 = vand.u32 2147483647, %v1073
        %v1090 = vand.u32 2147483647, %v1074
        %v1091 = vand.u32 2147483647, %v1075
        %v1092 = vand.u32 2147483647, %v1076
        %v1093 = vand.u32 2147483647, %v1077
        %v1094 = vand.u32 2147483647, %v1078
        %v1095 = vand.u32 2147483647, %v1079
        %v1096 = vand.u32 2147483647, %v1080
        %v1097 = vand.u32 2147483647, %v1081
        %v1098 = vand.u32 2147483647, %v1082
        %v1099 = vand.u32 2147483647, %v1083
        %v1100 = vand.u32 2147483647, %v1084
        %v1101 = vand.u32 2147483647, %v1085
        %v1102 = vand.u32 2147483647, %v1086
        %v1103 = vand.u32 2147483647, %v1087
        %v1104 = vand.u32 2147483647, %v1088
        %v1105 = vsub.f32 1.0, %v1089
        %v1106 = vsub.f32 1.0, %v1090
        %v1107 = vsub.f32 1.0, %v1091
        %v1108 = vsub.f32 1.0, %v1092
        %v1109 = vsub.f32 1.0, %v1093
        %v1110 = vsub.f32 1.0, %v1094
        %v1111 = vsub.f32 1.0, %v1095
        %v1112 = vsub.f32 1.0, %v1096
        %v1113 = vsub.f32 1.0, %v1097
        %v1114 = vsub.f32 1.0, %v1098
        %v1115 = vsub.f32 1.0, %v1099
        %v1116 = vsub.f32 1.0, %v1100
        %v1117 = vsub.f32 1.0, %v1101
        %v1118 = vsub.f32 1.0, %v1102
        %v1119 = vsub.f32 1.0, %v1103
        %v1120 = vsub.f32 1.0, %v1104
        %v1121 = vmax.f32 %v1105, 0.0
        %v1122 = vmax.f32 %v1106, 0.0
        %v1123 = vmax.f32 %v1107, 0.0
        %v1124 = vmax.f32 %v1108, 0.0
        %v1125 = vmax.f32 %v1109, 0.0
        %v1126 = vmax.f32 %v1110, 0.0
        %v1127 = vmax.f32 %v1111, 0.0
        %v1128 = vmax.f32 %v1112, 0.0
        %v1129 = vmax.f32 %v1113, 0.0
        %v1130 = vmax.f32 %v1114, 0.0
        %v1131 = vmax.f32 %v1115, 0.0
        %v1132 = vmax.f32 %v1116, 0.0
        %v1133 = vmax.f32 %v1117, 0.0
        %v1134 = vmax.f32 %v1118, 0.0
        %v1135 = vmax.f32 %v1119, 0.0
        %v1136 = vmax.f32 %v1120, 0.0
        %v1137 = vmul.f32 %v990, %v1121
        %v1138 = vmul.f32 %v991, %v1122
        %v1139 = vmul.f32 %v992, %v1123
        %v1140 = vmul.f32 %v993, %v1124
        %v1141 = vmul.f32 %v994, %v1125
        %v1142 = vmul.f32 %v995, %v1126
        %v1143 = vmul.f32 %v996, %v1127
        %v1144 = vmul.f32 %v997, %v1128
        %v1145 = vmul.f32 %v998, %v1129
        %v1146 = vmul.f32 %v999, %v1130
        %v1147 = vmul.f32 %v1000, %v1131
        %v1148 = vmul.f32 %v1001, %v1132
        %v1149 = vmul.f32 %v1002, %v1133
        %v1150 = vmul.f32 %v1003, %v1134
        %v1151 = vmul.f32 %v1004, %v1135
        %v1152 = vmul.f32 %v1005, %v1136
        %v1153 = vld [vmem:[%s792] sm:$0xff]
        %v1154 = vld [vmem:[%s792 + $0x18] sm:$0xff]
        %v1155 = vld [vmem:[%s792 + $0x30] sm:$0xff]
        %v1156 = vld [vmem:[%s792 + $0x48] sm:$0xff]
        %s1157 = scalar_lea.vmem %s719, 128 [#allocation3]
        %v1158 = vld [vmem:[%s1157] sm:$0xff]
        %v1159 = vld [vmem:[%s1157 + $0x8] sm:$0xff]
        %v1160 = vld [vmem:[%s1157 + $0x10] sm:$0xff]
        %v1161 = vld [vmem:[%s1157 + $0x18] sm:$0xff]
        %v1162 = vld [vmem:[%s1157 + $0x20] sm:$0xff]
        %v1163 = vld [vmem:[%s1157 + $0x28] sm:$0xff]
        %v1164 = vld [vmem:[%s1157 + $0x30] sm:$0xff]
        %v1165 = vld [vmem:[%s1157 + $0x38] sm:$0xff]
        %v1166 = vld [vmem:[%s1157 + $0x40] sm:$0xff]
        %v1167 = vld [vmem:[%s1157 + $0x48] sm:$0xff]
        %v1168 = vld [vmem:[%s1157 + $0x50] sm:$0xff]
        %v1169 = vld [vmem:[%s1157 + $0x58] sm:$0xff]
        %v1170 = vld [vmem:[%s1157 + $0x60] sm:$0xff]
        %v1171 = vld [vmem:[%s1157 + $0x68] sm:$0xff]
        %v1172 = vld [vmem:[%s1157 + $0x70] sm:$0xff]
        %v1173 = vld [vmem:[%s1157 + $0x78] sm:$0xff]
        %v1174 = vmul.f32 %v1158, 7.0
        %v1175 = vmul.f32 %v1159, 7.0
        %v1176 = vmul.f32 %v1160, 7.0
        %v1177 = vmul.f32 %v1161, 7.0
        %v1178 = vmul.f32 %v1162, 7.0
        %v1179 = vmul.f32 %v1163, 7.0
        %v1180 = vmul.f32 %v1164, 7.0
        %v1181 = vmul.f32 %v1165, 7.0
        %v1182 = vmul.f32 %v1166, 7.0
        %v1183 = vmul.f32 %v1167, 7.0
        %v1184 = vmul.f32 %v1168, 7.0
        %v1185 = vmul.f32 %v1169, 7.0
        %v1186 = vmul.f32 %v1170, 7.0
        %v1187 = vmul.f32 %v1171, 7.0
        %v1188 = vmul.f32 %v1172, 7.0
        %v1189 = vmul.f32 %v1173, 7.0
        %v1190 = vmax.f32 %v1174, 0.0
        %v1191 = vmax.f32 %v1175, 0.0
        %v1192 = vmax.f32 %v1176, 0.0
        %v1193 = vmax.f32 %v1177, 0.0
        %v1194 = vmax.f32 %v1178, 0.0
        %v1195 = vmax.f32 %v1179, 0.0
        %v1196 = vmax.f32 %v1180, 0.0
        %v1197 = vmax.f32 %v1181, 0.0
        %v1198 = vmax.f32 %v1182, 0.0
        %v1199 = vmax.f32 %v1183, 0.0
        %v1200 = vmax.f32 %v1184, 0.0
        %v1201 = vmax.f32 %v1185, 0.0
        %v1202 = vmax.f32 %v1186, 0.0
        %v1203 = vmax.f32 %v1187, 0.0
        %v1204 = vmax.f32 %v1188, 0.0
        %v1205 = vmax.f32 %v1189, 0.0
        %v1206 = vmin.f32 %v1190, 7.0
        %v1207 = vmin.f32 %v1191, 7.0
        %v1208 = vmin.f32 %v1192, 7.0
        %v1209 = vmin.f32 %v1193, 7.0
        %v1210 = vmin.f32 %v1194, 7.0
        %v1211 = vmin.f32 %v1195, 7.0
        %v1212 = vmin.f32 %v1196, 7.0
        %v1213 = vmin.f32 %v1197, 7.0
        %v1214 = vmin.f32 %v1198, 7.0
        %v1215 = vmin.f32 %v1199, 7.0
        %v1216 = vmin.f32 %v1200, 7.0
        %v1217 = vmin.f32 %v1201, 7.0
        %v1218 = vmin.f32 %v1202, 7.0
        %v1219 = vmin.f32 %v1203, 7.0
        %v1220 = vmin.f32 %v1204, 7.0
        %v1221 = vmin.f32 %v1205, 7.0
        %1223 = vset.pattern.permute.xlu0 0
        %1224 = vperm.xlu0 %1223, %v1206
        %v1225 = vpop.permute.xlu0 %1224
        %1228 = vset.pattern.permute.xlu0 0
        %1229 = vperm.xlu0 %1228, %v1207
        %v1230 = vpop.permute.xlu0 %1229
        %1233 = vset.pattern.permute.xlu0 0
        %1234 = vperm.xlu0 %1233, %v1208
        %v1235 = vpop.permute.xlu0 %1234
        %1238 = vset.pattern.permute.xlu0 0
        %1239 = vperm.xlu0 %1238, %v1209
        %v1240 = vpop.permute.xlu0 %1239
        %1243 = vset.pattern.permute.xlu0 0
        %1244 = vperm.xlu0 %1243, %v1210
        %v1245 = vpop.permute.xlu0 %1244
        %1248 = vset.pattern.permute.xlu0 0
        %1249 = vperm.xlu0 %1248, %v1211
        %v1250 = vpop.permute.xlu0 %1249
        %1253 = vset.pattern.permute.xlu0 0
        %1254 = vperm.xlu0 %1253, %v1212
        %v1255 = vpop.permute.xlu0 %1254
        %1258 = vset.pattern.permute.xlu0 0
        %1259 = vperm.xlu0 %1258, %v1213
        %v1260 = vpop.permute.xlu0 %1259
        %1263 = vset.pattern.permute.xlu0 0
        %1264 = vperm.xlu0 %1263, %v1214
        %v1265 = vpop.permute.xlu0 %1264
        %1268 = vset.pattern.permute.xlu0 0
        %1269 = vperm.xlu0 %1268, %v1215
        %v1270 = vpop.permute.xlu0 %1269
        %1273 = vset.pattern.permute.xlu0 0
        %1274 = vperm.xlu0 %1273, %v1216
        %v1275 = vpop.permute.xlu0 %1274
        %1278 = vset.pattern.permute.xlu0 0
        %1279 = vperm.xlu0 %1278, %v1217
        %v1280 = vpop.permute.xlu0 %1279
        %1283 = vset.pattern.permute.xlu0 0
        %1284 = vperm.xlu0 %1283, %v1218
        %v1285 = vpop.permute.xlu0 %1284
        %1288 = vset.pattern.permute.xlu0 0
        %1289 = vperm.xlu0 %1288, %v1219
        %v1290 = vpop.permute.xlu0 %1289
        %1293 = vset.pattern.permute.xlu0 0
        %1294 = vperm.xlu0 %1293, %v1220
        %v1295 = vpop.permute.xlu0 %1294
        %1298 = vset.pattern.permute.xlu0 0
        %1299 = vperm.xlu0 %1298, %v1221
        %v1300 = vpop.permute.xlu0 %1299
        %v1302 = vsub.f32 %v860, %v1225
        %v1303 = vsub.f32 %v860, %v1230
        %v1304 = vsub.f32 %v860, %v1235
        %v1305 = vsub.f32 %v860, %v1240
        %v1306 = vsub.f32 %v860, %v1245
        %v1307 = vsub.f32 %v860, %v1250
        %v1308 = vsub.f32 %v860, %v1255
        %v1309 = vsub.f32 %v860, %v1260
        %v1310 = vsub.f32 %v860, %v1265
        %v1311 = vsub.f32 %v860, %v1270
        %v1312 = vsub.f32 %v860, %v1275
        %v1313 = vsub.f32 %v860, %v1280
        %v1314 = vsub.f32 %v860, %v1285
        %v1315 = vsub.f32 %v860, %v1290
        %v1316 = vsub.f32 %v860, %v1295
        %v1317 = vsub.f32 %v860, %v1300
        %v1318 = vand.u32 2147483647, %v1302
        %v1319 = vand.u32 2147483647, %v1303
        %v1320 = vand.u32 2147483647, %v1304
        %v1321 = vand.u32 2147483647, %v1305
        %v1322 = vand.u32 2147483647, %v1306
        %v1323 = vand.u32 2147483647, %v1307
        %v1324 = vand.u32 2147483647, %v1308
        %v1325 = vand.u32 2147483647, %v1309
        %v1326 = vand.u32 2147483647, %v1310
        %v1327 = vand.u32 2147483647, %v1311
        %v1328 = vand.u32 2147483647, %v1312
        %v1329 = vand.u32 2147483647, %v1313
        %v1330 = vand.u32 2147483647, %v1314
        %v1331 = vand.u32 2147483647, %v1315
        %v1332 = vand.u32 2147483647, %v1316
        %v1333 = vand.u32 2147483647, %v1317
        %v1334 = vsub.f32 1.0, %v1318
        %v1335 = vsub.f32 1.0, %v1319
        %v1336 = vsub.f32 1.0, %v1320
        %v1337 = vsub.f32 1.0, %v1321
        %v1338 = vsub.f32 1.0, %v1322
        %v1339 = vsub.f32 1.0, %v1323
        %v1340 = vsub.f32 1.0, %v1324
        %v1341 = vsub.f32 1.0, %v1325
        %v1342 = vsub.f32 1.0, %v1326
        %v1343 = vsub.f32 1.0, %v1327
        %v1344 = vsub.f32 1.0, %v1328
        %v1345 = vsub.f32 1.0, %v1329
        %v1346 = vsub.f32 1.0, %v1330
        %v1347 = vsub.f32 1.0, %v1331
        %v1348 = vsub.f32 1.0, %v1332
        %v1349 = vsub.f32 1.0, %v1333
        %v1350 = vmax.f32 %v1334, 0.0
        %v1351 = vmax.f32 %v1335, 0.0
        %v1352 = vmax.f32 %v1336, 0.0
        %v1353 = vmax.f32 %v1337, 0.0
        %v1354 = vmax.f32 %v1338, 0.0
        %v1355 = vmax.f32 %v1339, 0.0
        %v1356 = vmax.f32 %v1340, 0.0
        %v1357 = vmax.f32 %v1341, 0.0
        %v1358 = vmax.f32 %v1342, 0.0
        %v1359 = vmax.f32 %v1343, 0.0
        %v1360 = vmax.f32 %v1344, 0.0
        %v1361 = vmax.f32 %v1345, 0.0
        %v1362 = vmax.f32 %v1346, 0.0
        %v1363 = vmax.f32 %v1347, 0.0
        %v1364 = vmax.f32 %v1348, 0.0
        %v1365 = vmax.f32 %v1349, 0.0
        %1366 = vset.pattern.permute.xlu0 1
        %1367 = vperm.xlu0 %1366, %v1206
        %v1368 = vpop.permute.xlu0 %1367
        %1370 = vset.pattern.permute.xlu0 1
        %1371 = vperm.xlu0 %1370, %v1207
        %v1372 = vpop.permute.xlu0 %1371
        %1374 = vset.pattern.permute.xlu0 1
        %1375 = vperm.xlu0 %1374, %v1208
        %v1376 = vpop.permute.xlu0 %1375
        %1378 = vset.pattern.permute.xlu0 1
        %1379 = vperm.xlu0 %1378, %v1209
        %v1380 = vpop.permute.xlu0 %1379
        %1382 = vset.pattern.permute.xlu0 1
        %1383 = vperm.xlu0 %1382, %v1210
        %v1384 = vpop.permute.xlu0 %1383
        %1386 = vset.pattern.permute.xlu0 1
        %1387 = vperm.xlu0 %1386, %v1211
        %v1388 = vpop.permute.xlu0 %1387
        %1390 = vset.pattern.permute.xlu0 1
        %1391 = vperm.xlu0 %1390, %v1212
        %v1392 = vpop.permute.xlu0 %1391
        %1394 = vset.pattern.permute.xlu0 1
        %1395 = vperm.xlu0 %1394, %v1213
        %v1396 = vpop.permute.xlu0 %1395
        %1398 = vset.pattern.permute.xlu0 1
        %1399 = vperm.xlu0 %1398, %v1214
        %v1400 = vpop.permute.xlu0 %1399
        %1402 = vset.pattern.permute.xlu0 1
        %1403 = vperm.xlu0 %1402, %v1215
        %v1404 = vpop.permute.xlu0 %1403
        %1406 = vset.pattern.permute.xlu0 1
        %1407 = vperm.xlu0 %1406, %v1216
        %v1408 = vpop.permute.xlu0 %1407
        %1410 = vset.pattern.permute.xlu0 1
        %1411 = vperm.xlu0 %1410, %v1217
        %v1412 = vpop.permute.xlu0 %1411
        %1414 = vset.pattern.permute.xlu0 1
        %1415 = vperm.xlu0 %1414, %v1218
        %v1416 = vpop.permute.xlu0 %1415
        %1418 = vset.pattern.permute.xlu0 1
        %1419 = vperm.xlu0 %1418, %v1219
        %v1420 = vpop.permute.xlu0 %1419
        %1422 = vset.pattern.permute.xlu0 1
        %1423 = vperm.xlu0 %1422, %v1220
        %v1424 = vpop.permute.xlu0 %1423
        %1426 = vset.pattern.permute.xlu0 1
        %1427 = vperm.xlu0 %1426, %v1221
        %v1428 = vpop.permute.xlu0 %1427
        %v1430 = vsub.f32 %v1007, %v1368
        %v1431 = vsub.f32 %v1007, %v1372
        %v1432 = vsub.f32 %v1007, %v1376
        %v1433 = vsub.f32 %v1007, %v1380
        %v1434 = vsub.f32 %v1007, %v1384
        %v1435 = vsub.f32 %v1007, %v1388
        %v1436 = vsub.f32 %v1007, %v1392
        %v1437 = vsub.f32 %v1007, %v1396
        %v1438 = vsub.f32 %v1007, %v1400
        %v1439 = vsub.f32 %v1007, %v1404
        %v1440 = vsub.f32 %v1007, %v1408
        %v1441 = vsub.f32 %v1007, %v1412
        %v1442 = vsub.f32 %v1007, %v1416
        %v1443 = vsub.f32 %v1007, %v1420
        %v1444 = vsub.f32 %v1007, %v1424
        %v1445 = vsub.f32 %v1007, %v1428
        %v1446 = vand.u32 2147483647, %v1430
        %v1447 = vand.u32 2147483647, %v1431
        %v1448 = vand.u32 2147483647, %v1432
        %v1449 = vand.u32 2147483647, %v1433
        %v1450 = vand.u32 2147483647, %v1434
        %v1451 = vand.u32 2147483647, %v1435
        %v1452 = vand.u32 2147483647, %v1436
        %v1453 = vand.u32 2147483647, %v1437
        %v1454 = vand.u32 2147483647, %v1438
        %v1455 = vand.u32 2147483647, %v1439
        %v1456 = vand.u32 2147483647, %v1440
        %v1457 = vand.u32 2147483647, %v1441
        %v1458 = vand.u32 2147483647, %v1442
        %v1459 = vand.u32 2147483647, %v1443
        %v1460 = vand.u32 2147483647, %v1444
        %v1461 = vand.u32 2147483647, %v1445
        %v1462 = vsub.f32 1.0, %v1446
        %v1463 = vsub.f32 1.0, %v1447
        %v1464 = vsub.f32 1.0, %v1448
        %v1465 = vsub.f32 1.0, %v1449
        %v1466 = vsub.f32 1.0, %v1450
        %v1467 = vsub.f32 1.0, %v1451
        %v1468 = vsub.f32 1.0, %v1452
        %v1469 = vsub.f32 1.0, %v1453
        %v1470 = vsub.f32 1.0, %v1454
        %v1471 = vsub.f32 1.0, %v1455
        %v1472 = vsub.f32 1.0, %v1456
        %v1473 = vsub.f32 1.0, %v1457
        %v1474 = vsub.f32 1.0, %v1458
        %v1475 = vsub.f32 1.0, %v1459
        %v1476 = vsub.f32 1.0, %v1460
        %v1477 = vsub.f32 1.0, %v1461
        %v1478 = vmax.f32 %v1462, 0.0
        %v1479 = vmax.f32 %v1463, 0.0
        %v1480 = vmax.f32 %v1464, 0.0
        %v1481 = vmax.f32 %v1465, 0.0
        %v1482 = vmax.f32 %v1466, 0.0
        %v1483 = vmax.f32 %v1467, 0.0
        %v1484 = vmax.f32 %v1468, 0.0
        %v1485 = vmax.f32 %v1469, 0.0
        %v1486 = vmax.f32 %v1470, 0.0
        %v1487 = vmax.f32 %v1471, 0.0
        %v1488 = vmax.f32 %v1472, 0.0
        %v1489 = vmax.f32 %v1473, 0.0
        %v1490 = vmax.f32 %v1474, 0.0
        %v1491 = vmax.f32 %v1475, 0.0
        %v1492 = vmax.f32 %v1476, 0.0
        %v1493 = vmax.f32 %v1477, 0.0
        %v1494 = vmul.f32 %v1350, %v1478
        %v1495 = vmul.f32 %v1351, %v1479
        %v1496 = vmul.f32 %v1352, %v1480
        %v1497 = vmul.f32 %v1353, %v1481
        %v1498 = vmul.f32 %v1354, %v1482
        %v1499 = vmul.f32 %v1355, %v1483
        %v1500 = vmul.f32 %v1356, %v1484
        %v1501 = vmul.f32 %v1357, %v1485
        %v1502 = vmul.f32 %v1358, %v1486
        %v1503 = vmul.f32 %v1359, %v1487
        %v1504 = vmul.f32 %v1360, %v1488
        %v1505 = vmul.f32 %v1361, %v1489
        %v1506 = vmul.f32 %v1362, %v1490
        %v1507 = vmul.f32 %v1363, %v1491
        %v1508 = vmul.f32 %v1364, %v1492
        %v1509 = vmul.f32 %v1365, %v1493
        %v1510 = vld [vmem:[%s792 + $0x8] sm:$0xff]
        %v1511 = vld [vmem:[%s792 + $0x20] sm:$0xff]
        %v1512 = vld [vmem:[%s792 + $0x38] sm:$0xff]
        %v1513 = vld [vmem:[%s792 + $0x50] sm:$0xff]
        %1514 = vmatpush.xpose.msra.mxu0 0.0
        %1515 = vmatpush.xpose.msra.mxu0 0.0
        %1516 = vmatpush.xpose.msra.mxu0 0.0
        %1517 = vmatpush.xpose.msra.mxu0 0.0
        %1518 = vmatpush.xpose.msra.mxu0 0.0
        %1519 = vmatpush.xpose.msra.mxu0 0.0
        %1520 = vmatpush.xpose.msra.mxu0 0.0
        %1521 = vmatpush.xpose.msra.mxu0 0.0
        %1522 = vmatpush.xpose.msra.mxu0 0.0
        %1523 = vmatpush.xpose.msra.mxu0 0.0
        %1524 = vmatpush.xpose.msra.mxu0 0.0
        %1525 = vmatpush.xpose.msra.mxu0 0.0
        %1526 = vmatpush.xpose.msra.mxu0 %v1513
        %1527 = vmatpush.xpose.msra.mxu0 %v1512
        %1528 = vmatpush.xpose.msra.mxu0 %v1511
        %1529 = vmatpush.xpose.msra.mxu0 %v1510
        %1530 = vmatmul.f32.gmra.mxu0 %v1494
        %v1531 = vpop.f32.mrf.mxu0
        %v1532 = vadd.f32 0.0, %v1531
        %1533 = vmatmul.f32.gmra.mxu0 %v1495
        %v1534 = vpop.f32.mrf.mxu0
        %v1535 = vadd.f32 0.0, %v1534
        %1536 = vmatmul.f32.gmra.mxu0 %v1496
        %v1537 = vpop.f32.mrf.mxu0
        %v1538 = vadd.f32 0.0, %v1537
        %1539 = vmatmul.f32.gmra.mxu0 %v1497
        %v1540 = vpop.f32.mrf.mxu0
        %v1541 = vadd.f32 0.0, %v1540
        %1542 = vmatmul.f32.gmra.mxu0 %v1498
        %v1543 = vpop.f32.mrf.mxu0
        %v1544 = vadd.f32 0.0, %v1543
        %1545 = vmatmul.f32.gmra.mxu0 %v1499
        %v1546 = vpop.f32.mrf.mxu0
        %v1547 = vadd.f32 0.0, %v1546
        %1548 = vmatmul.f32.gmra.mxu0 %v1500
        %v1549 = vpop.f32.mrf.mxu0
        %v1550 = vadd.f32 0.0, %v1549
        %1551 = vmatmul.f32.gmra.mxu0 %v1501
        %v1552 = vpop.f32.mrf.mxu0
        %v1553 = vadd.f32 0.0, %v1552
        %1554 = vmatmul.f32.gmra.mxu0 %v1502
        %v1555 = vpop.f32.mrf.mxu0
        %v1556 = vadd.f32 0.0, %v1555
        %1557 = vmatmul.f32.gmra.mxu0 %v1503
        %v1558 = vpop.f32.mrf.mxu0
        %v1559 = vadd.f32 0.0, %v1558
        %1560 = vmatmul.f32.gmra.mxu0 %v1504
        %v1561 = vpop.f32.mrf.mxu0
        %v1562 = vadd.f32 0.0, %v1561
        %1563 = vmatmul.f32.gmra.mxu0 %v1505
        %v1564 = vpop.f32.mrf.mxu0
        %v1565 = vadd.f32 0.0, %v1564
        %1566 = vmatmul.f32.gmra.mxu0 %v1506
        %v1567 = vpop.f32.mrf.mxu0
        %v1568 = vadd.f32 0.0, %v1567
        %1569 = vmatmul.f32.gmra.mxu0 %v1507
        %v1570 = vpop.f32.mrf.mxu0
        %v1571 = vadd.f32 0.0, %v1570
        %1572 = vmatmul.f32.gmra.mxu0 %v1508
        %v1573 = vpop.f32.mrf.mxu0
        %v1574 = vadd.f32 0.0, %v1573
        %1575 = vmatmul.f32.gmra.mxu0 %v1509
        %v1576 = vpop.f32.mrf.mxu0
        %v1577 = vadd.f32 0.0, %v1576
        %1578 = vdwg.mxu0
        %1579 = vmatpush.xpose.msra.mxu0 0.0
        %1580 = vmatpush.xpose.msra.mxu0 0.0
        %1581 = vmatpush.xpose.msra.mxu0 0.0
        %1582 = vmatpush.xpose.msra.mxu0 0.0
        %1583 = vmatpush.xpose.msra.mxu0 0.0
        %1584 = vmatpush.xpose.msra.mxu0 0.0
        %1585 = vmatpush.xpose.msra.mxu0 0.0
        %1586 = vmatpush.xpose.msra.mxu0 0.0
        %1587 = vmatpush.xpose.msra.mxu0 0.0
        %1588 = vmatpush.xpose.msra.mxu0 0.0
        %1589 = vmatpush.xpose.msra.mxu0 0.0
        %1590 = vmatpush.xpose.msra.mxu0 0.0
        %1591 = vmatpush.xpose.msra.mxu0 %v1156
        %1592 = vmatpush.xpose.msra.mxu0 %v1155
        %1593 = vmatpush.xpose.msra.mxu0 %v1154
        %1594 = vmatpush.xpose.msra.mxu0 %v1153
        %1595 = vmatmul.f32.gmra.mxu0 %v1137
        %v1596 = vpop.f32.mrf.mxu0
        %v1597 = vadd.f32 %v1532, %v1596
        %1598 = vmatmul.f32.gmra.mxu0 %v1138
        %v1599 = vpop.f32.mrf.mxu0
        %v1600 = vadd.f32 %v1535, %v1599
        %1601 = vmatmul.f32.gmra.mxu0 %v1139
        %v1602 = vpop.f32.mrf.mxu0
        %v1603 = vadd.f32 %v1538, %v1602
        %1604 = vmatmul.f32.gmra.mxu0 %v1140
        %v1605 = vpop.f32.mrf.mxu0
        %v1606 = vadd.f32 %v1541, %v1605
        %1607 = vmatmul.f32.gmra.mxu0 %v1141
        %v1608 = vpop.f32.mrf.mxu0
        %v1609 = vadd.f32 %v1544, %v1608
        %1610 = vmatmul.f32.gmra.mxu0 %v1142
        %v1611 = vpop.f32.mrf.mxu0
        %v1612 = vadd.f32 %v1547, %v1611
        %1613 = vmatmul.f32.gmra.mxu0 %v1143
        %v1614 = vpop.f32.mrf.mxu0
        %v1615 = vadd.f32 %v1550, %v1614
        %1616 = vmatmul.f32.gmra.mxu0 %v1144
        %v1617 = vpop.f32.mrf.mxu0
        %v1618 = vadd.f32 %v1553, %v1617
        %1619 = vmatmul.f32.gmra.mxu0 %v1145
        %v1620 = vpop.f32.mrf.mxu0
        %v1621 = vadd.f32 %v1556, %v1620
        %1622 = vmatmul.f32.gmra.mxu0 %v1146
        %v1623 = vpop.f32.mrf.mxu0
        %v1624 = vadd.f32 %v1559, %v1623
        %1625 = vmatmul.f32.gmra.mxu0 %v1147
        %v1626 = vpop.f32.mrf.mxu0
        %v1627 = vadd.f32 %v1562, %v1626
        %1628 = vmatmul.f32.gmra.mxu0 %v1148
        %v1629 = vpop.f32.mrf.mxu0
        %v1630 = vadd.f32 %v1565, %v1629
        %1631 = vmatmul.f32.gmra.mxu0 %v1149
        %v1632 = vpop.f32.mrf.mxu0
        %v1633 = vadd.f32 %v1568, %v1632
        %1634 = vmatmul.f32.gmra.mxu0 %v1150
        %v1635 = vpop.f32.mrf.mxu0
        %v1636 = vadd.f32 %v1571, %v1635
        %1637 = vmatmul.f32.gmra.mxu0 %v1151
        %v1638 = vpop.f32.mrf.mxu0
        %v1639 = vadd.f32 %v1574, %v1638
        %1640 = vmatmul.f32.gmra.mxu0 %v1152
        %v1641 = vpop.f32.mrf.mxu0
        %v1642 = vadd.f32 %v1577, %v1641
        %1643 = vdwg.mxu0
        %s1644 = scalar_lea.vmem %s719, 256 [#allocation3]
        %v1645 = vld [vmem:[%s1644] sm:$0xff]
        %v1646 = vld [vmem:[%s1644 + $0x8] sm:$0xff]
        %v1647 = vld [vmem:[%s1644 + $0x10] sm:$0xff]
        %v1648 = vld [vmem:[%s1644 + $0x18] sm:$0xff]
        %v1649 = vld [vmem:[%s1644 + $0x20] sm:$0xff]
        %v1650 = vld [vmem:[%s1644 + $0x28] sm:$0xff]
        %v1651 = vld [vmem:[%s1644 + $0x30] sm:$0xff]
        %v1652 = vld [vmem:[%s1644 + $0x38] sm:$0xff]
        %v1653 = vld [vmem:[%s1644 + $0x40] sm:$0xff]
        %v1654 = vld [vmem:[%s1644 + $0x48] sm:$0xff]
        %v1655 = vld [vmem:[%s1644 + $0x50] sm:$0xff]
        %v1656 = vld [vmem:[%s1644 + $0x58] sm:$0xff]
        %v1657 = vld [vmem:[%s1644 + $0x60] sm:$0xff]
        %v1658 = vld [vmem:[%s1644 + $0x68] sm:$0xff]
        %v1659 = vld [vmem:[%s1644 + $0x70] sm:$0xff]
        %v1660 = vld [vmem:[%s1644 + $0x78] sm:$0xff]
        %v1661 = vmul.f32 %v1645, 7.0
        %v1662 = vmul.f32 %v1646, 7.0
        %v1663 = vmul.f32 %v1647, 7.0
        %v1664 = vmul.f32 %v1648, 7.0
        %v1665 = vmul.f32 %v1649, 7.0
        %v1666 = vmul.f32 %v1650, 7.0
        %v1667 = vmul.f32 %v1651, 7.0
        %v1668 = vmul.f32 %v1652, 7.0
        %v1669 = vmul.f32 %v1653, 7.0
        %v1670 = vmul.f32 %v1654, 7.0
        %v1671 = vmul.f32 %v1655, 7.0
        %v1672 = vmul.f32 %v1656, 7.0
        %v1673 = vmul.f32 %v1657, 7.0
        %v1674 = vmul.f32 %v1658, 7.0
        %v1675 = vmul.f32 %v1659, 7.0
        %v1676 = vmul.f32 %v1660, 7.0
        %v1677 = vmax.f32 %v1661, 0.0
        %v1678 = vmax.f32 %v1662, 0.0
        %v1679 = vmax.f32 %v1663, 0.0
        %v1680 = vmax.f32 %v1664, 0.0
        %v1681 = vmax.f32 %v1665, 0.0
        %v1682 = vmax.f32 %v1666, 0.0
        %v1683 = vmax.f32 %v1667, 0.0
        %v1684 = vmax.f32 %v1668, 0.0
        %v1685 = vmax.f32 %v1669, 0.0
        %v1686 = vmax.f32 %v1670, 0.0
        %v1687 = vmax.f32 %v1671, 0.0
        %v1688 = vmax.f32 %v1672, 0.0
        %v1689 = vmax.f32 %v1673, 0.0
        %v1690 = vmax.f32 %v1674, 0.0
        %v1691 = vmax.f32 %v1675, 0.0
        %v1692 = vmax.f32 %v1676, 0.0
        %v1693 = vmin.f32 %v1677, 7.0
        %v1694 = vmin.f32 %v1678, 7.0
        %v1695 = vmin.f32 %v1679, 7.0
        %v1696 = vmin.f32 %v1680, 7.0
        %v1697 = vmin.f32 %v1681, 7.0
        %v1698 = vmin.f32 %v1682, 7.0
        %v1699 = vmin.f32 %v1683, 7.0
        %v1700 = vmin.f32 %v1684, 7.0
        %v1701 = vmin.f32 %v1685, 7.0
        %v1702 = vmin.f32 %v1686, 7.0
        %v1703 = vmin.f32 %v1687, 7.0
        %v1704 = vmin.f32 %v1688, 7.0
        %v1705 = vmin.f32 %v1689, 7.0
        %v1706 = vmin.f32 %v1690, 7.0
        %v1707 = vmin.f32 %v1691, 7.0
        %v1708 = vmin.f32 %v1692, 7.0
        %1710 = vset.pattern.permute.xlu0 0
        %1711 = vperm.xlu0 %1710, %v1693
        %v1712 = vpop.permute.xlu0 %1711
        %1715 = vset.pattern.permute.xlu0 0
        %1716 = vperm.xlu0 %1715, %v1694
        %v1717 = vpop.permute.xlu0 %1716
        %1720 = vset.pattern.permute.xlu0 0
        %1721 = vperm.xlu0 %1720, %v1695
        %v1722 = vpop.permute.xlu0 %1721
        %1725 = vset.pattern.permute.xlu0 0
        %1726 = vperm.xlu0 %1725, %v1696
        %v1727 = vpop.permute.xlu0 %1726
        %1730 = vset.pattern.permute.xlu0 0
        %1731 = vperm.xlu0 %1730, %v1697
        %v1732 = vpop.permute.xlu0 %1731
        %1735 = vset.pattern.permute.xlu0 0
        %1736 = vperm.xlu0 %1735, %v1698
        %v1737 = vpop.permute.xlu0 %1736
        %1740 = vset.pattern.permute.xlu0 0
        %1741 = vperm.xlu0 %1740, %v1699
        %v1742 = vpop.permute.xlu0 %1741
        %1745 = vset.pattern.permute.xlu0 0
        %1746 = vperm.xlu0 %1745, %v1700
        %v1747 = vpop.permute.xlu0 %1746
        %1750 = vset.pattern.permute.xlu0 0
        %1751 = vperm.xlu0 %1750, %v1701
        %v1752 = vpop.permute.xlu0 %1751
        %1755 = vset.pattern.permute.xlu0 0
        %1756 = vperm.xlu0 %1755, %v1702
        %v1757 = vpop.permute.xlu0 %1756
        %1760 = vset.pattern.permute.xlu0 0
        %1761 = vperm.xlu0 %1760, %v1703
        %v1762 = vpop.permute.xlu0 %1761
        %1765 = vset.pattern.permute.xlu0 0
        %1766 = vperm.xlu0 %1765, %v1704
        %v1767 = vpop.permute.xlu0 %1766
        %1770 = vset.pattern.permute.xlu0 0
        %1771 = vperm.xlu0 %1770, %v1705
        %v1772 = vpop.permute.xlu0 %1771
        %1775 = vset.pattern.permute.xlu0 0
        %1776 = vperm.xlu0 %1775, %v1706
        %v1777 = vpop.permute.xlu0 %1776
        %1780 = vset.pattern.permute.xlu0 0
        %1781 = vperm.xlu0 %1780, %v1707
        %v1782 = vpop.permute.xlu0 %1781
        %1785 = vset.pattern.permute.xlu0 0
        %1786 = vperm.xlu0 %1785, %v1708
        %v1787 = vpop.permute.xlu0 %1786
        %v1789 = vsub.f32 %v860, %v1712
        %v1790 = vsub.f32 %v860, %v1717
        %v1791 = vsub.f32 %v860, %v1722
        %v1792 = vsub.f32 %v860, %v1727
        %v1793 = vsub.f32 %v860, %v1732
        %v1794 = vsub.f32 %v860, %v1737
        %v1795 = vsub.f32 %v860, %v1742
        %v1796 = vsub.f32 %v860, %v1747
        %v1797 = vsub.f32 %v860, %v1752
        %v1798 = vsub.f32 %v860, %v1757
        %v1799 = vsub.f32 %v860, %v1762
        %v1800 = vsub.f32 %v860, %v1767
        %v1801 = vsub.f32 %v860, %v1772
        %v1802 = vsub.f32 %v860, %v1777
        %v1803 = vsub.f32 %v860, %v1782
        %v1804 = vsub.f32 %v860, %v1787
        %v1805 = vand.u32 2147483647, %v1789
        %v1806 = vand.u32 2147483647, %v1790
        %v1807 = vand.u32 2147483647, %v1791
        %v1808 = vand.u32 2147483647, %v1792
        %v1809 = vand.u32 2147483647, %v1793
        %v1810 = vand.u32 2147483647, %v1794
        %v1811 = vand.u32 2147483647, %v1795
        %v1812 = vand.u32 2147483647, %v1796
        %v1813 = vand.u32 2147483647, %v1797
        %v1814 = vand.u32 2147483647, %v1798
        %v1815 = vand.u32 2147483647, %v1799
        %v1816 = vand.u32 2147483647, %v1800
        %v1817 = vand.u32 2147483647, %v1801
        %v1818 = vand.u32 2147483647, %v1802
        %v1819 = vand.u32 2147483647, %v1803
        %v1820 = vand.u32 2147483647, %v1804
        %v1821 = vsub.f32 1.0, %v1805
        %v1822 = vsub.f32 1.0, %v1806
        %v1823 = vsub.f32 1.0, %v1807
        %v1824 = vsub.f32 1.0, %v1808
        %v1825 = vsub.f32 1.0, %v1809
        %v1826 = vsub.f32 1.0, %v1810
        %v1827 = vsub.f32 1.0, %v1811
        %v1828 = vsub.f32 1.0, %v1812
        %v1829 = vsub.f32 1.0, %v1813
        %v1830 = vsub.f32 1.0, %v1814
        %v1831 = vsub.f32 1.0, %v1815
        %v1832 = vsub.f32 1.0, %v1816
        %v1833 = vsub.f32 1.0, %v1817
        %v1834 = vsub.f32 1.0, %v1818
        %v1835 = vsub.f32 1.0, %v1819
        %v1836 = vsub.f32 1.0, %v1820
        %v1837 = vmax.f32 %v1821, 0.0
        %v1838 = vmax.f32 %v1822, 0.0
        %v1839 = vmax.f32 %v1823, 0.0
        %v1840 = vmax.f32 %v1824, 0.0
        %v1841 = vmax.f32 %v1825, 0.0
        %v1842 = vmax.f32 %v1826, 0.0
        %v1843 = vmax.f32 %v1827, 0.0
        %v1844 = vmax.f32 %v1828, 0.0
        %v1845 = vmax.f32 %v1829, 0.0
        %v1846 = vmax.f32 %v1830, 0.0
        %v1847 = vmax.f32 %v1831, 0.0
        %v1848 = vmax.f32 %v1832, 0.0
        %v1849 = vmax.f32 %v1833, 0.0
        %v1850 = vmax.f32 %v1834, 0.0
        %v1851 = vmax.f32 %v1835, 0.0
        %v1852 = vmax.f32 %v1836, 0.0
        %1853 = vset.pattern.permute.xlu0 1
        %1854 = vperm.xlu0 %1853, %v1693
        %v1855 = vpop.permute.xlu0 %1854
        %1857 = vset.pattern.permute.xlu0 1
        %1858 = vperm.xlu0 %1857, %v1694
        %v1859 = vpop.permute.xlu0 %1858
        %1861 = vset.pattern.permute.xlu0 1
        %1862 = vperm.xlu0 %1861, %v1695
        %v1863 = vpop.permute.xlu0 %1862
        %1865 = vset.pattern.permute.xlu0 1
        %1866 = vperm.xlu0 %1865, %v1696
        %v1867 = vpop.permute.xlu0 %1866
        %1869 = vset.pattern.permute.xlu0 1
        %1870 = vperm.xlu0 %1869, %v1697
        %v1871 = vpop.permute.xlu0 %1870
        %1873 = vset.pattern.permute.xlu0 1
        %1874 = vperm.xlu0 %1873, %v1698
        %v1875 = vpop.permute.xlu0 %1874
        %1877 = vset.pattern.permute.xlu0 1
        %1878 = vperm.xlu0 %1877, %v1699
        %v1879 = vpop.permute.xlu0 %1878
        %1881 = vset.pattern.permute.xlu0 1
        %1882 = vperm.xlu0 %1881, %v1700
        %v1883 = vpop.permute.xlu0 %1882
        %1885 = vset.pattern.permute.xlu0 1
        %1886 = vperm.xlu0 %1885, %v1701
        %v1887 = vpop.permute.xlu0 %1886
        %1889 = vset.pattern.permute.xlu0 1
        %1890 = vperm.xlu0 %1889, %v1702
        %v1891 = vpop.permute.xlu0 %1890
        %1893 = vset.pattern.permute.xlu0 1
        %1894 = vperm.xlu0 %1893, %v1703
        %v1895 = vpop.permute.xlu0 %1894
        %1897 = vset.pattern.permute.xlu0 1
        %1898 = vperm.xlu0 %1897, %v1704
        %v1899 = vpop.permute.xlu0 %1898
        %1901 = vset.pattern.permute.xlu0 1
        %1902 = vperm.xlu0 %1901, %v1705
        %v1903 = vpop.permute.xlu0 %1902
        %1905 = vset.pattern.permute.xlu0 1
        %1906 = vperm.xlu0 %1905, %v1706
        %v1907 = vpop.permute.xlu0 %1906
        %1909 = vset.pattern.permute.xlu0 1
        %1910 = vperm.xlu0 %1909, %v1707
        %v1911 = vpop.permute.xlu0 %1910
        %1913 = vset.pattern.permute.xlu0 1
        %1914 = vperm.xlu0 %1913, %v1708
        %v1915 = vpop.permute.xlu0 %1914
        %v1917 = vsub.f32 %v1007, %v1855
        %v1918 = vsub.f32 %v1007, %v1859
        %v1919 = vsub.f32 %v1007, %v1863
        %v1920 = vsub.f32 %v1007, %v1867
        %v1921 = vsub.f32 %v1007, %v1871
        %v1922 = vsub.f32 %v1007, %v1875
        %v1923 = vsub.f32 %v1007, %v1879
        %v1924 = vsub.f32 %v1007, %v1883
        %v1925 = vsub.f32 %v1007, %v1887
        %v1926 = vsub.f32 %v1007, %v1891
        %v1927 = vsub.f32 %v1007, %v1895
        %v1928 = vsub.f32 %v1007, %v1899
        %v1929 = vsub.f32 %v1007, %v1903
        %v1930 = vsub.f32 %v1007, %v1907
        %v1931 = vsub.f32 %v1007, %v1911
        %v1932 = vsub.f32 %v1007, %v1915
        %v1933 = vand.u32 2147483647, %v1917
        %v1934 = vand.u32 2147483647, %v1918
        %v1935 = vand.u32 2147483647, %v1919
        %v1936 = vand.u32 2147483647, %v1920
        %v1937 = vand.u32 2147483647, %v1921
        %v1938 = vand.u32 2147483647, %v1922
        %v1939 = vand.u32 2147483647, %v1923
        %v1940 = vand.u32 2147483647, %v1924
        %v1941 = vand.u32 2147483647, %v1925
        %v1942 = vand.u32 2147483647, %v1926
        %v1943 = vand.u32 2147483647, %v1927
        %v1944 = vand.u32 2147483647, %v1928
        %v1945 = vand.u32 2147483647, %v1929
        %v1946 = vand.u32 2147483647, %v1930
        %v1947 = vand.u32 2147483647, %v1931
        %v1948 = vand.u32 2147483647, %v1932
        %v1949 = vsub.f32 1.0, %v1933
        %v1950 = vsub.f32 1.0, %v1934
        %v1951 = vsub.f32 1.0, %v1935
        %v1952 = vsub.f32 1.0, %v1936
        %v1953 = vsub.f32 1.0, %v1937
        %v1954 = vsub.f32 1.0, %v1938
        %v1955 = vsub.f32 1.0, %v1939
        %v1956 = vsub.f32 1.0, %v1940
        %v1957 = vsub.f32 1.0, %v1941
        %v1958 = vsub.f32 1.0, %v1942
        %v1959 = vsub.f32 1.0, %v1943
        %v1960 = vsub.f32 1.0, %v1944
        %v1961 = vsub.f32 1.0, %v1945
        %v1962 = vsub.f32 1.0, %v1946
        %v1963 = vsub.f32 1.0, %v1947
        %v1964 = vsub.f32 1.0, %v1948
        %v1965 = vmax.f32 %v1949, 0.0
        %v1966 = vmax.f32 %v1950, 0.0
        %v1967 = vmax.f32 %v1951, 0.0
        %v1968 = vmax.f32 %v1952, 0.0
        %v1969 = vmax.f32 %v1953, 0.0
        %v1970 = vmax.f32 %v1954, 0.0
        %v1971 = vmax.f32 %v1955, 0.0
        %v1972 = vmax.f32 %v1956, 0.0
        %v1973 = vmax.f32 %v1957, 0.0
        %v1974 = vmax.f32 %v1958, 0.0
        %v1975 = vmax.f32 %v1959, 0.0
        %v1976 = vmax.f32 %v1960, 0.0
        %v1977 = vmax.f32 %v1961, 0.0
        %v1978 = vmax.f32 %v1962, 0.0
        %v1979 = vmax.f32 %v1963, 0.0
        %v1980 = vmax.f32 %v1964, 0.0
        %v1981 = vmul.f32 %v1837, %v1965
        %v1982 = vmul.f32 %v1838, %v1966
        %v1983 = vmul.f32 %v1839, %v1967
        %v1984 = vmul.f32 %v1840, %v1968
        %v1985 = vmul.f32 %v1841, %v1969
        %v1986 = vmul.f32 %v1842, %v1970
        %v1987 = vmul.f32 %v1843, %v1971
        %v1988 = vmul.f32 %v1844, %v1972
        %v1989 = vmul.f32 %v1845, %v1973
        %v1990 = vmul.f32 %v1846, %v1974
        %v1991 = vmul.f32 %v1847, %v1975
        %v1992 = vmul.f32 %v1848, %v1976
        %v1993 = vmul.f32 %v1849, %v1977
        %v1994 = vmul.f32 %v1850, %v1978
        %v1995 = vmul.f32 %v1851, %v1979
        %v1996 = vmul.f32 %v1852, %v1980
        %v1997 = vld [vmem:[%s792 + $0x10] sm:$0xff]
        %v1998 = vld [vmem:[%s792 + $0x28] sm:$0xff]
        %v1999 = vld [vmem:[%s792 + $0x40] sm:$0xff]
        %v2000 = vld [vmem:[%s792 + $0x58] sm:$0xff]
        %2001 = vmatpush.xpose.msra.mxu0 0.0
        %2002 = vmatpush.xpose.msra.mxu0 0.0
        %2003 = vmatpush.xpose.msra.mxu0 0.0
        %2004 = vmatpush.xpose.msra.mxu0 0.0
        %2005 = vmatpush.xpose.msra.mxu0 0.0
        %2006 = vmatpush.xpose.msra.mxu0 0.0
        %2007 = vmatpush.xpose.msra.mxu0 0.0
        %2008 = vmatpush.xpose.msra.mxu0 0.0
        %2009 = vmatpush.xpose.msra.mxu0 0.0
        %2010 = vmatpush.xpose.msra.mxu0 0.0
        %2011 = vmatpush.xpose.msra.mxu0 0.0
        %2012 = vmatpush.xpose.msra.mxu0 0.0
        %2013 = vmatpush.xpose.msra.mxu0 %v2000
        %2014 = vmatpush.xpose.msra.mxu0 %v1999
        %2015 = vmatpush.xpose.msra.mxu0 %v1998
        %2016 = vmatpush.xpose.msra.mxu0 %v1997
        %2017 = vmatmul.f32.gmra.mxu0 %v1981
        %v2018 = vpop.f32.mrf.mxu0
        %v2019 = vadd.f32 0.0, %v2018
        %2020 = vmatmul.f32.gmra.mxu0 %v1982
        %v2021 = vpop.f32.mrf.mxu0
        %v2022 = vadd.f32 0.0, %v2021
        %2023 = vmatmul.f32.gmra.mxu0 %v1983
        %v2024 = vpop.f32.mrf.mxu0
        %v2025 = vadd.f32 0.0, %v2024
        %2026 = vmatmul.f32.gmra.mxu0 %v1984
        %v2027 = vpop.f32.mrf.mxu0
        %v2028 = vadd.f32 0.0, %v2027
        %2029 = vmatmul.f32.gmra.mxu0 %v1985
        %v2030 = vpop.f32.mrf.mxu0
        %v2031 = vadd.f32 0.0, %v2030
        %2032 = vmatmul.f32.gmra.mxu0 %v1986
        %v2033 = vpop.f32.mrf.mxu0
        %v2034 = vadd.f32 0.0, %v2033
        %2035 = vmatmul.f32.gmra.mxu0 %v1987
        %v2036 = vpop.f32.mrf.mxu0
        %v2037 = vadd.f32 0.0, %v2036
        %2038 = vmatmul.f32.gmra.mxu0 %v1988
        %v2039 = vpop.f32.mrf.mxu0
        %v2040 = vadd.f32 0.0, %v2039
        %2041 = vmatmul.f32.gmra.mxu0 %v1989
        %v2042 = vpop.f32.mrf.mxu0
        %v2043 = vadd.f32 0.0, %v2042
        %2044 = vmatmul.f32.gmra.mxu0 %v1990
        %v2045 = vpop.f32.mrf.mxu0
        %v2046 = vadd.f32 0.0, %v2045
        %2047 = vmatmul.f32.gmra.mxu0 %v1991
        %v2048 = vpop.f32.mrf.mxu0
        %v2049 = vadd.f32 0.0, %v2048
        %2050 = vmatmul.f32.gmra.mxu0 %v1992
        %v2051 = vpop.f32.mrf.mxu0
        %v2052 = vadd.f32 0.0, %v2051
        %2053 = vmatmul.f32.gmra.mxu0 %v1993
        %v2054 = vpop.f32.mrf.mxu0
        %v2055 = vadd.f32 0.0, %v2054
        %2056 = vmatmul.f32.gmra.mxu0 %v1994
        %v2057 = vpop.f32.mrf.mxu0
        %v2058 = vadd.f32 0.0, %v2057
        %2059 = vmatmul.f32.gmra.mxu0 %v1995
        %v2060 = vpop.f32.mrf.mxu0
        %v2061 = vadd.f32 0.0, %v2060
        %2062 = vmatmul.f32.gmra.mxu0 %v1996
        %v2063 = vpop.f32.mrf.mxu0
        %v2064 = vadd.f32 0.0, %v2063
        %2065 = vdwg.mxu0
        %v2066 = vadd.f32 %v1597, %v2019
        %v2067 = vadd.f32 %v1600, %v2022
        %v2068 = vadd.f32 %v1603, %v2025
        %v2069 = vadd.f32 %v1606, %v2028
        %v2070 = vadd.f32 %v1609, %v2031
        %v2071 = vadd.f32 %v1612, %v2034
        %v2072 = vadd.f32 %v1615, %v2037
        %v2073 = vadd.f32 %v1618, %v2040
        %v2074 = vadd.f32 %v1621, %v2043
        %v2075 = vadd.f32 %v1624, %v2046
        %v2076 = vadd.f32 %v1627, %v2049
        %v2077 = vadd.f32 %v1630, %v2052
        %v2078 = vadd.f32 %v1633, %v2055
        %v2079 = vadd.f32 %v1636, %v2058
        %v2080 = vadd.f32 %v1639, %v2061
        %v2081 = vadd.f32 %v1642, %v2064
        %v2082 = vld [vmem:[%s785] sm:$0xff]
        %v2083 = vld [vmem:[%s785 + $0x8] sm:$0xff]
        %v2084 = vld [vmem:[%s785 + $0x10] sm:$0xff]
        %v2085 = vld [vmem:[%s785 + $0x18] sm:$0xff]
        %v2086 = vld [vmem:[%s785 + $0x20] sm:$0xff]
        %v2087 = vld [vmem:[%s785 + $0x28] sm:$0xff]
        %v2088 = vld [vmem:[%s785 + $0x30] sm:$0xff]
        %v2089 = vld [vmem:[%s785 + $0x38] sm:$0xff]
        %v2090 = vld [vmem:[%s785 + $0x40] sm:$0xff]
        %v2091 = vld [vmem:[%s785 + $0x48] sm:$0xff]
        %v2092 = vld [vmem:[%s785 + $0x50] sm:$0xff]
        %v2093 = vld [vmem:[%s785 + $0x58] sm:$0xff]
        %v2094 = vld [vmem:[%s785 + $0x60] sm:$0xff]
        %v2095 = vld [vmem:[%s785 + $0x68] sm:$0xff]
        %v2096 = vld [vmem:[%s785 + $0x70] sm:$0xff]
        %v2097 = vld [vmem:[%s785 + $0x78] sm:$0xff]
        %v2098 = vld [vmem:[%s5] sm:$0x1]
        %2100 = vset.pattern.permute.xlu0 0
        %2101 = vperm.xlu0 %2100, %v2082
        %v2102 = vpop.permute.xlu0 %2101
        %2105 = vset.pattern.permute.xlu0 0
        %2106 = vperm.xlu0 %2105, %v2083
        %v2107 = vpop.permute.xlu0 %2106
        %2110 = vset.pattern.permute.xlu0 0
        %2111 = vperm.xlu0 %2110, %v2084
        %v2112 = vpop.permute.xlu0 %2111
        %2115 = vset.pattern.permute.xlu0 0
        %2116 = vperm.xlu0 %2115, %v2085
        %v2117 = vpop.permute.xlu0 %2116
        %2120 = vset.pattern.permute.xlu0 0
        %2121 = vperm.xlu0 %2120, %v2086
        %v2122 = vpop.permute.xlu0 %2121
        %2125 = vset.pattern.permute.xlu0 0
        %2126 = vperm.xlu0 %2125, %v2087
        %v2127 = vpop.permute.xlu0 %2126
        %2130 = vset.pattern.permute.xlu0 0
        %2131 = vperm.xlu0 %2130, %v2088
        %v2132 = vpop.permute.xlu0 %2131
        %2135 = vset.pattern.permute.xlu0 0
        %2136 = vperm.xlu0 %2135, %v2089
        %v2137 = vpop.permute.xlu0 %2136
        %2140 = vset.pattern.permute.xlu0 0
        %2141 = vperm.xlu0 %2140, %v2090
        %v2142 = vpop.permute.xlu0 %2141
        %2145 = vset.pattern.permute.xlu0 0
        %2146 = vperm.xlu0 %2145, %v2091
        %v2147 = vpop.permute.xlu0 %2146
        %2150 = vset.pattern.permute.xlu0 0
        %2151 = vperm.xlu0 %2150, %v2092
        %v2152 = vpop.permute.xlu0 %2151
        %2155 = vset.pattern.permute.xlu0 0
        %2156 = vperm.xlu0 %2155, %v2093
        %v2157 = vpop.permute.xlu0 %2156
        %2160 = vset.pattern.permute.xlu0 0
        %2161 = vperm.xlu0 %2160, %v2094
        %v2162 = vpop.permute.xlu0 %2161
        %2165 = vset.pattern.permute.xlu0 0
        %2166 = vperm.xlu0 %2165, %v2095
        %v2167 = vpop.permute.xlu0 %2166
        %2170 = vset.pattern.permute.xlu0 0
        %2171 = vperm.xlu0 %2170, %v2096
        %v2172 = vpop.permute.xlu0 %2171
        %2175 = vset.pattern.permute.xlu0 0
        %2176 = vperm.xlu0 %2175, %v2097
        %v2177 = vpop.permute.xlu0 %2176
        %v2179 = vperm.slane %v2098, 0
        %v2180 = vmul.f32 %v2102, %v2179
        %v2181 = vmul.f32 %v2107, %v2179
        %v2182 = vmul.f32 %v2112, %v2179
        %v2183 = vmul.f32 %v2117, %v2179
        %v2184 = vmul.f32 %v2122, %v2179
        %v2185 = vmul.f32 %v2127, %v2179
        %v2186 = vmul.f32 %v2132, %v2179
        %v2187 = vmul.f32 %v2137, %v2179
        %v2188 = vmul.f32 %v2142, %v2179
        %v2189 = vmul.f32 %v2147, %v2179
        %v2190 = vmul.f32 %v2152, %v2179
        %v2191 = vmul.f32 %v2157, %v2179
        %v2192 = vmul.f32 %v2162, %v2179
        %v2193 = vmul.f32 %v2167, %v2179
        %v2194 = vmul.f32 %v2172, %v2179
        %v2195 = vmul.f32 %v2177, %v2179
        %v2196 = vld [vmem:[%s6] sm:$0x1]
        %v2198 = vperm.slane %v2196, 0
        %v2200 = vadd.f32 %v2180, %v2198
        %v2201 = vadd.f32 %v2181, %v2198
        %v2202 = vadd.f32 %v2182, %v2198
        %v2203 = vadd.f32 %v2183, %v2198
        %v2204 = vadd.f32 %v2184, %v2198
        %v2205 = vadd.f32 %v2185, %v2198
        %v2206 = vadd.f32 %v2186, %v2198
        %v2207 = vadd.f32 %v2187, %v2198
        %v2208 = vadd.f32 %v2188, %v2198
        %v2209 = vadd.f32 %v2189, %v2198
        %v2210 = vadd.f32 %v2190, %v2198
        %v2211 = vadd.f32 %v2191, %v2198
        %v2212 = vadd.f32 %v2192, %v2198
        %v2213 = vadd.f32 %v2193, %v2198
        %v2214 = vadd.f32 %v2194, %v2198
        %v2215 = vadd.f32 %v2195, %v2198
        %v2216 = vld [vmem:[%s5 + $0x1] sm:$0x1]
        %2217 = vset.pattern.permute.xlu0 1
        %2218 = vperm.xlu0 %2217, %v2082
        %v2219 = vpop.permute.xlu0 %2218
        %2221 = vset.pattern.permute.xlu0 1
        %2222 = vperm.xlu0 %2221, %v2083
        %v2223 = vpop.permute.xlu0 %2222
        %2225 = vset.pattern.permute.xlu0 1
        %2226 = vperm.xlu0 %2225, %v2084
        %v2227 = vpop.permute.xlu0 %2226
        %2229 = vset.pattern.permute.xlu0 1
        %2230 = vperm.xlu0 %2229, %v2085
        %v2231 = vpop.permute.xlu0 %2230
        %2233 = vset.pattern.permute.xlu0 1
        %2234 = vperm.xlu0 %2233, %v2086
        %v2235 = vpop.permute.xlu0 %2234
        %2237 = vset.pattern.permute.xlu0 1
        %2238 = vperm.xlu0 %2237, %v2087
        %v2239 = vpop.permute.xlu0 %2238
        %2241 = vset.pattern.permute.xlu0 1
        %2242 = vperm.xlu0 %2241, %v2088
        %v2243 = vpop.permute.xlu0 %2242
        %2245 = vset.pattern.permute.xlu0 1
        %2246 = vperm.xlu0 %2245, %v2089
        %v2247 = vpop.permute.xlu0 %2246
        %2249 = vset.pattern.permute.xlu0 1
        %2250 = vperm.xlu0 %2249, %v2090
        %v2251 = vpop.permute.xlu0 %2250
        %2253 = vset.pattern.permute.xlu0 1
        %2254 = vperm.xlu0 %2253, %v2091
        %v2255 = vpop.permute.xlu0 %2254
        %2257 = vset.pattern.permute.xlu0 1
        %2258 = vperm.xlu0 %2257, %v2092
        %v2259 = vpop.permute.xlu0 %2258
        %2261 = vset.pattern.permute.xlu0 1
        %2262 = vperm.xlu0 %2261, %v2093
        %v2263 = vpop.permute.xlu0 %2262
        %2265 = vset.pattern.permute.xlu0 1
        %2266 = vperm.xlu0 %2265, %v2094
        %v2267 = vpop.permute.xlu0 %2266
        %2269 = vset.pattern.permute.xlu0 1
        %2270 = vperm.xlu0 %2269, %v2095
        %v2271 = vpop.permute.xlu0 %2270
        %2273 = vset.pattern.permute.xlu0 1
        %2274 = vperm.xlu0 %2273, %v2096
        %v2275 = vpop.permute.xlu0 %2274
        %2277 = vset.pattern.permute.xlu0 1
        %2278 = vperm.xlu0 %2277, %v2097
        %v2279 = vpop.permute.xlu0 %2278
        %v2281 = vperm.slane %v2216, 0
        %v2282 = vmul.f32 %v2219, %v2281
        %v2283 = vmul.f32 %v2223, %v2281
        %v2284 = vmul.f32 %v2227, %v2281
        %v2285 = vmul.f32 %v2231, %v2281
        %v2286 = vmul.f32 %v2235, %v2281
        %v2287 = vmul.f32 %v2239, %v2281
        %v2288 = vmul.f32 %v2243, %v2281
        %v2289 = vmul.f32 %v2247, %v2281
        %v2290 = vmul.f32 %v2251, %v2281
        %v2291 = vmul.f32 %v2255, %v2281
        %v2292 = vmul.f32 %v2259, %v2281
        %v2293 = vmul.f32 %v2263, %v2281
        %v2294 = vmul.f32 %v2267, %v2281
        %v2295 = vmul.f32 %v2271, %v2281
        %v2296 = vmul.f32 %v2275, %v2281
        %v2297 = vmul.f32 %v2279, %v2281
        %v2298 = vadd.f32 %v2200, %v2282
        %v2299 = vadd.f32 %v2201, %v2283
        %v2300 = vadd.f32 %v2202, %v2284
        %v2301 = vadd.f32 %v2203, %v2285
        %v2302 = vadd.f32 %v2204, %v2286
        %v2303 = vadd.f32 %v2205, %v2287
        %v2304 = vadd.f32 %v2206, %v2288
        %v2305 = vadd.f32 %v2207, %v2289
        %v2306 = vadd.f32 %v2208, %v2290
        %v2307 = vadd.f32 %v2209, %v2291
        %v2308 = vadd.f32 %v2210, %v2292
        %v2309 = vadd.f32 %v2211, %v2293
        %v2310 = vadd.f32 %v2212, %v2294
        %v2311 = vadd.f32 %v2213, %v2295
        %v2312 = vadd.f32 %v2214, %v2296
        %v2313 = vadd.f32 %v2215, %v2297
        %v2314 = vld [vmem:[%s5 + $0x2] sm:$0x1]
        %2315 = vset.pattern.permute.xlu0 2
        %2316 = vperm.xlu0 %2315, %v2082
        %v2317 = vpop.permute.xlu0 %2316
        %2319 = vset.pattern.permute.xlu0 2
        %2320 = vperm.xlu0 %2319, %v2083
        %v2321 = vpop.permute.xlu0 %2320
        %2323 = vset.pattern.permute.xlu0 2
        %2324 = vperm.xlu0 %2323, %v2084
        %v2325 = vpop.permute.xlu0 %2324
        %2327 = vset.pattern.permute.xlu0 2
        %2328 = vperm.xlu0 %2327, %v2085
        %v2329 = vpop.permute.xlu0 %2328
        %2331 = vset.pattern.permute.xlu0 2
        %2332 = vperm.xlu0 %2331, %v2086
        %v2333 = vpop.permute.xlu0 %2332
        %2335 = vset.pattern.permute.xlu0 2
        %2336 = vperm.xlu0 %2335, %v2087
        %v2337 = vpop.permute.xlu0 %2336
        %2339 = vset.pattern.permute.xlu0 2
        %2340 = vperm.xlu0 %2339, %v2088
        %v2341 = vpop.permute.xlu0 %2340
        %2343 = vset.pattern.permute.xlu0 2
        %2344 = vperm.xlu0 %2343, %v2089
        %v2345 = vpop.permute.xlu0 %2344
        %2347 = vset.pattern.permute.xlu0 2
        %2348 = vperm.xlu0 %2347, %v2090
        %v2349 = vpop.permute.xlu0 %2348
        %2351 = vset.pattern.permute.xlu0 2
        %2352 = vperm.xlu0 %2351, %v2091
        %v2353 = vpop.permute.xlu0 %2352
        %2355 = vset.pattern.permute.xlu0 2
        %2356 = vperm.xlu0 %2355, %v2092
        %v2357 = vpop.permute.xlu0 %2356
        %2359 = vset.pattern.permute.xlu0 2
        %2360 = vperm.xlu0 %2359, %v2093
        %v2361 = vpop.permute.xlu0 %2360
        %2363 = vset.pattern.permute.xlu0 2
        %2364 = vperm.xlu0 %2363, %v2094
        %v2365 = vpop.permute.xlu0 %2364
        %2367 = vset.pattern.permute.xlu0 2
        %2368 = vperm.xlu0 %2367, %v2095
        %v2369 = vpop.permute.xlu0 %2368
        %2371 = vset.pattern.permute.xlu0 2
        %2372 = vperm.xlu0 %2371, %v2096
        %v2373 = vpop.permute.xlu0 %2372
        %2375 = vset.pattern.permute.xlu0 2
        %2376 = vperm.xlu0 %2375, %v2097
        %v2377 = vpop.permute.xlu0 %2376
        %v2379 = vperm.slane %v2314, 0
        %v2380 = vmul.f32 %v2317, %v2379
        %v2381 = vmul.f32 %v2321, %v2379
        %v2382 = vmul.f32 %v2325, %v2379
        %v2383 = vmul.f32 %v2329, %v2379
        %v2384 = vmul.f32 %v2333, %v2379
        %v2385 = vmul.f32 %v2337, %v2379
        %v2386 = vmul.f32 %v2341, %v2379
        %v2387 = vmul.f32 %v2345, %v2379
        %v2388 = vmul.f32 %v2349, %v2379
        %v2389 = vmul.f32 %v2353, %v2379
        %v2390 = vmul.f32 %v2357, %v2379
        %v2391 = vmul.f32 %v2361, %v2379
        %v2392 = vmul.f32 %v2365, %v2379
        %v2393 = vmul.f32 %v2369, %v2379
        %v2394 = vmul.f32 %v2373, %v2379
        %v2395 = vmul.f32 %v2377, %v2379
        %v2396 = vadd.f32 %v2298, %v2380
        %v2397 = vadd.f32 %v2299, %v2381
        %v2398 = vadd.f32 %v2300, %v2382
        %v2399 = vadd.f32 %v2301, %v2383
        %v2400 = vadd.f32 %v2302, %v2384
        %v2401 = vadd.f32 %v2303, %v2385
        %v2402 = vadd.f32 %v2304, %v2386
        %v2403 = vadd.f32 %v2305, %v2387
        %v2404 = vadd.f32 %v2306, %v2388
        %v2405 = vadd.f32 %v2307, %v2389
        %v2406 = vadd.f32 %v2308, %v2390
        %v2407 = vadd.f32 %v2309, %v2391
        %v2408 = vadd.f32 %v2310, %v2392
        %v2409 = vadd.f32 %v2311, %v2393
        %v2410 = vadd.f32 %v2312, %v2394
        %v2411 = vadd.f32 %v2313, %v2395
        %v2412 = vld [vmem:[%s7] sm:$0xff]
        %v2413 = vld [vmem:[%s7 + $0x8] sm:$0xff]
        %v2414 = vld [vmem:[%s7 + $0x10] sm:$0xff]
        %v2415 = vld [vmem:[%s7 + $0x18] sm:$0xff]
        %v2416 = vld [vmem:[%s7 + $0x20] sm:$0xff]
        %v2417 = vld [vmem:[%s7 + $0x28] sm:$0xff]
        %v2418 = vld [vmem:[%s7 + $0x30] sm:$0xff]
        %v2419 = vld [vmem:[%s7 + $0x38] sm:$0xff]
        %v2420 = vld [vmem:[%s7 + $0x40] sm:$0xff]
        %v2421 = vld [vmem:[%s7 + $0x48] sm:$0xff]
        %v2422 = vld [vmem:[%s7 + $0x50] sm:$0xff]
        %v2423 = vld [vmem:[%s7 + $0x58] sm:$0xff]
        %v2424 = vld [vmem:[%s7 + $0x60] sm:$0xff]
        %v2425 = vld [vmem:[%s7 + $0x68] sm:$0xff]
        %v2426 = vld [vmem:[%s7 + $0x70] sm:$0xff]
        %v2427 = vld [vmem:[%s7 + $0x78] sm:$0xff]
        %v2428 = vld [vmem:[%s7 + $0x80] sm:$0xff]
        %v2429 = vld [vmem:[%s7 + $0x88] sm:$0xff]
        %v2430 = vld [vmem:[%s7 + $0x90] sm:$0xff]
        %v2431 = vld [vmem:[%s7 + $0x98] sm:$0xff]
        %v2432 = vld [vmem:[%s8] sm:$0x1f]
        %v2434 = vperm.slane %v2432, 0
        %v2435 = vperm.slane %v2432, 1
        %v2436 = vperm.slane %v2432, 2
        %v2437 = vperm.slane %v2432, 3
        %v2438 = vperm.slane %v2432, 4
        %vm2444 = vcmask 261120
        %v2446 = vsel %vm2444, %v2066, 0
        %v2449 = vsel %vm2444, %v2067, 0
        %v2452 = vsel %vm2444, %v2068, 0
        %v2455 = vsel %vm2444, %v2069, 0
        %v2458 = vsel %vm2444, %v2070, 0
        %v2461 = vsel %vm2444, %v2071, 0
        %v2464 = vsel %vm2444, %v2072, 0
        %v2467 = vsel %vm2444, %v2073, 0
        %v2470 = vsel %vm2444, %v2074, 0
        %v2473 = vsel %vm2444, %v2075, 0
        %v2476 = vsel %vm2444, %v2076, 0
        %v2479 = vsel %vm2444, %v2077, 0
        %v2482 = vsel %vm2444, %v2078, 0
        %v2485 = vsel %vm2444, %v2079, 0
        %v2488 = vsel %vm2444, %v2080, 0
        %v2491 = vsel %vm2444, %v2081, 0
        %2493 = vmatpush.msra.mxu0 0.0
        %2494 = vmatpush.msra.mxu0 0.0
        %2495 = vmatpush.msra.mxu0 0.0
        %2496 = vmatpush.msra.mxu0 0.0
        %2497 = vmatpush.msra.mxu0 0.0
        %2498 = vmatpush.msra.mxu0 0.0
        %2499 = vmatpush.msra.mxu0 0.0
        %2500 = vmatpush.msra.mxu0 0.0
        %2501 = vmatpush.msra.mxu0 0.0
        %2502 = vmatpush.msra.mxu0 0.0
        %2503 = vmatpush.msra.mxu0 0.0
        %2504 = vmatpush.msra.mxu0 0.0
        %2505 = vmatpush.msra.mxu0 %v2427
        %2506 = vmatpush.msra.mxu0 %v2422
        %2507 = vmatpush.msra.mxu0 %v2417
        %2508 = vmatpush.msra.mxu0 %v2412
        %2509 = vmatmul.f32.gmra.mxu0 %v2446
        %v2510 = vpop.f32.mrf.mxu0
        %v2511 = vadd.f32 %v2434, %v2510
        %2512 = vmatmul.f32.gmra.mxu0 %v2449
        %v2513 = vpop.f32.mrf.mxu0
        %v2514 = vadd.f32 %v2434, %v2513
        %2515 = vmatmul.f32.gmra.mxu0 %v2452
        %v2516 = vpop.f32.mrf.mxu0
        %v2517 = vadd.f32 %v2434, %v2516
        %2518 = vmatmul.f32.gmra.mxu0 %v2455
        %v2519 = vpop.f32.mrf.mxu0
        %v2520 = vadd.f32 %v2434, %v2519
        %2521 = vmatmul.f32.gmra.mxu0 %v2458
        %v2522 = vpop.f32.mrf.mxu0
        %v2523 = vadd.f32 %v2434, %v2522
        %2524 = vmatmul.f32.gmra.mxu0 %v2461
        %v2525 = vpop.f32.mrf.mxu0
        %v2526 = vadd.f32 %v2434, %v2525
        %2527 = vmatmul.f32.gmra.mxu0 %v2464
        %v2528 = vpop.f32.mrf.mxu0
        %v2529 = vadd.f32 %v2434, %v2528
        %2530 = vmatmul.f32.gmra.mxu0 %v2467
        %v2531 = vpop.f32.mrf.mxu0
        %v2532 = vadd.f32 %v2434, %v2531
        %2533 = vmatmul.f32.gmra.mxu0 %v2470
        %v2534 = vpop.f32.mrf.mxu0
        %v2535 = vadd.f32 %v2434, %v2534
        %2536 = vmatmul.f32.gmra.mxu0 %v2473
        %v2537 = vpop.f32.mrf.mxu0
        %v2538 = vadd.f32 %v2434, %v2537
        %2539 = vmatmul.f32.gmra.mxu0 %v2476
        %v2540 = vpop.f32.mrf.mxu0
        %v2541 = vadd.f32 %v2434, %v2540
        %2542 = vmatmul.f32.gmra.mxu0 %v2479
        %v2543 = vpop.f32.mrf.mxu0
        %v2544 = vadd.f32 %v2434, %v2543
        %2545 = vmatmul.f32.gmra.mxu0 %v2482
        %v2546 = vpop.f32.mrf.mxu0
        %v2547 = vadd.f32 %v2434, %v2546
        %2548 = vmatmul.f32.gmra.mxu0 %v2485
        %v2549 = vpop.f32.mrf.mxu0
        %v2550 = vadd.f32 %v2434, %v2549
        %2551 = vmatmul.f32.gmra.mxu0 %v2488
        %v2552 = vpop.f32.mrf.mxu0
        %v2553 = vadd.f32 %v2434, %v2552
        %2554 = vmatmul.f32.gmra.mxu0 %v2491
        %v2555 = vpop.f32.mrf.mxu0
        %v2556 = vadd.f32 %v2434, %v2555
        %2557 = vdwg.mxu0
        %2558 = vmatpush.msra.mxu0 0.0
        %2559 = vmatpush.msra.mxu0 0.0
        %2560 = vmatpush.msra.mxu0 0.0
        %2561 = vmatpush.msra.mxu0 0.0
        %2562 = vmatpush.msra.mxu0 0.0
        %2563 = vmatpush.msra.mxu0 0.0
        %2564 = vmatpush.msra.mxu0 0.0
        %2565 = vmatpush.msra.mxu0 0.0
        %2566 = vmatpush.msra.mxu0 0.0
        %2567 = vmatpush.msra.mxu0 0.0
        %2568 = vmatpush.msra.mxu0 0.0
        %2569 = vmatpush.msra.mxu0 0.0
        %2570 = vmatpush.msra.mxu0 %v2428
        %2571 = vmatpush.msra.mxu0 %v2423
        %2572 = vmatpush.msra.mxu0 %v2418
        %2573 = vmatpush.msra.mxu0 %v2413
        %2574 = vmatmul.f32.gmra.mxu0 %v2446
        %v2575 = vpop.f32.mrf.mxu0
        %v2576 = vadd.f32 %v2435, %v2575
        %2577 = vmatmul.f32.gmra.mxu0 %v2449
        %v2578 = vpop.f32.mrf.mxu0
        %v2579 = vadd.f32 %v2435, %v2578
        %2580 = vmatmul.f32.gmra.mxu0 %v2452
        %v2581 = vpop.f32.mrf.mxu0
        %v2582 = vadd.f32 %v2435, %v2581
        %2583 = vmatmul.f32.gmra.mxu0 %v2455
        %v2584 = vpop.f32.mrf.mxu0
        %v2585 = vadd.f32 %v2435, %v2584
        %2586 = vmatmul.f32.gmra.mxu0 %v2458
        %v2587 = vpop.f32.mrf.mxu0
        %v2588 = vadd.f32 %v2435, %v2587
        %2589 = vmatmul.f32.gmra.mxu0 %v2461
        %v2590 = vpop.f32.mrf.mxu0
        %v2591 = vadd.f32 %v2435, %v2590
        %2592 = vmatmul.f32.gmra.mxu0 %v2464
        %v2593 = vpop.f32.mrf.mxu0
        %v2594 = vadd.f32 %v2435, %v2593
        %2595 = vmatmul.f32.gmra.mxu0 %v2467
        %v2596 = vpop.f32.mrf.mxu0
        %v2597 = vadd.f32 %v2435, %v2596
        %2598 = vmatmul.f32.gmra.mxu0 %v2470
        %v2599 = vpop.f32.mrf.mxu0
        %v2600 = vadd.f32 %v2435, %v2599
        %2601 = vmatmul.f32.gmra.mxu0 %v2473
        %v2602 = vpop.f32.mrf.mxu0
        %v2603 = vadd.f32 %v2435, %v2602
        %2604 = vmatmul.f32.gmra.mxu0 %v2476
        %v2605 = vpop.f32.mrf.mxu0
        %v2606 = vadd.f32 %v2435, %v2605
        %2607 = vmatmul.f32.gmra.mxu0 %v2479
        %v2608 = vpop.f32.mrf.mxu0
        %v2609 = vadd.f32 %v2435, %v2608
        %2610 = vmatmul.f32.gmra.mxu0 %v2482
        %v2611 = vpop.f32.mrf.mxu0
        %v2612 = vadd.f32 %v2435, %v2611
        %2613 = vmatmul.f32.gmra.mxu0 %v2485
        %v2614 = vpop.f32.mrf.mxu0
        %v2615 = vadd.f32 %v2435, %v2614
        %2616 = vmatmul.f32.gmra.mxu0 %v2488
        %v2617 = vpop.f32.mrf.mxu0
        %v2618 = vadd.f32 %v2435, %v2617
        %2619 = vmatmul.f32.gmra.mxu0 %v2491
        %v2620 = vpop.f32.mrf.mxu0
        %v2621 = vadd.f32 %v2435, %v2620
        %2622 = vdwg.mxu0
        %2623 = vmatpush.msra.mxu0 0.0
        %2624 = vmatpush.msra.mxu0 0.0
        %2625 = vmatpush.msra.mxu0 0.0
        %2626 = vmatpush.msra.mxu0 0.0
        %2627 = vmatpush.msra.mxu0 0.0
        %2628 = vmatpush.msra.mxu0 0.0
        %2629 = vmatpush.msra.mxu0 0.0
        %2630 = vmatpush.msra.mxu0 0.0
        %2631 = vmatpush.msra.mxu0 0.0
        %2632 = vmatpush.msra.mxu0 0.0
        %2633 = vmatpush.msra.mxu0 0.0
        %2634 = vmatpush.msra.mxu0 0.0
        %2635 = vmatpush.msra.mxu0 %v2429
        %2636 = vmatpush.msra.mxu0 %v2424
        %2637 = vmatpush.msra.mxu0 %v2419
        %2638 = vmatpush.msra.mxu0 %v2414
        %2639 = vmatmul.f32.gmra.mxu0 %v2446
        %v2640 = vpop.f32.mrf.mxu0
        %v2641 = vadd.f32 %v2436, %v2640
        %2642 = vmatmul.f32.gmra.mxu0 %v2449
        %v2643 = vpop.f32.mrf.mxu0
        %v2644 = vadd.f32 %v2436, %v2643
        %2645 = vmatmul.f32.gmra.mxu0 %v2452
        %v2646 = vpop.f32.mrf.mxu0
        %v2647 = vadd.f32 %v2436, %v2646
        %2648 = vmatmul.f32.gmra.mxu0 %v2455
        %v2649 = vpop.f32.mrf.mxu0
        %v2650 = vadd.f32 %v2436, %v2649
        %2651 = vmatmul.f32.gmra.mxu0 %v2458
        %v2652 = vpop.f32.mrf.mxu0
        %v2653 = vadd.f32 %v2436, %v2652
        %2654 = vmatmul.f32.gmra.mxu0 %v2461
        %v2655 = vpop.f32.mrf.mxu0
        %v2656 = vadd.f32 %v2436, %v2655
        %2657 = vmatmul.f32.gmra.mxu0 %v2464
        %v2658 = vpop.f32.mrf.mxu0
        %v2659 = vadd.f32 %v2436, %v2658
        %2660 = vmatmul.f32.gmra.mxu0 %v2467
        %v2661 = vpop.f32.mrf.mxu0
        %v2662 = vadd.f32 %v2436, %v2661
        %2663 = vmatmul.f32.gmra.mxu0 %v2470
        %v2664 = vpop.f32.mrf.mxu0
        %v2665 = vadd.f32 %v2436, %v2664
        %2666 = vmatmul.f32.gmra.mxu0 %v2473
        %v2667 = vpop.f32.mrf.mxu0
        %v2668 = vadd.f32 %v2436, %v2667
        %2669 = vmatmul.f32.gmra.mxu0 %v2476
        %v2670 = vpop.f32.mrf.mxu0
        %v2671 = vadd.f32 %v2436, %v2670
        %2672 = vmatmul.f32.gmra.mxu0 %v2479
        %v2673 = vpop.f32.mrf.mxu0
        %v2674 = vadd.f32 %v2436, %v2673
        %2675 = vmatmul.f32.gmra.mxu0 %v2482
        %v2676 = vpop.f32.mrf.mxu0
        %v2677 = vadd.f32 %v2436, %v2676
        %2678 = vmatmul.f32.gmra.mxu0 %v2485
        %v2679 = vpop.f32.mrf.mxu0
        %v2680 = vadd.f32 %v2436, %v2679
        %2681 = vmatmul.f32.gmra.mxu0 %v2488
        %v2682 = vpop.f32.mrf.mxu0
        %v2683 = vadd.f32 %v2436, %v2682
        %2684 = vmatmul.f32.gmra.mxu0 %v2491
        %v2685 = vpop.f32.mrf.mxu0
        %v2686 = vadd.f32 %v2436, %v2685
        %2687 = vdwg.mxu0
        %2688 = vmatpush.msra.mxu0 0.0
        %2689 = vmatpush.msra.mxu0 0.0
        %2690 = vmatpush.msra.mxu0 0.0
        %2691 = vmatpush.msra.mxu0 0.0
        %2692 = vmatpush.msra.mxu0 0.0
        %2693 = vmatpush.msra.mxu0 0.0
        %2694 = vmatpush.msra.mxu0 0.0
        %2695 = vmatpush.msra.mxu0 0.0
        %2696 = vmatpush.msra.mxu0 0.0
        %2697 = vmatpush.msra.mxu0 0.0
        %2698 = vmatpush.msra.mxu0 0.0
        %2699 = vmatpush.msra.mxu0 0.0
        %2700 = vmatpush.msra.mxu0 %v2430
        %2701 = vmatpush.msra.mxu0 %v2425
        %2702 = vmatpush.msra.mxu0 %v2420
        %2703 = vmatpush.msra.mxu0 %v2415
        %2704 = vmatmul.f32.gmra.mxu0 %v2446
        %v2705 = vpop.f32.mrf.mxu0
        %v2706 = vadd.f32 %v2437, %v2705
        %2707 = vmatmul.f32.gmra.mxu0 %v2449
        %v2708 = vpop.f32.mrf.mxu0
        %v2709 = vadd.f32 %v2437, %v2708
        %2710 = vmatmul.f32.gmra.mxu0 %v2452
        %v2711 = vpop.f32.mrf.mxu0
        %v2712 = vadd.f32 %v2437, %v2711
        %2713 = vmatmul.f32.gmra.mxu0 %v2455
        %v2714 = vpop.f32.mrf.mxu0
        %v2715 = vadd.f32 %v2437, %v2714
        %2716 = vmatmul.f32.gmra.mxu0 %v2458
        %v2717 = vpop.f32.mrf.mxu0
        %v2718 = vadd.f32 %v2437, %v2717
        %2719 = vmatmul.f32.gmra.mxu0 %v2461
        %v2720 = vpop.f32.mrf.mxu0
        %v2721 = vadd.f32 %v2437, %v2720
        %2722 = vmatmul.f32.gmra.mxu0 %v2464
        %v2723 = vpop.f32.mrf.mxu0
        %v2724 = vadd.f32 %v2437, %v2723
        %2725 = vmatmul.f32.gmra.mxu0 %v2467
        %v2726 = vpop.f32.mrf.mxu0
        %v2727 = vadd.f32 %v2437, %v2726
        %2728 = vmatmul.f32.gmra.mxu0 %v2470
        %v2729 = vpop.f32.mrf.mxu0
        %v2730 = vadd.f32 %v2437, %v2729
        %2731 = vmatmul.f32.gmra.mxu0 %v2473
        %v2732 = vpop.f32.mrf.mxu0
        %v2733 = vadd.f32 %v2437, %v2732
        %2734 = vmatmul.f32.gmra.mxu0 %v2476
        %v2735 = vpop.f32.mrf.mxu0
        %v2736 = vadd.f32 %v2437, %v2735
        %2737 = vmatmul.f32.gmra.mxu0 %v2479
        %v2738 = vpop.f32.mrf.mxu0
        %v2739 = vadd.f32 %v2437, %v2738
        %2740 = vmatmul.f32.gmra.mxu0 %v2482
        %v2741 = vpop.f32.mrf.mxu0
        %v2742 = vadd.f32 %v2437, %v2741
        %2743 = vmatmul.f32.gmra.mxu0 %v2485
        %v2744 = vpop.f32.mrf.mxu0
        %v2745 = vadd.f32 %v2437, %v2744
        %2746 = vmatmul.f32.gmra.mxu0 %v2488
        %v2747 = vpop.f32.mrf.mxu0
        %v2748 = vadd.f32 %v2437, %v2747
        %2749 = vmatmul.f32.gmra.mxu0 %v2491
        %v2750 = vpop.f32.mrf.mxu0
        %v2751 = vadd.f32 %v2437, %v2750
        %2752 = vdwg.mxu0
        %2753 = vmatpush.msra.mxu0 0.0
        %2754 = vmatpush.msra.mxu0 0.0
        %2755 = vmatpush.msra.mxu0 0.0
        %2756 = vmatpush.msra.mxu0 0.0
        %2757 = vmatpush.msra.mxu0 0.0
        %2758 = vmatpush.msra.mxu0 0.0
        %2759 = vmatpush.msra.mxu0 0.0
        %2760 = vmatpush.msra.mxu0 0.0
        %2761 = vmatpush.msra.mxu0 0.0
        %2762 = vmatpush.msra.mxu0 0.0
        %2763 = vmatpush.msra.mxu0 0.0
        %2764 = vmatpush.msra.mxu0 0.0
        %2765 = vmatpush.msra.mxu0 %v2431
        %2766 = vmatpush.msra.mxu0 %v2426
        %2767 = vmatpush.msra.mxu0 %v2421
        %2768 = vmatpush.msra.mxu0 %v2416
        %2769 = vmatmul.f32.gmra.mxu0 %v2446
        %v2770 = vpop.f32.mrf.mxu0
        %v2771 = vadd.f32 %v2438, %v2770
        %2772 = vmatmul.f32.gmra.mxu0 %v2449
        %v2773 = vpop.f32.mrf.mxu0
        %v2774 = vadd.f32 %v2438, %v2773
        %2775 = vmatmul.f32.gmra.mxu0 %v2452
        %v2776 = vpop.f32.mrf.mxu0
        %v2777 = vadd.f32 %v2438, %v2776
        %2778 = vmatmul.f32.gmra.mxu0 %v2455
        %v2779 = vpop.f32.mrf.mxu0
        %v2780 = vadd.f32 %v2438, %v2779
        %2781 = vmatmul.f32.gmra.mxu0 %v2458
        %v2782 = vpop.f32.mrf.mxu0
        %v2783 = vadd.f32 %v2438, %v2782
        %2784 = vmatmul.f32.gmra.mxu0 %v2461
        %v2785 = vpop.f32.mrf.mxu0
        %v2786 = vadd.f32 %v2438, %v2785
        %2787 = vmatmul.f32.gmra.mxu0 %v2464
        %v2788 = vpop.f32.mrf.mxu0
        %v2789 = vadd.f32 %v2438, %v2788
        %2790 = vmatmul.f32.gmra.mxu0 %v2467
        %v2791 = vpop.f32.mrf.mxu0
        %v2792 = vadd.f32 %v2438, %v2791
        %2793 = vmatmul.f32.gmra.mxu0 %v2470
        %v2794 = vpop.f32.mrf.mxu0
        %v2795 = vadd.f32 %v2438, %v2794
        %2796 = vmatmul.f32.gmra.mxu0 %v2473
        %v2797 = vpop.f32.mrf.mxu0
        %v2798 = vadd.f32 %v2438, %v2797
        %2799 = vmatmul.f32.gmra.mxu0 %v2476
        %v2800 = vpop.f32.mrf.mxu0
        %v2801 = vadd.f32 %v2438, %v2800
        %2802 = vmatmul.f32.gmra.mxu0 %v2479
        %v2803 = vpop.f32.mrf.mxu0
        %v2804 = vadd.f32 %v2438, %v2803
        %2805 = vmatmul.f32.gmra.mxu0 %v2482
        %v2806 = vpop.f32.mrf.mxu0
        %v2807 = vadd.f32 %v2438, %v2806
        %2808 = vmatmul.f32.gmra.mxu0 %v2485
        %v2809 = vpop.f32.mrf.mxu0
        %v2810 = vadd.f32 %v2438, %v2809
        %2811 = vmatmul.f32.gmra.mxu0 %v2488
        %v2812 = vpop.f32.mrf.mxu0
        %v2813 = vadd.f32 %v2438, %v2812
        %2814 = vmatmul.f32.gmra.mxu0 %v2491
        %v2815 = vpop.f32.mrf.mxu0
        %v2816 = vadd.f32 %v2438, %v2815
        %2817 = vdwg.mxu0
        %v2818 = vadd.f32 %v2396, %v2511
        %v2819 = vadd.f32 %v2397, %v2514
        %v2820 = vadd.f32 %v2398, %v2517
        %v2821 = vadd.f32 %v2399, %v2520
        %v2822 = vadd.f32 %v2400, %v2523
        %v2823 = vadd.f32 %v2401, %v2526
        %v2824 = vadd.f32 %v2402, %v2529
        %v2825 = vadd.f32 %v2403, %v2532
        %v2826 = vadd.f32 %v2404, %v2535
        %v2827 = vadd.f32 %v2405, %v2538
        %v2828 = vadd.f32 %v2406, %v2541
        %v2829 = vadd.f32 %v2407, %v2544
        %v2830 = vadd.f32 %v2408, %v2547
        %v2831 = vadd.f32 %v2409, %v2550
        %v2832 = vadd.f32 %v2410, %v2553
        %v2833 = vadd.f32 %v2411, %v2556
        %v2834 = vmax.f32 %v2818, 0.0
        %v2835 = vmax.f32 %v2819, 0.0
        %v2836 = vmax.f32 %v2820, 0.0
        %v2837 = vmax.f32 %v2821, 0.0
        %v2838 = vmax.f32 %v2822, 0.0
        %v2839 = vmax.f32 %v2823, 0.0
        %v2840 = vmax.f32 %v2824, 0.0
        %v2841 = vmax.f32 %v2825, 0.0
        %v2842 = vmax.f32 %v2826, 0.0
        %v2843 = vmax.f32 %v2827, 0.0
        %v2844 = vmax.f32 %v2828, 0.0
        %v2845 = vmax.f32 %v2829, 0.0
        %v2846 = vmax.f32 %v2830, 0.0
        %v2847 = vmax.f32 %v2831, 0.0
        %v2848 = vmax.f32 %v2832, 0.0
        %v2849 = vmax.f32 %v2833, 0.0
        %v2850 = vld [vmem:[%s9] sm:$0xff]
        %v2851 = vld [vmem:[%s9 + $0x8] sm:$0xff]
        %v2852 = vld [vmem:[%s9 + $0x10] sm:$0xff]
        %v2853 = vld [vmem:[%s9 + $0x18] sm:$0xff]
        %v2854 = vld [vmem:[%s9 + $0x20] sm:$0xff]
        %v2855 = vld [vmem:[%s9 + $0x28] sm:$0xff]
        %v2856 = vld [vmem:[%s9 + $0x30] sm:$0xff]
        %v2857 = vld [vmem:[%s9 + $0x38] sm:$0xff]
        %v2858 = vld [vmem:[%s9 + $0x40] sm:$0xff]
        %v2859 = vld [vmem:[%s9 + $0x48] sm:$0xff]
        %v2860 = vld [vmem:[%s9 + $0x50] sm:$0xff]
        %v2861 = vld [vmem:[%s9 + $0x58] sm:$0xff]
        %v2862 = vld [vmem:[%s9 + $0x60] sm:$0xff]
        %v2863 = vld [vmem:[%s9 + $0x68] sm:$0xff]
        %v2864 = vld [vmem:[%s9 + $0x70] sm:$0xff]
        %v2865 = vld [vmem:[%s9 + $0x78] sm:$0xff]
        %v2866 = vld [vmem:[%s10] sm:$0x1]
        %v2868 = vperm.slane %v2866, 0
        %2870 = vmatpush.msra.mxu0 %v2865
        %2871 = vmatpush.msra.mxu0 %v2864
        %2872 = vmatpush.msra.mxu0 %v2863
        %2873 = vmatpush.msra.mxu0 %v2862
        %2874 = vmatpush.msra.mxu0 %v2861
        %2875 = vmatpush.msra.mxu0 %v2860
        %2876 = vmatpush.msra.mxu0 %v2859
        %2877 = vmatpush.msra.mxu0 %v2858
        %2878 = vmatpush.msra.mxu0 %v2857
        %2879 = vmatpush.msra.mxu0 %v2856
        %2880 = vmatpush.msra.mxu0 %v2855
        %2881 = vmatpush.msra.mxu0 %v2854
        %2882 = vmatpush.msra.mxu0 %v2853
        %2883 = vmatpush.msra.mxu0 %v2852
        %2884 = vmatpush.msra.mxu0 %v2851
        %2885 = vmatpush.msra.mxu0 %v2850
        %2886 = vmatmul.f32.gmra.mxu0 %v2834
        %v2887 = vpop.f32.mrf.mxu0
        %v2888 = vadd.f32 %v2868, %v2887
        %2889 = vmatmul.f32.gmra.mxu0 %v2835
        %v2890 = vpop.f32.mrf.mxu0
        %v2891 = vadd.f32 %v2868, %v2890
        %2892 = vmatmul.f32.gmra.mxu0 %v2836
        %v2893 = vpop.f32.mrf.mxu0
        %v2894 = vadd.f32 %v2868, %v2893
        %2895 = vmatmul.f32.gmra.mxu0 %v2837
        %v2896 = vpop.f32.mrf.mxu0
        %v2897 = vadd.f32 %v2868, %v2896
        %2898 = vmatmul.f32.gmra.mxu0 %v2838
        %v2899 = vpop.f32.mrf.mxu0
        %v2900 = vadd.f32 %v2868, %v2899
        %2901 = vmatmul.f32.gmra.mxu0 %v2839
        %v2902 = vpop.f32.mrf.mxu0
        %v2903 = vadd.f32 %v2868, %v2902
        %2904 = vmatmul.f32.gmra.mxu0 %v2840
        %v2905 = vpop.f32.mrf.mxu0
        %v2906 = vadd.f32 %v2868, %v2905
        %2907 = vmatmul.f32.gmra.mxu0 %v2841
        %v2908 = vpop.f32.mrf.mxu0
        %v2909 = vadd.f32 %v2868, %v2908
        %2910 = vmatmul.f32.gmra.mxu0 %v2842
        %v2911 = vpop.f32.mrf.mxu0
        %v2912 = vadd.f32 %v2868, %v2911
        %2913 = vmatmul.f32.gmra.mxu0 %v2843
        %v2914 = vpop.f32.mrf.mxu0
        %v2915 = vadd.f32 %v2868, %v2914
        %2916 = vmatmul.f32.gmra.mxu0 %v2844
        %v2917 = vpop.f32.mrf.mxu0
        %v2918 = vadd.f32 %v2868, %v2917
        %2919 = vmatmul.f32.gmra.mxu0 %v2845
        %v2920 = vpop.f32.mrf.mxu0
        %v2921 = vadd.f32 %v2868, %v2920
        %2922 = vmatmul.f32.gmra.mxu0 %v2846
        %v2923 = vpop.f32.mrf.mxu0
        %v2924 = vadd.f32 %v2868, %v2923
        %2925 = vmatmul.f32.gmra.mxu0 %v2847
        %v2926 = vpop.f32.mrf.mxu0
        %v2927 = vadd.f32 %v2868, %v2926
        %2928 = vmatmul.f32.gmra.mxu0 %v2848
        %v2929 = vpop.f32.mrf.mxu0
        %v2930 = vadd.f32 %v2868, %v2929
        %2931 = vmatmul.f32.gmra.mxu0 %v2849
        %v2932 = vpop.f32.mrf.mxu0
        %v2933 = vadd.f32 %v2868, %v2932
        %2934 = vdwg.mxu0
        %v2935 = vmax.f32 %v2888, 0.0
        %v2936 = vmax.f32 %v2891, 0.0
        %v2937 = vmax.f32 %v2894, 0.0
        %v2938 = vmax.f32 %v2897, 0.0
        %v2939 = vmax.f32 %v2900, 0.0
        %v2940 = vmax.f32 %v2903, 0.0
        %v2941 = vmax.f32 %v2906, 0.0
        %v2942 = vmax.f32 %v2909, 0.0
        %v2943 = vmax.f32 %v2912, 0.0
        %v2944 = vmax.f32 %v2915, 0.0
        %v2945 = vmax.f32 %v2918, 0.0
        %v2946 = vmax.f32 %v2921, 0.0
        %v2947 = vmax.f32 %v2924, 0.0
        %v2948 = vmax.f32 %v2927, 0.0
        %v2949 = vmax.f32 %v2930, 0.0
        %v2950 = vmax.f32 %v2933, 0.0
        %v2951 = vld [vmem:[%s11] sm:$0xff]
        %v2952 = vld [vmem:[%s11 + $0x8] sm:$0xff]
        %v2953 = vld [vmem:[%s11 + $0x10] sm:$0xff]
        %v2954 = vld [vmem:[%s11 + $0x18] sm:$0xff]
        %v2955 = vld [vmem:[%s11 + $0x20] sm:$0xff]
        %v2956 = vld [vmem:[%s11 + $0x28] sm:$0xff]
        %v2957 = vld [vmem:[%s11 + $0x30] sm:$0xff]
        %v2958 = vld [vmem:[%s11 + $0x38] sm:$0xff]
        %v2959 = vld [vmem:[%s11 + $0x40] sm:$0xff]
        %v2960 = vld [vmem:[%s11 + $0x48] sm:$0xff]
        %v2961 = vld [vmem:[%s11 + $0x50] sm:$0xff]
        %v2962 = vld [vmem:[%s11 + $0x58] sm:$0xff]
        %v2963 = vld [vmem:[%s11 + $0x60] sm:$0xff]
        %v2964 = vld [vmem:[%s11 + $0x68] sm:$0xff]
        %v2965 = vld [vmem:[%s11 + $0x70] sm:$0xff]
        %v2966 = vld [vmem:[%s11 + $0x78] sm:$0xff]
        %2967 = vmatpush.msra.mxu0 %v2966
        %2968 = vmatpush.msra.mxu0 %v2965
        %2969 = vmatpush.msra.mxu0 %v2964
        %2970 = vmatpush.msra.mxu0 %v2963
        %2971 = vmatpush.msra.mxu0 %v2962
        %2972 = vmatpush.msra.mxu0 %v2961
        %2973 = vmatpush.msra.mxu0 %v2960
        %2974 = vmatpush.msra.mxu0 %v2959
        %2975 = vmatpush.msra.mxu0 %v2958
        %2976 = vmatpush.msra.mxu0 %v2957
        %2977 = vmatpush.msra.mxu0 %v2956
        %2978 = vmatpush.msra.mxu0 %v2955
        %2979 = vmatpush.msra.mxu0 %v2954
        %2980 = vmatpush.msra.mxu0 %v2953
        %2981 = vmatpush.msra.mxu0 %v2952
        %2982 = vmatpush.msra.mxu0 %v2951
        %2983 = vmatmul.f32.gmra.mxu0 %v2935
        %v2984 = vpop.f32.mrf.mxu0
        %v2985 = vadd.f32 0.0, %v2984
        %2986 = vmatmul.f32.gmra.mxu0 %v2936
        %v2987 = vpop.f32.mrf.mxu0
        %v2988 = vadd.f32 0.0, %v2987
        %2989 = vmatmul.f32.gmra.mxu0 %v2937
        %v2990 = vpop.f32.mrf.mxu0
        %v2991 = vadd.f32 0.0, %v2990
        %2992 = vmatmul.f32.gmra.mxu0 %v2938
        %v2993 = vpop.f32.mrf.mxu0
        %v2994 = vadd.f32 0.0, %v2993
        %2995 = vmatmul.f32.gmra.mxu0 %v2939
        %v2996 = vpop.f32.mrf.mxu0
        %v2997 = vadd.f32 0.0, %v2996
        %2998 = vmatmul.f32.gmra.mxu0 %v2940
        %v2999 = vpop.f32.mrf.mxu0
        %v3000 = vadd.f32 0.0, %v2999
        %3001 = vmatmul.f32.gmra.mxu0 %v2941
        %v3002 = vpop.f32.mrf.mxu0
        %v3003 = vadd.f32 0.0, %v3002
        %3004 = vmatmul.f32.gmra.mxu0 %v2942
        %v3005 = vpop.f32.mrf.mxu0
        %v3006 = vadd.f32 0.0, %v3005
        %3007 = vmatmul.f32.gmra.mxu0 %v2943
        %v3008 = vpop.f32.mrf.mxu0
        %v3009 = vadd.f32 0.0, %v3008
        %3010 = vmatmul.f32.gmra.mxu0 %v2944
        %v3011 = vpop.f32.mrf.mxu0
        %v3012 = vadd.f32 0.0, %v3011
        %3013 = vmatmul.f32.gmra.mxu0 %v2945
        %v3014 = vpop.f32.mrf.mxu0
        %v3015 = vadd.f32 0.0, %v3014
        %3016 = vmatmul.f32.gmra.mxu0 %v2946
        %v3017 = vpop.f32.mrf.mxu0
        %v3018 = vadd.f32 0.0, %v3017
        %3019 = vmatmul.f32.gmra.mxu0 %v2947
        %v3020 = vpop.f32.mrf.mxu0
        %v3021 = vadd.f32 0.0, %v3020
        %3022 = vmatmul.f32.gmra.mxu0 %v2948
        %v3023 = vpop.f32.mrf.mxu0
        %v3024 = vadd.f32 0.0, %v3023
        %3025 = vmatmul.f32.gmra.mxu0 %v2949
        %v3026 = vpop.f32.mrf.mxu0
        %v3027 = vadd.f32 0.0, %v3026
        %3028 = vmatmul.f32.gmra.mxu0 %v2950
        %v3029 = vpop.f32.mrf.mxu0
        %v3030 = vadd.f32 0.0, %v3029
        %3031 = vdwg.mxu0
        %v3032 = vadd.f32 %v2818, %v2985
        %v3033 = vadd.f32 %v2819, %v2988
        %v3034 = vadd.f32 %v2820, %v2991
        %v3035 = vadd.f32 %v2821, %v2994
        %v3036 = vadd.f32 %v2822, %v2997
        %v3037 = vadd.f32 %v2823, %v3000
        %v3038 = vadd.f32 %v2824, %v3003
        %v3039 = vadd.f32 %v2825, %v3006
        %v3040 = vadd.f32 %v2826, %v3009
        %v3041 = vadd.f32 %v2827, %v3012
        %v3042 = vadd.f32 %v2828, %v3015
        %v3043 = vadd.f32 %v2829, %v3018
        %v3044 = vadd.f32 %v2830, %v3021
        %v3045 = vadd.f32 %v2831, %v3024
        %v3046 = vadd.f32 %v2832, %v3027
        %v3047 = vadd.f32 %v2833, %v3030
        %v3048 = vld [vmem:[%s12] sm:$0x1]
        %v3050 = vperm.slane %v3048, 0
        %v3052 = vadd.f32 %v3032, %v3050
        %v3053 = vadd.f32 %v3033, %v3050
        %v3054 = vadd.f32 %v3034, %v3050
        %v3055 = vadd.f32 %v3035, %v3050
        %v3056 = vadd.f32 %v3036, %v3050
        %v3057 = vadd.f32 %v3037, %v3050
        %v3058 = vadd.f32 %v3038, %v3050
        %v3059 = vadd.f32 %v3039, %v3050
        %v3060 = vadd.f32 %v3040, %v3050
        %v3061 = vadd.f32 %v3041, %v3050
        %v3062 = vadd.f32 %v3042, %v3050
        %v3063 = vadd.f32 %v3043, %v3050
        %v3064 = vadd.f32 %v3044, %v3050
        %v3065 = vadd.f32 %v3045, %v3050
        %v3066 = vadd.f32 %v3046, %v3050
        %v3067 = vadd.f32 %v3047, %v3050
        %v3068 = vadd.f32 %v3052, %v2576
        %v3069 = vadd.f32 %v3053, %v2579
        %v3070 = vadd.f32 %v3054, %v2582
        %v3071 = vadd.f32 %v3055, %v2585
        %v3072 = vadd.f32 %v3056, %v2588
        %v3073 = vadd.f32 %v3057, %v2591
        %v3074 = vadd.f32 %v3058, %v2594
        %v3075 = vadd.f32 %v3059, %v2597
        %v3076 = vadd.f32 %v3060, %v2600
        %v3077 = vadd.f32 %v3061, %v2603
        %v3078 = vadd.f32 %v3062, %v2606
        %v3079 = vadd.f32 %v3063, %v2609
        %v3080 = vadd.f32 %v3064, %v2612
        %v3081 = vadd.f32 %v3065, %v2615
        %v3082 = vadd.f32 %v3066, %v2618
        %v3083 = vadd.f32 %v3067, %v2621
        %v3084 = vmax.f32 %v3068, 0.0
        %v3085 = vmax.f32 %v3069, 0.0
        %v3086 = vmax.f32 %v3070, 0.0
        %v3087 = vmax.f32 %v3071, 0.0
        %v3088 = vmax.f32 %v3072, 0.0
        %v3089 = vmax.f32 %v3073, 0.0
        %v3090 = vmax.f32 %v3074, 0.0
        %v3091 = vmax.f32 %v3075, 0.0
        %v3092 = vmax.f32 %v3076, 0.0
        %v3093 = vmax.f32 %v3077, 0.0
        %v3094 = vmax.f32 %v3078, 0.0
        %v3095 = vmax.f32 %v3079, 0.0
        %v3096 = vmax.f32 %v3080, 0.0
        %v3097 = vmax.f32 %v3081, 0.0
        %v3098 = vmax.f32 %v3082, 0.0
        %v3099 = vmax.f32 %v3083, 0.0
        %s3100 = scalar_lea.vmem %s9, 128
        %v3101 = vld [vmem:[%s3100] sm:$0xff]
        %v3102 = vld [vmem:[%s3100 + $0x8] sm:$0xff]
        %v3103 = vld [vmem:[%s3100 + $0x10] sm:$0xff]
        %v3104 = vld [vmem:[%s3100 + $0x18] sm:$0xff]
        %v3105 = vld [vmem:[%s3100 + $0x20] sm:$0xff]
        %v3106 = vld [vmem:[%s3100 + $0x28] sm:$0xff]
        %v3107 = vld [vmem:[%s3100 + $0x30] sm:$0xff]
        %v3108 = vld [vmem:[%s3100 + $0x38] sm:$0xff]
        %v3109 = vld [vmem:[%s3100 + $0x40] sm:$0xff]
        %v3110 = vld [vmem:[%s3100 + $0x48] sm:$0xff]
        %v3111 = vld [vmem:[%s3100 + $0x50] sm:$0xff]
        %v3112 = vld [vmem:[%s3100 + $0x58] sm:$0xff]
        %v3113 = vld [vmem:[%s3100 + $0x60] sm:$0xff]
        %v3114 = vld [vmem:[%s3100 + $0x68] sm:$0xff]
        %v3115 = vld [vmem:[%s3100 + $0x70] sm:$0xff]
        %v3116 = vld [vmem:[%s3100 + $0x78] sm:$0xff]
        %s3117 = scalar_lea.vmem %s10, 1
        %v3118 = vld [vmem:[%s3117] sm:$0x1]
        %v3120 = vperm.slane %v3118, 0
        %3122 = vmatpush.msra.mxu0 %v3116
        %3123 = vmatpush.msra.mxu0 %v3115
        %3124 = vmatpush.msra.mxu0 %v3114
        %3125 = vmatpush.msra.mxu0 %v3113
        %3126 = vmatpush.msra.mxu0 %v3112
        %3127 = vmatpush.msra.mxu0 %v3111
        %3128 = vmatpush.msra.mxu0 %v3110
        %3129 = vmatpush.msra.mxu0 %v3109
        %3130 = vmatpush.msra.mxu0 %v3108
        %3131 = vmatpush.msra.mxu0 %v3107
        %3132 = vmatpush.msra.mxu0 %v3106
        %3133 = vmatpush.msra.mxu0 %v3105
        %3134 = vmatpush.msra.mxu0 %v3104
        %3135 = vmatpush.msra.mxu0 %v3103
        %3136 = vmatpush.msra.mxu0 %v3102
        %3137 = vmatpush.msra.mxu0 %v3101
        %3138 = vmatmul.f32.gmra.mxu0 %v3084
        %v3139 = vpop.f32.mrf.mxu0
        %v3140 = vadd.f32 %v3120, %v3139
        %3141 = vmatmul.f32.gmra.mxu0 %v3085
        %v3142 = vpop.f32.mrf.mxu0
        %v3143 = vadd.f32 %v3120, %v3142
        %3144 = vmatmul.f32.gmra.mxu0 %v3086
        %v3145 = vpop.f32.mrf.mxu0
        %v3146 = vadd.f32 %v3120, %v3145
        %3147 = vmatmul.f32.gmra.mxu0 %v3087
        %v3148 = vpop.f32.mrf.mxu0
        %v3149 = vadd.f32 %v3120, %v3148
        %3150 = vmatmul.f32.gmra.mxu0 %v3088
        %v3151 = vpop.f32.mrf.mxu0
        %v3152 = vadd.f32 %v3120, %v3151
        %3153 = vmatmul.f32.gmra.mxu0 %v3089
        %v3154 = vpop.f32.mrf.mxu0
        %v3155 = vadd.f32 %v3120, %v3154
        %3156 = vmatmul.f32.gmra.mxu0 %v3090
        %v3157 = vpop.f32.mrf.mxu0
        %v3158 = vadd.f32 %v3120, %v3157
        %3159 = vmatmul.f32.gmra.mxu0 %v3091
        %v3160 = vpop.f32.mrf.mxu0
        %v3161 = vadd.f32 %v3120, %v3160
        %3162 = vmatmul.f32.gmra.mxu0 %v3092
        %v3163 = vpop.f32.mrf.mxu0
        %v3164 = vadd.f32 %v3120, %v3163
        %3165 = vmatmul.f32.gmra.mxu0 %v3093
        %v3166 = vpop.f32.mrf.mxu0
        %v3167 = vadd.f32 %v3120, %v3166
        %3168 = vmatmul.f32.gmra.mxu0 %v3094
        %v3169 = vpop.f32.mrf.mxu0
        %v3170 = vadd.f32 %v3120, %v3169
        %3171 = vmatmul.f32.gmra.mxu0 %v3095
        %v3172 = vpop.f32.mrf.mxu0
        %v3173 = vadd.f32 %v3120, %v3172
        %3174 = vmatmul.f32.gmra.mxu0 %v3096
        %v3175 = vpop.f32.mrf.mxu0
        %v3176 = vadd.f32 %v3120, %v3175
        %3177 = vmatmul.f32.gmra.mxu0 %v3097
        %v3178 = vpop.f32.mrf.mxu0
        %v3179 = vadd.f32 %v3120, %v3178
        %3180 = vmatmul.f32.gmra.mxu0 %v3098
        %v3181 = vpop.f32.mrf.mxu0
        %v3182 = vadd.f32 %v3120, %v3181
        %3183 = vmatmul.f32.gmra.mxu0 %v3099
        %v3184 = vpop.f32.mrf.mxu0
        %v3185 = vadd.f32 %v3120, %v3184
        %3186 = vdwg.mxu0
        %v3187 = vmax.f32 %v3140, 0.0
        %v3188 = vmax.f32 %v3143, 0.0
        %v3189 = vmax.f32 %v3146, 0.0
        %v3190 = vmax.f32 %v3149, 0.0
        %v3191 = vmax.f32 %v3152, 0.0
        %v3192 = vmax.f32 %v3155, 0.0
        %v3193 = vmax.f32 %v3158, 0.0
        %v3194 = vmax.f32 %v3161, 0.0
        %v3195 = vmax.f32 %v3164, 0.0
        %v3196 = vmax.f32 %v3167, 0.0
        %v3197 = vmax.f32 %v3170, 0.0
        %v3198 = vmax.f32 %v3173, 0.0
        %v3199 = vmax.f32 %v3176, 0.0
        %v3200 = vmax.f32 %v3179, 0.0
        %v3201 = vmax.f32 %v3182, 0.0
        %v3202 = vmax.f32 %v3185, 0.0
        %s3203 = scalar_lea.vmem %s11, 128
        %v3204 = vld [vmem:[%s3203] sm:$0xff]
        %v3205 = vld [vmem:[%s3203 + $0x8] sm:$0xff]
        %v3206 = vld [vmem:[%s3203 + $0x10] sm:$0xff]
        %v3207 = vld [vmem:[%s3203 + $0x18] sm:$0xff]
        %v3208 = vld [vmem:[%s3203 + $0x20] sm:$0xff]
        %v3209 = vld [vmem:[%s3203 + $0x28] sm:$0xff]
        %v3210 = vld [vmem:[%s3203 + $0x30] sm:$0xff]
        %v3211 = vld [vmem:[%s3203 + $0x38] sm:$0xff]
        %v3212 = vld [vmem:[%s3203 + $0x40] sm:$0xff]
        %v3213 = vld [vmem:[%s3203 + $0x48] sm:$0xff]
        %v3214 = vld [vmem:[%s3203 + $0x50] sm:$0xff]
        %v3215 = vld [vmem:[%s3203 + $0x58] sm:$0xff]
        %v3216 = vld [vmem:[%s3203 + $0x60] sm:$0xff]
        %v3217 = vld [vmem:[%s3203 + $0x68] sm:$0xff]
        %v3218 = vld [vmem:[%s3203 + $0x70] sm:$0xff]
        %v3219 = vld [vmem:[%s3203 + $0x78] sm:$0xff]
        %3220 = vmatpush.msra.mxu0 %v3219
        %3221 = vmatpush.msra.mxu0 %v3218
        %3222 = vmatpush.msra.mxu0 %v3217
        %3223 = vmatpush.msra.mxu0 %v3216
        %3224 = vmatpush.msra.mxu0 %v3215
        %3225 = vmatpush.msra.mxu0 %v3214
        %3226 = vmatpush.msra.mxu0 %v3213
        %3227 = vmatpush.msra.mxu0 %v3212
        %3228 = vmatpush.msra.mxu0 %v3211
        %3229 = vmatpush.msra.mxu0 %v3210
        %3230 = vmatpush.msra.mxu0 %v3209
        %3231 = vmatpush.msra.mxu0 %v3208
        %3232 = vmatpush.msra.mxu0 %v3207
        %3233 = vmatpush.msra.mxu0 %v3206
        %3234 = vmatpush.msra.mxu0 %v3205
        %3235 = vmatpush.msra.mxu0 %v3204
        %3236 = vmatmul.f32.gmra.mxu0 %v3187
        %v3237 = vpop.f32.mrf.mxu0
        %v3238 = vadd.f32 0.0, %v3237
        %3239 = vmatmul.f32.gmra.mxu0 %v3188
        %v3240 = vpop.f32.mrf.mxu0
        %v3241 = vadd.f32 0.0, %v3240
        %3242 = vmatmul.f32.gmra.mxu0 %v3189
        %v3243 = vpop.f32.mrf.mxu0
        %v3244 = vadd.f32 0.0, %v3243
        %3245 = vmatmul.f32.gmra.mxu0 %v3190
        %v3246 = vpop.f32.mrf.mxu0
        %v3247 = vadd.f32 0.0, %v3246
        %3248 = vmatmul.f32.gmra.mxu0 %v3191
        %v3249 = vpop.f32.mrf.mxu0
        %v3250 = vadd.f32 0.0, %v3249
        %3251 = vmatmul.f32.gmra.mxu0 %v3192
        %v3252 = vpop.f32.mrf.mxu0
        %v3253 = vadd.f32 0.0, %v3252
        %3254 = vmatmul.f32.gmra.mxu0 %v3193
        %v3255 = vpop.f32.mrf.mxu0
        %v3256 = vadd.f32 0.0, %v3255
        %3257 = vmatmul.f32.gmra.mxu0 %v3194
        %v3258 = vpop.f32.mrf.mxu0
        %v3259 = vadd.f32 0.0, %v3258
        %3260 = vmatmul.f32.gmra.mxu0 %v3195
        %v3261 = vpop.f32.mrf.mxu0
        %v3262 = vadd.f32 0.0, %v3261
        %3263 = vmatmul.f32.gmra.mxu0 %v3196
        %v3264 = vpop.f32.mrf.mxu0
        %v3265 = vadd.f32 0.0, %v3264
        %3266 = vmatmul.f32.gmra.mxu0 %v3197
        %v3267 = vpop.f32.mrf.mxu0
        %v3268 = vadd.f32 0.0, %v3267
        %3269 = vmatmul.f32.gmra.mxu0 %v3198
        %v3270 = vpop.f32.mrf.mxu0
        %v3271 = vadd.f32 0.0, %v3270
        %3272 = vmatmul.f32.gmra.mxu0 %v3199
        %v3273 = vpop.f32.mrf.mxu0
        %v3274 = vadd.f32 0.0, %v3273
        %3275 = vmatmul.f32.gmra.mxu0 %v3200
        %v3276 = vpop.f32.mrf.mxu0
        %v3277 = vadd.f32 0.0, %v3276
        %3278 = vmatmul.f32.gmra.mxu0 %v3201
        %v3279 = vpop.f32.mrf.mxu0
        %v3280 = vadd.f32 0.0, %v3279
        %3281 = vmatmul.f32.gmra.mxu0 %v3202
        %v3282 = vpop.f32.mrf.mxu0
        %v3283 = vadd.f32 0.0, %v3282
        %3284 = vdwg.mxu0
        %v3285 = vadd.f32 %v3068, %v3238
        %v3286 = vadd.f32 %v3069, %v3241
        %v3287 = vadd.f32 %v3070, %v3244
        %v3288 = vadd.f32 %v3071, %v3247
        %v3289 = vadd.f32 %v3072, %v3250
        %v3290 = vadd.f32 %v3073, %v3253
        %v3291 = vadd.f32 %v3074, %v3256
        %v3292 = vadd.f32 %v3075, %v3259
        %v3293 = vadd.f32 %v3076, %v3262
        %v3294 = vadd.f32 %v3077, %v3265
        %v3295 = vadd.f32 %v3078, %v3268
        %v3296 = vadd.f32 %v3079, %v3271
        %v3297 = vadd.f32 %v3080, %v3274
        %v3298 = vadd.f32 %v3081, %v3277
        %v3299 = vadd.f32 %v3082, %v3280
        %v3300 = vadd.f32 %v3083, %v3283
        %s3301 = scalar_lea.vmem %s12, 1
        %v3302 = vld [vmem:[%s3301] sm:$0x1]
        %v3304 = vperm.slane %v3302, 0
        %v3306 = vadd.f32 %v3285, %v3304
        %v3307 = vadd.f32 %v3286, %v3304
        %v3308 = vadd.f32 %v3287, %v3304
        %v3309 = vadd.f32 %v3288, %v3304
        %v3310 = vadd.f32 %v3289, %v3304
        %v3311 = vadd.f32 %v3290, %v3304
        %v3312 = vadd.f32 %v3291, %v3304
        %v3313 = vadd.f32 %v3292, %v3304
        %v3314 = vadd.f32 %v3293, %v3304
        %v3315 = vadd.f32 %v3294, %v3304
        %v3316 = vadd.f32 %v3295, %v3304
        %v3317 = vadd.f32 %v3296, %v3304
        %v3318 = vadd.f32 %v3297, %v3304
        %v3319 = vadd.f32 %v3298, %v3304
        %v3320 = vadd.f32 %v3299, %v3304
        %v3321 = vadd.f32 %v3300, %v3304
        %v3322 = vadd.f32 %v3306, %v2641
        %v3323 = vadd.f32 %v3307, %v2644
        %v3324 = vadd.f32 %v3308, %v2647
        %v3325 = vadd.f32 %v3309, %v2650
        %v3326 = vadd.f32 %v3310, %v2653
        %v3327 = vadd.f32 %v3311, %v2656
        %v3328 = vadd.f32 %v3312, %v2659
        %v3329 = vadd.f32 %v3313, %v2662
        %v3330 = vadd.f32 %v3314, %v2665
        %v3331 = vadd.f32 %v3315, %v2668
        %v3332 = vadd.f32 %v3316, %v2671
        %v3333 = vadd.f32 %v3317, %v2674
        %v3334 = vadd.f32 %v3318, %v2677
        %v3335 = vadd.f32 %v3319, %v2680
        %v3336 = vadd.f32 %v3320, %v2683
        %v3337 = vadd.f32 %v3321, %v2686
        %v3338 = vmax.f32 %v3322, 0.0
        %v3339 = vmax.f32 %v3323, 0.0
        %v3340 = vmax.f32 %v3324, 0.0
        %v3341 = vmax.f32 %v3325, 0.0
        %v3342 = vmax.f32 %v3326, 0.0
        %v3343 = vmax.f32 %v3327, 0.0
        %v3344 = vmax.f32 %v3328, 0.0
        %v3345 = vmax.f32 %v3329, 0.0
        %v3346 = vmax.f32 %v3330, 0.0
        %v3347 = vmax.f32 %v3331, 0.0
        %v3348 = vmax.f32 %v3332, 0.0
        %v3349 = vmax.f32 %v3333, 0.0
        %v3350 = vmax.f32 %v3334, 0.0
        %v3351 = vmax.f32 %v3335, 0.0
        %v3352 = vmax.f32 %v3336, 0.0
        %v3353 = vmax.f32 %v3337, 0.0
        %s3354 = scalar_lea.vmem %s9, 256
        %v3355 = vld [vmem:[%s3354] sm:$0xff]
        %v3356 = vld [vmem:[%s3354 + $0x8] sm:$0xff]
        %v3357 = vld [vmem:[%s3354 + $0x10] sm:$0xff]
        %v3358 = vld [vmem:[%s3354 + $0x18] sm:$0xff]
        %v3359 = vld [vmem:[%s3354 + $0x20] sm:$0xff]
        %v3360 = vld [vmem:[%s3354 + $0x28] sm:$0xff]
        %v3361 = vld [vmem:[%s3354 + $0x30] sm:$0xff]
        %v3362 = vld [vmem:[%s3354 + $0x38] sm:$0xff]
        %v3363 = vld [vmem:[%s3354 + $0x40] sm:$0xff]
        %v3364 = vld [vmem:[%s3354 + $0x48] sm:$0xff]
        %v3365 = vld [vmem:[%s3354 + $0x50] sm:$0xff]
        %v3366 = vld [vmem:[%s3354 + $0x58] sm:$0xff]
        %v3367 = vld [vmem:[%s3354 + $0x60] sm:$0xff]
        %v3368 = vld [vmem:[%s3354 + $0x68] sm:$0xff]
        %v3369 = vld [vmem:[%s3354 + $0x70] sm:$0xff]
        %v3370 = vld [vmem:[%s3354 + $0x78] sm:$0xff]
        %s3371 = scalar_lea.vmem %s10, 2
        %v3372 = vld [vmem:[%s3371] sm:$0x1]
        %v3374 = vperm.slane %v3372, 0
        %3376 = vmatpush.msra.mxu0 %v3370
        %3377 = vmatpush.msra.mxu0 %v3369
        %3378 = vmatpush.msra.mxu0 %v3368
        %3379 = vmatpush.msra.mxu0 %v3367
        %3380 = vmatpush.msra.mxu0 %v3366
        %3381 = vmatpush.msra.mxu0 %v3365
        %3382 = vmatpush.msra.mxu0 %v3364
        %3383 = vmatpush.msra.mxu0 %v3363
        %3384 = vmatpush.msra.mxu0 %v3362
        %3385 = vmatpush.msra.mxu0 %v3361
        %3386 = vmatpush.msra.mxu0 %v3360
        %3387 = vmatpush.msra.mxu0 %v3359
        %3388 = vmatpush.msra.mxu0 %v3358
        %3389 = vmatpush.msra.mxu0 %v3357
        %3390 = vmatpush.msra.mxu0 %v3356
        %3391 = vmatpush.msra.mxu0 %v3355
        %3392 = vmatmul.f32.gmra.mxu0 %v3338
        %v3393 = vpop.f32.mrf.mxu0
        %v3394 = vadd.f32 %v3374, %v3393
        %3395 = vmatmul.f32.gmra.mxu0 %v3339
        %v3396 = vpop.f32.mrf.mxu0
        %v3397 = vadd.f32 %v3374, %v3396
        %3398 = vmatmul.f32.gmra.mxu0 %v3340
        %v3399 = vpop.f32.mrf.mxu0
        %v3400 = vadd.f32 %v3374, %v3399
        %3401 = vmatmul.f32.gmra.mxu0 %v3341
        %v3402 = vpop.f32.mrf.mxu0
        %v3403 = vadd.f32 %v3374, %v3402
        %3404 = vmatmul.f32.gmra.mxu0 %v3342
        %v3405 = vpop.f32.mrf.mxu0
        %v3406 = vadd.f32 %v3374, %v3405
        %3407 = vmatmul.f32.gmra.mxu0 %v3343
        %v3408 = vpop.f32.mrf.mxu0
        %v3409 = vadd.f32 %v3374, %v3408
        %3410 = vmatmul.f32.gmra.mxu0 %v3344
        %v3411 = vpop.f32.mrf.mxu0
        %v3412 = vadd.f32 %v3374, %v3411
        %3413 = vmatmul.f32.gmra.mxu0 %v3345
        %v3414 = vpop.f32.mrf.mxu0
        %v3415 = vadd.f32 %v3374, %v3414
        %3416 = vmatmul.f32.gmra.mxu0 %v3346
        %v3417 = vpop.f32.mrf.mxu0
        %v3418 = vadd.f32 %v3374, %v3417
        %3419 = vmatmul.f32.gmra.mxu0 %v3347
        %v3420 = vpop.f32.mrf.mxu0
        %v3421 = vadd.f32 %v3374, %v3420
        %3422 = vmatmul.f32.gmra.mxu0 %v3348
        %v3423 = vpop.f32.mrf.mxu0
        %v3424 = vadd.f32 %v3374, %v3423
        %3425 = vmatmul.f32.gmra.mxu0 %v3349
        %v3426 = vpop.f32.mrf.mxu0
        %v3427 = vadd.f32 %v3374, %v3426
        %3428 = vmatmul.f32.gmra.mxu0 %v3350
        %v3429 = vpop.f32.mrf.mxu0
        %v3430 = vadd.f32 %v3374, %v3429
        %3431 = vmatmul.f32.gmra.mxu0 %v3351
        %v3432 = vpop.f32.mrf.mxu0
        %v3433 = vadd.f32 %v3374, %v3432
        %3434 = vmatmul.f32.gmra.mxu0 %v3352
        %v3435 = vpop.f32.mrf.mxu0
        %v3436 = vadd.f32 %v3374, %v3435
        %3437 = vmatmul.f32.gmra.mxu0 %v3353
        %v3438 = vpop.f32.mrf.mxu0
        %v3439 = vadd.f32 %v3374, %v3438
        %3440 = vdwg.mxu0
        %v3441 = vmax.f32 %v3394, 0.0
        %v3442 = vmax.f32 %v3397, 0.0
        %v3443 = vmax.f32 %v3400, 0.0
        %v3444 = vmax.f32 %v3403, 0.0
        %v3445 = vmax.f32 %v3406, 0.0
        %v3446 = vmax.f32 %v3409, 0.0
        %v3447 = vmax.f32 %v3412, 0.0
        %v3448 = vmax.f32 %v3415, 0.0
        %v3449 = vmax.f32 %v3418, 0.0
        %v3450 = vmax.f32 %v3421, 0.0
        %v3451 = vmax.f32 %v3424, 0.0
        %v3452 = vmax.f32 %v3427, 0.0
        %v3453 = vmax.f32 %v3430, 0.0
        %v3454 = vmax.f32 %v3433, 0.0
        %v3455 = vmax.f32 %v3436, 0.0
        %v3456 = vmax.f32 %v3439, 0.0
        %s3457 = scalar_lea.vmem %s11, 256
        %v3458 = vld [vmem:[%s3457] sm:$0xff]
        %v3459 = vld [vmem:[%s3457 + $0x8] sm:$0xff]
        %v3460 = vld [vmem:[%s3457 + $0x10] sm:$0xff]
        %v3461 = vld [vmem:[%s3457 + $0x18] sm:$0xff]
        %v3462 = vld [vmem:[%s3457 + $0x20] sm:$0xff]
        %v3463 = vld [vmem:[%s3457 + $0x28] sm:$0xff]
        %v3464 = vld [vmem:[%s3457 + $0x30] sm:$0xff]
        %v3465 = vld [vmem:[%s3457 + $0x38] sm:$0xff]
        %v3466 = vld [vmem:[%s3457 + $0x40] sm:$0xff]
        %v3467 = vld [vmem:[%s3457 + $0x48] sm:$0xff]
        %v3468 = vld [vmem:[%s3457 + $0x50] sm:$0xff]
        %v3469 = vld [vmem:[%s3457 + $0x58] sm:$0xff]
        %v3470 = vld [vmem:[%s3457 + $0x60] sm:$0xff]
        %v3471 = vld [vmem:[%s3457 + $0x68] sm:$0xff]
        %v3472 = vld [vmem:[%s3457 + $0x70] sm:$0xff]
        %v3473 = vld [vmem:[%s3457 + $0x78] sm:$0xff]
        %3474 = vmatpush.msra.mxu0 %v3473
        %3475 = vmatpush.msra.mxu0 %v3472
        %3476 = vmatpush.msra.mxu0 %v3471
        %3477 = vmatpush.msra.mxu0 %v3470
        %3478 = vmatpush.msra.mxu0 %v3469
        %3479 = vmatpush.msra.mxu0 %v3468
        %3480 = vmatpush.msra.mxu0 %v3467
        %3481 = vmatpush.msra.mxu0 %v3466
        %3482 = vmatpush.msra.mxu0 %v3465
        %3483 = vmatpush.msra.mxu0 %v3464
        %3484 = vmatpush.msra.mxu0 %v3463
        %3485 = vmatpush.msra.mxu0 %v3462
        %3486 = vmatpush.msra.mxu0 %v3461
        %3487 = vmatpush.msra.mxu0 %v3460
        %3488 = vmatpush.msra.mxu0 %v3459
        %3489 = vmatpush.msra.mxu0 %v3458
        %3490 = vmatmul.f32.gmra.mxu0 %v3441
        %v3491 = vpop.f32.mrf.mxu0
        %v3492 = vadd.f32 0.0, %v3491
        %3493 = vmatmul.f32.gmra.mxu0 %v3442
        %v3494 = vpop.f32.mrf.mxu0
        %v3495 = vadd.f32 0.0, %v3494
        %3496 = vmatmul.f32.gmra.mxu0 %v3443
        %v3497 = vpop.f32.mrf.mxu0
        %v3498 = vadd.f32 0.0, %v3497
        %3499 = vmatmul.f32.gmra.mxu0 %v3444
        %v3500 = vpop.f32.mrf.mxu0
        %v3501 = vadd.f32 0.0, %v3500
        %3502 = vmatmul.f32.gmra.mxu0 %v3445
        %v3503 = vpop.f32.mrf.mxu0
        %v3504 = vadd.f32 0.0, %v3503
        %3505 = vmatmul.f32.gmra.mxu0 %v3446
        %v3506 = vpop.f32.mrf.mxu0
        %v3507 = vadd.f32 0.0, %v3506
        %3508 = vmatmul.f32.gmra.mxu0 %v3447
        %v3509 = vpop.f32.mrf.mxu0
        %v3510 = vadd.f32 0.0, %v3509
        %3511 = vmatmul.f32.gmra.mxu0 %v3448
        %v3512 = vpop.f32.mrf.mxu0
        %v3513 = vadd.f32 0.0, %v3512
        %3514 = vmatmul.f32.gmra.mxu0 %v3449
        %v3515 = vpop.f32.mrf.mxu0
        %v3516 = vadd.f32 0.0, %v3515
        %3517 = vmatmul.f32.gmra.mxu0 %v3450
        %v3518 = vpop.f32.mrf.mxu0
        %v3519 = vadd.f32 0.0, %v3518
        %3520 = vmatmul.f32.gmra.mxu0 %v3451
        %v3521 = vpop.f32.mrf.mxu0
        %v3522 = vadd.f32 0.0, %v3521
        %3523 = vmatmul.f32.gmra.mxu0 %v3452
        %v3524 = vpop.f32.mrf.mxu0
        %v3525 = vadd.f32 0.0, %v3524
        %3526 = vmatmul.f32.gmra.mxu0 %v3453
        %v3527 = vpop.f32.mrf.mxu0
        %v3528 = vadd.f32 0.0, %v3527
        %3529 = vmatmul.f32.gmra.mxu0 %v3454
        %v3530 = vpop.f32.mrf.mxu0
        %v3531 = vadd.f32 0.0, %v3530
        %3532 = vmatmul.f32.gmra.mxu0 %v3455
        %v3533 = vpop.f32.mrf.mxu0
        %v3534 = vadd.f32 0.0, %v3533
        %3535 = vmatmul.f32.gmra.mxu0 %v3456
        %v3536 = vpop.f32.mrf.mxu0
        %v3537 = vadd.f32 0.0, %v3536
        %3538 = vdwg.mxu0
        %v3539 = vadd.f32 %v3322, %v3492
        %v3540 = vadd.f32 %v3323, %v3495
        %v3541 = vadd.f32 %v3324, %v3498
        %v3542 = vadd.f32 %v3325, %v3501
        %v3543 = vadd.f32 %v3326, %v3504
        %v3544 = vadd.f32 %v3327, %v3507
        %v3545 = vadd.f32 %v3328, %v3510
        %v3546 = vadd.f32 %v3329, %v3513
        %v3547 = vadd.f32 %v3330, %v3516
        %v3548 = vadd.f32 %v3331, %v3519
        %v3549 = vadd.f32 %v3332, %v3522
        %v3550 = vadd.f32 %v3333, %v3525
        %v3551 = vadd.f32 %v3334, %v3528
        %v3552 = vadd.f32 %v3335, %v3531
        %v3553 = vadd.f32 %v3336, %v3534
        %v3554 = vadd.f32 %v3337, %v3537
        %s3555 = scalar_lea.vmem %s12, 2
        %v3556 = vld [vmem:[%s3555] sm:$0x1]
        %v3558 = vperm.slane %v3556, 0
        %v3560 = vadd.f32 %v3539, %v3558
        %v3561 = vadd.f32 %v3540, %v3558
        %v3562 = vadd.f32 %v3541, %v3558
        %v3563 = vadd.f32 %v3542, %v3558
        %v3564 = vadd.f32 %v3543, %v3558
        %v3565 = vadd.f32 %v3544, %v3558
        %v3566 = vadd.f32 %v3545, %v3558
        %v3567 = vadd.f32 %v3546, %v3558
        %v3568 = vadd.f32 %v3547, %v3558
        %v3569 = vadd.f32 %v3548, %v3558
        %v3570 = vadd.f32 %v3549, %v3558
        %v3571 = vadd.f32 %v3550, %v3558
        %v3572 = vadd.f32 %v3551, %v3558
        %v3573 = vadd.f32 %v3552, %v3558
        %v3574 = vadd.f32 %v3553, %v3558
        %v3575 = vadd.f32 %v3554, %v3558
        %v3576 = vadd.f32 %v3560, %v2706
        %v3577 = vadd.f32 %v3561, %v2709
        %v3578 = vadd.f32 %v3562, %v2712
        %v3579 = vadd.f32 %v3563, %v2715
        %v3580 = vadd.f32 %v3564, %v2718
        %v3581 = vadd.f32 %v3565, %v2721
        %v3582 = vadd.f32 %v3566, %v2724
        %v3583 = vadd.f32 %v3567, %v2727
        %v3584 = vadd.f32 %v3568, %v2730
        %v3585 = vadd.f32 %v3569, %v2733
        %v3586 = vadd.f32 %v3570, %v2736
        %v3587 = vadd.f32 %v3571, %v2739
        %v3588 = vadd.f32 %v3572, %v2742
        %v3589 = vadd.f32 %v3573, %v2745
        %v3590 = vadd.f32 %v3574, %v2748
        %v3591 = vadd.f32 %v3575, %v2751
        %v3592 = vmax.f32 %v3576, 0.0
        %v3593 = vmax.f32 %v3577, 0.0
        %v3594 = vmax.f32 %v3578, 0.0
        %v3595 = vmax.f32 %v3579, 0.0
        %v3596 = vmax.f32 %v3580, 0.0
        %v3597 = vmax.f32 %v3581, 0.0
        %v3598 = vmax.f32 %v3582, 0.0
        %v3599 = vmax.f32 %v3583, 0.0
        %v3600 = vmax.f32 %v3584, 0.0
        %v3601 = vmax.f32 %v3585, 0.0
        %v3602 = vmax.f32 %v3586, 0.0
        %v3603 = vmax.f32 %v3587, 0.0
        %v3604 = vmax.f32 %v3588, 0.0
        %v3605 = vmax.f32 %v3589, 0.0
        %v3606 = vmax.f32 %v3590, 0.0
        %v3607 = vmax.f32 %v3591, 0.0
        %s3608 = scalar_lea.vmem %s9, 384
        %v3609 = vld [vmem:[%s3608] sm:$0xff]
        %v3610 = vld [vmem:[%s3608 + $0x8] sm:$0xff]
        %v3611 = vld [vmem:[%s3608 + $0x10] sm:$0xff]
        %v3612 = vld [vmem:[%s3608 + $0x18] sm:$0xff]
        %v3613 = vld [vmem:[%s3608 + $0x20] sm:$0xff]
        %v3614 = vld [vmem:[%s3608 + $0x28] sm:$0xff]
        %v3615 = vld [vmem:[%s3608 + $0x30] sm:$0xff]
        %v3616 = vld [vmem:[%s3608 + $0x38] sm:$0xff]
        %v3617 = vld [vmem:[%s3608 + $0x40] sm:$0xff]
        %v3618 = vld [vmem:[%s3608 + $0x48] sm:$0xff]
        %v3619 = vld [vmem:[%s3608 + $0x50] sm:$0xff]
        %v3620 = vld [vmem:[%s3608 + $0x58] sm:$0xff]
        %v3621 = vld [vmem:[%s3608 + $0x60] sm:$0xff]
        %v3622 = vld [vmem:[%s3608 + $0x68] sm:$0xff]
        %v3623 = vld [vmem:[%s3608 + $0x70] sm:$0xff]
        %v3624 = vld [vmem:[%s3608 + $0x78] sm:$0xff]
        %s3625 = scalar_lea.vmem %s10, 3
        %v3626 = vld [vmem:[%s3625] sm:$0x1]
        %v3628 = vperm.slane %v3626, 0
        %3630 = vmatpush.msra.mxu0 %v3624
        %3631 = vmatpush.msra.mxu0 %v3623
        %3632 = vmatpush.msra.mxu0 %v3622
        %3633 = vmatpush.msra.mxu0 %v3621
        %3634 = vmatpush.msra.mxu0 %v3620
        %3635 = vmatpush.msra.mxu0 %v3619
        %3636 = vmatpush.msra.mxu0 %v3618
        %3637 = vmatpush.msra.mxu0 %v3617
        %3638 = vmatpush.msra.mxu0 %v3616
        %3639 = vmatpush.msra.mxu0 %v3615
        %3640 = vmatpush.msra.mxu0 %v3614
        %3641 = vmatpush.msra.mxu0 %v3613
        %3642 = vmatpush.msra.mxu0 %v3612
        %3643 = vmatpush.msra.mxu0 %v3611
        %3644 = vmatpush.msra.mxu0 %v3610
        %3645 = vmatpush.msra.mxu0 %v3609
        %3646 = vmatmul.f32.gmra.mxu0 %v3592
        %v3647 = vpop.f32.mrf.mxu0
        %v3648 = vadd.f32 %v3628, %v3647
        %3649 = vmatmul.f32.gmra.mxu0 %v3593
        %v3650 = vpop.f32.mrf.mxu0
        %v3651 = vadd.f32 %v3628, %v3650
        %3652 = vmatmul.f32.gmra.mxu0 %v3594
        %v3653 = vpop.f32.mrf.mxu0
        %v3654 = vadd.f32 %v3628, %v3653
        %3655 = vmatmul.f32.gmra.mxu0 %v3595
        %v3656 = vpop.f32.mrf.mxu0
        %v3657 = vadd.f32 %v3628, %v3656
        %3658 = vmatmul.f32.gmra.mxu0 %v3596
        %v3659 = vpop.f32.mrf.mxu0
        %v3660 = vadd.f32 %v3628, %v3659
        %3661 = vmatmul.f32.gmra.mxu0 %v3597
        %v3662 = vpop.f32.mrf.mxu0
        %v3663 = vadd.f32 %v3628, %v3662
        %3664 = vmatmul.f32.gmra.mxu0 %v3598
        %v3665 = vpop.f32.mrf.mxu0
        %v3666 = vadd.f32 %v3628, %v3665
        %3667 = vmatmul.f32.gmra.mxu0 %v3599
        %v3668 = vpop.f32.mrf.mxu0
        %v3669 = vadd.f32 %v3628, %v3668
        %3670 = vmatmul.f32.gmra.mxu0 %v3600
        %v3671 = vpop.f32.mrf.mxu0
        %v3672 = vadd.f32 %v3628, %v3671
        %3673 = vmatmul.f32.gmra.mxu0 %v3601
        %v3674 = vpop.f32.mrf.mxu0
        %v3675 = vadd.f32 %v3628, %v3674
        %3676 = vmatmul.f32.gmra.mxu0 %v3602
        %v3677 = vpop.f32.mrf.mxu0
        %v3678 = vadd.f32 %v3628, %v3677
        %3679 = vmatmul.f32.gmra.mxu0 %v3603
        %v3680 = vpop.f32.mrf.mxu0
        %v3681 = vadd.f32 %v3628, %v3680
        %3682 = vmatmul.f32.gmra.mxu0 %v3604
        %v3683 = vpop.f32.mrf.mxu0
        %v3684 = vadd.f32 %v3628, %v3683
        %3685 = vmatmul.f32.gmra.mxu0 %v3605
        %v3686 = vpop.f32.mrf.mxu0
        %v3687 = vadd.f32 %v3628, %v3686
        %3688 = vmatmul.f32.gmra.mxu0 %v3606
        %v3689 = vpop.f32.mrf.mxu0
        %v3690 = vadd.f32 %v3628, %v3689
        %3691 = vmatmul.f32.gmra.mxu0 %v3607
        %v3692 = vpop.f32.mrf.mxu0
        %v3693 = vadd.f32 %v3628, %v3692
        %3694 = vdwg.mxu0
        %v3695 = vmax.f32 %v3648, 0.0
        %v3696 = vmax.f32 %v3651, 0.0
        %v3697 = vmax.f32 %v3654, 0.0
        %v3698 = vmax.f32 %v3657, 0.0
        %v3699 = vmax.f32 %v3660, 0.0
        %v3700 = vmax.f32 %v3663, 0.0
        %v3701 = vmax.f32 %v3666, 0.0
        %v3702 = vmax.f32 %v3669, 0.0
        %v3703 = vmax.f32 %v3672, 0.0
        %v3704 = vmax.f32 %v3675, 0.0
        %v3705 = vmax.f32 %v3678, 0.0
        %v3706 = vmax.f32 %v3681, 0.0
        %v3707 = vmax.f32 %v3684, 0.0
        %v3708 = vmax.f32 %v3687, 0.0
        %v3709 = vmax.f32 %v3690, 0.0
        %v3710 = vmax.f32 %v3693, 0.0
        %s3711 = scalar_lea.vmem %s11, 384
        %v3712 = vld [vmem:[%s3711] sm:$0xff]
        %v3713 = vld [vmem:[%s3711 + $0x8] sm:$0xff]
        %v3714 = vld [vmem:[%s3711 + $0x10] sm:$0xff]
        %v3715 = vld [vmem:[%s3711 + $0x18] sm:$0xff]
        %v3716 = vld [vmem:[%s3711 + $0x20] sm:$0xff]
        %v3717 = vld [vmem:[%s3711 + $0x28] sm:$0xff]
        %v3718 = vld [vmem:[%s3711 + $0x30] sm:$0xff]
        %v3719 = vld [vmem:[%s3711 + $0x38] sm:$0xff]
        %v3720 = vld [vmem:[%s3711 + $0x40] sm:$0xff]
        %v3721 = vld [vmem:[%s3711 + $0x48] sm:$0xff]
        %v3722 = vld [vmem:[%s3711 + $0x50] sm:$0xff]
        %v3723 = vld [vmem:[%s3711 + $0x58] sm:$0xff]
        %v3724 = vld [vmem:[%s3711 + $0x60] sm:$0xff]
        %v3725 = vld [vmem:[%s3711 + $0x68] sm:$0xff]
        %v3726 = vld [vmem:[%s3711 + $0x70] sm:$0xff]
        %v3727 = vld [vmem:[%s3711 + $0x78] sm:$0xff]
        %3728 = vmatpush.msra.mxu0 %v3727
        %3729 = vmatpush.msra.mxu0 %v3726
        %3730 = vmatpush.msra.mxu0 %v3725
        %3731 = vmatpush.msra.mxu0 %v3724
        %3732 = vmatpush.msra.mxu0 %v3723
        %3733 = vmatpush.msra.mxu0 %v3722
        %3734 = vmatpush.msra.mxu0 %v3721
        %3735 = vmatpush.msra.mxu0 %v3720
        %3736 = vmatpush.msra.mxu0 %v3719
        %3737 = vmatpush.msra.mxu0 %v3718
        %3738 = vmatpush.msra.mxu0 %v3717
        %3739 = vmatpush.msra.mxu0 %v3716
        %3740 = vmatpush.msra.mxu0 %v3715
        %3741 = vmatpush.msra.mxu0 %v3714
        %3742 = vmatpush.msra.mxu0 %v3713
        %3743 = vmatpush.msra.mxu0 %v3712
        %3744 = vmatmul.f32.gmra.mxu0 %v3695
        %v3745 = vpop.f32.mrf.mxu0
        %v3746 = vadd.f32 0.0, %v3745
        %3747 = vmatmul.f32.gmra.mxu0 %v3696
        %v3748 = vpop.f32.mrf.mxu0
        %v3749 = vadd.f32 0.0, %v3748
        %3750 = vmatmul.f32.gmra.mxu0 %v3697
        %v3751 = vpop.f32.mrf.mxu0
        %v3752 = vadd.f32 0.0, %v3751
        %3753 = vmatmul.f32.gmra.mxu0 %v3698
        %v3754 = vpop.f32.mrf.mxu0
        %v3755 = vadd.f32 0.0, %v3754
        %3756 = vmatmul.f32.gmra.mxu0 %v3699
        %v3757 = vpop.f32.mrf.mxu0
        %v3758 = vadd.f32 0.0, %v3757
        %3759 = vmatmul.f32.gmra.mxu0 %v3700
        %v3760 = vpop.f32.mrf.mxu0
        %v3761 = vadd.f32 0.0, %v3760
        %3762 = vmatmul.f32.gmra.mxu0 %v3701
        %v3763 = vpop.f32.mrf.mxu0
        %v3764 = vadd.f32 0.0, %v3763
        %3765 = vmatmul.f32.gmra.mxu0 %v3702
        %v3766 = vpop.f32.mrf.mxu0
        %v3767 = vadd.f32 0.0, %v3766
        %3768 = vmatmul.f32.gmra.mxu0 %v3703
        %v3769 = vpop.f32.mrf.mxu0
        %v3770 = vadd.f32 0.0, %v3769
        %3771 = vmatmul.f32.gmra.mxu0 %v3704
        %v3772 = vpop.f32.mrf.mxu0
        %v3773 = vadd.f32 0.0, %v3772
        %3774 = vmatmul.f32.gmra.mxu0 %v3705
        %v3775 = vpop.f32.mrf.mxu0
        %v3776 = vadd.f32 0.0, %v3775
        %3777 = vmatmul.f32.gmra.mxu0 %v3706
        %v3778 = vpop.f32.mrf.mxu0
        %v3779 = vadd.f32 0.0, %v3778
        %3780 = vmatmul.f32.gmra.mxu0 %v3707
        %v3781 = vpop.f32.mrf.mxu0
        %v3782 = vadd.f32 0.0, %v3781
        %3783 = vmatmul.f32.gmra.mxu0 %v3708
        %v3784 = vpop.f32.mrf.mxu0
        %v3785 = vadd.f32 0.0, %v3784
        %3786 = vmatmul.f32.gmra.mxu0 %v3709
        %v3787 = vpop.f32.mrf.mxu0
        %v3788 = vadd.f32 0.0, %v3787
        %3789 = vmatmul.f32.gmra.mxu0 %v3710
        %v3790 = vpop.f32.mrf.mxu0
        %v3791 = vadd.f32 0.0, %v3790
        %3792 = vdwg.mxu0
        %v3793 = vadd.f32 %v3576, %v3746
        %v3794 = vadd.f32 %v3577, %v3749
        %v3795 = vadd.f32 %v3578, %v3752
        %v3796 = vadd.f32 %v3579, %v3755
        %v3797 = vadd.f32 %v3580, %v3758
        %v3798 = vadd.f32 %v3581, %v3761
        %v3799 = vadd.f32 %v3582, %v3764
        %v3800 = vadd.f32 %v3583, %v3767
        %v3801 = vadd.f32 %v3584, %v3770
        %v3802 = vadd.f32 %v3585, %v3773
        %v3803 = vadd.f32 %v3586, %v3776
        %v3804 = vadd.f32 %v3587, %v3779
        %v3805 = vadd.f32 %v3588, %v3782
        %v3806 = vadd.f32 %v3589, %v3785
        %v3807 = vadd.f32 %v3590, %v3788
        %v3808 = vadd.f32 %v3591, %v3791
        %s3809 = scalar_lea.vmem %s12, 3
        %v3810 = vld [vmem:[%s3809] sm:$0x1]
        %v3812 = vperm.slane %v3810, 0
        %v3814 = vadd.f32 %v3793, %v3812
        %v3815 = vadd.f32 %v3794, %v3812
        %v3816 = vadd.f32 %v3795, %v3812
        %v3817 = vadd.f32 %v3796, %v3812
        %v3818 = vadd.f32 %v3797, %v3812
        %v3819 = vadd.f32 %v3798, %v3812
        %v3820 = vadd.f32 %v3799, %v3812
        %v3821 = vadd.f32 %v3800, %v3812
        %v3822 = vadd.f32 %v3801, %v3812
        %v3823 = vadd.f32 %v3802, %v3812
        %v3824 = vadd.f32 %v3803, %v3812
        %v3825 = vadd.f32 %v3804, %v3812
        %v3826 = vadd.f32 %v3805, %v3812
        %v3827 = vadd.f32 %v3806, %v3812
        %v3828 = vadd.f32 %v3807, %v3812
        %v3829 = vadd.f32 %v3808, %v3812
        %v3830 = vadd.f32 %v3814, %v2771
        %v3831 = vadd.f32 %v3815, %v2774
        %v3832 = vadd.f32 %v3816, %v2777
        %v3833 = vadd.f32 %v3817, %v2780
        %v3834 = vadd.f32 %v3818, %v2783
        %v3835 = vadd.f32 %v3819, %v2786
        %v3836 = vadd.f32 %v3820, %v2789
        %v3837 = vadd.f32 %v3821, %v2792
        %v3838 = vadd.f32 %v3822, %v2795
        %v3839 = vadd.f32 %v3823, %v2798
        %v3840 = vadd.f32 %v3824, %v2801
        %v3841 = vadd.f32 %v3825, %v2804
        %v3842 = vadd.f32 %v3826, %v2807
        %v3843 = vadd.f32 %v3827, %v2810
        %v3844 = vadd.f32 %v3828, %v2813
        %v3845 = vadd.f32 %v3829, %v2816
        %v3846 = vmax.f32 %v3830, 0.0
        %v3847 = vmax.f32 %v3831, 0.0
        %v3848 = vmax.f32 %v3832, 0.0
        %v3849 = vmax.f32 %v3833, 0.0
        %v3850 = vmax.f32 %v3834, 0.0
        %v3851 = vmax.f32 %v3835, 0.0
        %v3852 = vmax.f32 %v3836, 0.0
        %v3853 = vmax.f32 %v3837, 0.0
        %v3854 = vmax.f32 %v3838, 0.0
        %v3855 = vmax.f32 %v3839, 0.0
        %v3856 = vmax.f32 %v3840, 0.0
        %v3857 = vmax.f32 %v3841, 0.0
        %v3858 = vmax.f32 %v3842, 0.0
        %v3859 = vmax.f32 %v3843, 0.0
        %v3860 = vmax.f32 %v3844, 0.0
        %v3861 = vmax.f32 %v3845, 0.0
        %s3862 = scalar_lea.vmem %s9, 512
        %v3863 = vld [vmem:[%s3862] sm:$0xff]
        %v3864 = vld [vmem:[%s3862 + $0x8] sm:$0xff]
        %v3865 = vld [vmem:[%s3862 + $0x10] sm:$0xff]
        %v3866 = vld [vmem:[%s3862 + $0x18] sm:$0xff]
        %v3867 = vld [vmem:[%s3862 + $0x20] sm:$0xff]
        %v3868 = vld [vmem:[%s3862 + $0x28] sm:$0xff]
        %v3869 = vld [vmem:[%s3862 + $0x30] sm:$0xff]
        %v3870 = vld [vmem:[%s3862 + $0x38] sm:$0xff]
        %v3871 = vld [vmem:[%s3862 + $0x40] sm:$0xff]
        %v3872 = vld [vmem:[%s3862 + $0x48] sm:$0xff]
        %v3873 = vld [vmem:[%s3862 + $0x50] sm:$0xff]
        %v3874 = vld [vmem:[%s3862 + $0x58] sm:$0xff]
        %v3875 = vld [vmem:[%s3862 + $0x60] sm:$0xff]
        %v3876 = vld [vmem:[%s3862 + $0x68] sm:$0xff]
        %v3877 = vld [vmem:[%s3862 + $0x70] sm:$0xff]
        %v3878 = vld [vmem:[%s3862 + $0x78] sm:$0xff]
        %s3879 = scalar_lea.vmem %s10, 4
        %v3880 = vld [vmem:[%s3879] sm:$0x1]
        %v3882 = vperm.slane %v3880, 0
        %3884 = vmatpush.msra.mxu0 %v3878
        %3885 = vmatpush.msra.mxu0 %v3877
        %3886 = vmatpush.msra.mxu0 %v3876
        %3887 = vmatpush.msra.mxu0 %v3875
        %3888 = vmatpush.msra.mxu0 %v3874
        %3889 = vmatpush.msra.mxu0 %v3873
        %3890 = vmatpush.msra.mxu0 %v3872
        %3891 = vmatpush.msra.mxu0 %v3871
        %3892 = vmatpush.msra.mxu0 %v3870
        %3893 = vmatpush.msra.mxu0 %v3869
        %3894 = vmatpush.msra.mxu0 %v3868
        %3895 = vmatpush.msra.mxu0 %v3867
        %3896 = vmatpush.msra.mxu0 %v3866
        %3897 = vmatpush.msra.mxu0 %v3865
        %3898 = vmatpush.msra.mxu0 %v3864
        %3899 = vmatpush.msra.mxu0 %v3863
        %3900 = vmatmul.f32.gmra.mxu0 %v3846
        %v3901 = vpop.f32.mrf.mxu0
        %v3902 = vadd.f32 %v3882, %v3901
        %3903 = vmatmul.f32.gmra.mxu0 %v3847
        %v3904 = vpop.f32.mrf.mxu0
        %v3905 = vadd.f32 %v3882, %v3904
        %3906 = vmatmul.f32.gmra.mxu0 %v3848
        %v3907 = vpop.f32.mrf.mxu0
        %v3908 = vadd.f32 %v3882, %v3907
        %3909 = vmatmul.f32.gmra.mxu0 %v3849
        %v3910 = vpop.f32.mrf.mxu0
        %v3911 = vadd.f32 %v3882, %v3910
        %3912 = vmatmul.f32.gmra.mxu0 %v3850
        %v3913 = vpop.f32.mrf.mxu0
        %v3914 = vadd.f32 %v3882, %v3913
        %3915 = vmatmul.f32.gmra.mxu0 %v3851
        %v3916 = vpop.f32.mrf.mxu0
        %v3917 = vadd.f32 %v3882, %v3916
        %3918 = vmatmul.f32.gmra.mxu0 %v3852
        %v3919 = vpop.f32.mrf.mxu0
        %v3920 = vadd.f32 %v3882, %v3919
        %3921 = vmatmul.f32.gmra.mxu0 %v3853
        %v3922 = vpop.f32.mrf.mxu0
        %v3923 = vadd.f32 %v3882, %v3922
        %3924 = vmatmul.f32.gmra.mxu0 %v3854
        %v3925 = vpop.f32.mrf.mxu0
        %v3926 = vadd.f32 %v3882, %v3925
        %3927 = vmatmul.f32.gmra.mxu0 %v3855
        %v3928 = vpop.f32.mrf.mxu0
        %v3929 = vadd.f32 %v3882, %v3928
        %3930 = vmatmul.f32.gmra.mxu0 %v3856
        %v3931 = vpop.f32.mrf.mxu0
        %v3932 = vadd.f32 %v3882, %v3931
        %3933 = vmatmul.f32.gmra.mxu0 %v3857
        %v3934 = vpop.f32.mrf.mxu0
        %v3935 = vadd.f32 %v3882, %v3934
        %3936 = vmatmul.f32.gmra.mxu0 %v3858
        %v3937 = vpop.f32.mrf.mxu0
        %v3938 = vadd.f32 %v3882, %v3937
        %3939 = vmatmul.f32.gmra.mxu0 %v3859
        %v3940 = vpop.f32.mrf.mxu0
        %v3941 = vadd.f32 %v3882, %v3940
        %3942 = vmatmul.f32.gmra.mxu0 %v3860
        %v3943 = vpop.f32.mrf.mxu0
        %v3944 = vadd.f32 %v3882, %v3943
        %3945 = vmatmul.f32.gmra.mxu0 %v3861
        %v3946 = vpop.f32.mrf.mxu0
        %v3947 = vadd.f32 %v3882, %v3946
        %3948 = vdwg.mxu0
        %v3949 = vmax.f32 %v3902, 0.0
        %v3950 = vmax.f32 %v3905, 0.0
        %v3951 = vmax.f32 %v3908, 0.0
        %v3952 = vmax.f32 %v3911, 0.0
        %v3953 = vmax.f32 %v3914, 0.0
        %v3954 = vmax.f32 %v3917, 0.0
        %v3955 = vmax.f32 %v3920, 0.0
        %v3956 = vmax.f32 %v3923, 0.0
        %v3957 = vmax.f32 %v3926, 0.0
        %v3958 = vmax.f32 %v3929, 0.0
        %v3959 = vmax.f32 %v3932, 0.0
        %v3960 = vmax.f32 %v3935, 0.0
        %v3961 = vmax.f32 %v3938, 0.0
        %v3962 = vmax.f32 %v3941, 0.0
        %v3963 = vmax.f32 %v3944, 0.0
        %v3964 = vmax.f32 %v3947, 0.0
        %s3965 = scalar_lea.vmem %s11, 512
        %v3966 = vld [vmem:[%s3965] sm:$0xff]
        %v3967 = vld [vmem:[%s3965 + $0x8] sm:$0xff]
        %v3968 = vld [vmem:[%s3965 + $0x10] sm:$0xff]
        %v3969 = vld [vmem:[%s3965 + $0x18] sm:$0xff]
        %v3970 = vld [vmem:[%s3965 + $0x20] sm:$0xff]
        %v3971 = vld [vmem:[%s3965 + $0x28] sm:$0xff]
        %v3972 = vld [vmem:[%s3965 + $0x30] sm:$0xff]
        %v3973 = vld [vmem:[%s3965 + $0x38] sm:$0xff]
        %v3974 = vld [vmem:[%s3965 + $0x40] sm:$0xff]
        %v3975 = vld [vmem:[%s3965 + $0x48] sm:$0xff]
        %v3976 = vld [vmem:[%s3965 + $0x50] sm:$0xff]
        %v3977 = vld [vmem:[%s3965 + $0x58] sm:$0xff]
        %v3978 = vld [vmem:[%s3965 + $0x60] sm:$0xff]
        %v3979 = vld [vmem:[%s3965 + $0x68] sm:$0xff]
        %v3980 = vld [vmem:[%s3965 + $0x70] sm:$0xff]
        %v3981 = vld [vmem:[%s3965 + $0x78] sm:$0xff]
        %3982 = vmatpush.msra.mxu0 %v3981
        %3983 = vmatpush.msra.mxu0 %v3980
        %3984 = vmatpush.msra.mxu0 %v3979
        %3985 = vmatpush.msra.mxu0 %v3978
        %3986 = vmatpush.msra.mxu0 %v3977
        %3987 = vmatpush.msra.mxu0 %v3976
        %3988 = vmatpush.msra.mxu0 %v3975
        %3989 = vmatpush.msra.mxu0 %v3974
        %3990 = vmatpush.msra.mxu0 %v3973
        %3991 = vmatpush.msra.mxu0 %v3972
        %3992 = vmatpush.msra.mxu0 %v3971
        %3993 = vmatpush.msra.mxu0 %v3970
        %3994 = vmatpush.msra.mxu0 %v3969
        %3995 = vmatpush.msra.mxu0 %v3968
        %3996 = vmatpush.msra.mxu0 %v3967
        %3997 = vmatpush.msra.mxu0 %v3966
        %3998 = vmatmul.f32.gmra.mxu0 %v3949
        %v3999 = vpop.f32.mrf.mxu0
        %v4000 = vadd.f32 0.0, %v3999
        %4001 = vmatmul.f32.gmra.mxu0 %v3950
        %v4002 = vpop.f32.mrf.mxu0
        %v4003 = vadd.f32 0.0, %v4002
        %4004 = vmatmul.f32.gmra.mxu0 %v3951
        %v4005 = vpop.f32.mrf.mxu0
        %v4006 = vadd.f32 0.0, %v4005
        %4007 = vmatmul.f32.gmra.mxu0 %v3952
        %v4008 = vpop.f32.mrf.mxu0
        %v4009 = vadd.f32 0.0, %v4008
        %4010 = vmatmul.f32.gmra.mxu0 %v3953
        %v4011 = vpop.f32.mrf.mxu0
        %v4012 = vadd.f32 0.0, %v4011
        %4013 = vmatmul.f32.gmra.mxu0 %v3954
        %v4014 = vpop.f32.mrf.mxu0
        %v4015 = vadd.f32 0.0, %v4014
        %4016 = vmatmul.f32.gmra.mxu0 %v3955
        %v4017 = vpop.f32.mrf.mxu0
        %v4018 = vadd.f32 0.0, %v4017
        %4019 = vmatmul.f32.gmra.mxu0 %v3956
        %v4020 = vpop.f32.mrf.mxu0
        %v4021 = vadd.f32 0.0, %v4020
        %4022 = vmatmul.f32.gmra.mxu0 %v3957
        %v4023 = vpop.f32.mrf.mxu0
        %v4024 = vadd.f32 0.0, %v4023
        %4025 = vmatmul.f32.gmra.mxu0 %v3958
        %v4026 = vpop.f32.mrf.mxu0
        %v4027 = vadd.f32 0.0, %v4026
        %4028 = vmatmul.f32.gmra.mxu0 %v3959
        %v4029 = vpop.f32.mrf.mxu0
        %v4030 = vadd.f32 0.0, %v4029
        %4031 = vmatmul.f32.gmra.mxu0 %v3960
        %v4032 = vpop.f32.mrf.mxu0
        %v4033 = vadd.f32 0.0, %v4032
        %4034 = vmatmul.f32.gmra.mxu0 %v3961
        %v4035 = vpop.f32.mrf.mxu0
        %v4036 = vadd.f32 0.0, %v4035
        %4037 = vmatmul.f32.gmra.mxu0 %v3962
        %v4038 = vpop.f32.mrf.mxu0
        %v4039 = vadd.f32 0.0, %v4038
        %4040 = vmatmul.f32.gmra.mxu0 %v3963
        %v4041 = vpop.f32.mrf.mxu0
        %v4042 = vadd.f32 0.0, %v4041
        %4043 = vmatmul.f32.gmra.mxu0 %v3964
        %v4044 = vpop.f32.mrf.mxu0
        %v4045 = vadd.f32 0.0, %v4044
        %4046 = vdwg.mxu0
        %v4047 = vadd.f32 %v3830, %v4000
        %v4048 = vadd.f32 %v3831, %v4003
        %v4049 = vadd.f32 %v3832, %v4006
        %v4050 = vadd.f32 %v3833, %v4009
        %v4051 = vadd.f32 %v3834, %v4012
        %v4052 = vadd.f32 %v3835, %v4015
        %v4053 = vadd.f32 %v3836, %v4018
        %v4054 = vadd.f32 %v3837, %v4021
        %v4055 = vadd.f32 %v3838, %v4024
        %v4056 = vadd.f32 %v3839, %v4027
        %v4057 = vadd.f32 %v3840, %v4030
        %v4058 = vadd.f32 %v3841, %v4033
        %v4059 = vadd.f32 %v3842, %v4036
        %v4060 = vadd.f32 %v3843, %v4039
        %v4061 = vadd.f32 %v3844, %v4042
        %v4062 = vadd.f32 %v3845, %v4045
        %s4063 = scalar_lea.vmem %s12, 4
        %v4064 = vld [vmem:[%s4063] sm:$0x1]
        %v4066 = vperm.slane %v4064, 0
        %v4068 = vadd.f32 %v4047, %v4066
        %v4069 = vadd.f32 %v4048, %v4066
        %v4070 = vadd.f32 %v4049, %v4066
        %v4071 = vadd.f32 %v4050, %v4066
        %v4072 = vadd.f32 %v4051, %v4066
        %v4073 = vadd.f32 %v4052, %v4066
        %v4074 = vadd.f32 %v4053, %v4066
        %v4075 = vadd.f32 %v4054, %v4066
        %v4076 = vadd.f32 %v4055, %v4066
        %v4077 = vadd.f32 %v4056, %v4066
        %v4078 = vadd.f32 %v4057, %v4066
        %v4079 = vadd.f32 %v4058, %v4066
        %v4080 = vadd.f32 %v4059, %v4066
        %v4081 = vadd.f32 %v4060, %v4066
        %v4082 = vadd.f32 %v4061, %v4066
        %v4083 = vadd.f32 %v4062, %v4066
        %v4084 = vmax.f32 %v4068, 0.0
        %v4085 = vmax.f32 %v4069, 0.0
        %v4086 = vmax.f32 %v4070, 0.0
        %v4087 = vmax.f32 %v4071, 0.0
        %v4088 = vmax.f32 %v4072, 0.0
        %v4089 = vmax.f32 %v4073, 0.0
        %v4090 = vmax.f32 %v4074, 0.0
        %v4091 = vmax.f32 %v4075, 0.0
        %v4092 = vmax.f32 %v4076, 0.0
        %v4093 = vmax.f32 %v4077, 0.0
        %v4094 = vmax.f32 %v4078, 0.0
        %v4095 = vmax.f32 %v4079, 0.0
        %v4096 = vmax.f32 %v4080, 0.0
        %v4097 = vmax.f32 %v4081, 0.0
        %v4098 = vmax.f32 %v4082, 0.0
        %v4099 = vmax.f32 %v4083, 0.0
        %v4100 = vld [vmem:[%s13] sm:$0x1]
        %v4101 = vld [vmem:[#allocation2] sm:$0x1]
        %4103 = vset.pattern.permute.xlu0 0
        %4104 = vperm.xlu0 %4103, %v4101
        %v4105 = vpop.permute.xlu0 %4104
        %v4107 = vperm.slane %v4105, 0
        %4108 = vmatpush.xpose.msra.mxu0 %v4099
        %4109 = vmatpush.xpose.msra.mxu0 %v4098
        %4110 = vmatpush.xpose.msra.mxu0 %v4097
        %4111 = vmatpush.xpose.msra.mxu0 %v4096
        %4112 = vmatpush.xpose.msra.mxu0 %v4095
        %4113 = vmatpush.xpose.msra.mxu0 %v4094
        %4114 = vmatpush.xpose.msra.mxu0 %v4093
        %4115 = vmatpush.xpose.msra.mxu0 %v4092
        %4116 = vmatpush.xpose.msra.mxu0 %v4091
        %4117 = vmatpush.xpose.msra.mxu0 %v4090
        %4118 = vmatpush.xpose.msra.mxu0 %v4089
        %4119 = vmatpush.xpose.msra.mxu0 %v4088
        %4120 = vmatpush.xpose.msra.mxu0 %v4087
        %4121 = vmatpush.xpose.msra.mxu0 %v4086
        %4122 = vmatpush.xpose.msra.mxu0 %v4085
        %4123 = vmatpush.xpose.msra.mxu0 %v4084
        %4124 = vmatmul.f32.gmra.mxu0 %v4100
        %v4125 = vpop.f32.mrf.mxu0
        %v4126 = vadd.f32 %v4107, %v4125
        %4127 = vdwg.mxu0
        %4128 = vst [vmem:[%s776] sm:$0x1] %v4126
        %s4129 = sand.u32 %s387, 1
        %s4130 = scalar_lea.sflag [#allocation5], %s4129
        %s4131 = sand.u32 %s387, 1
        %s4132 = scalar_lea.vmem [#allocation4], %s4131
        // Predicated region
        $region119: #{tpu_custom_call.1} parent=113 // pred_check
          %p4133 = pneg %p397
        $region120: #{tpu_custom_call.1} parent=113 // pred_check_branch
          %4135 = sbr.rel (%p4133) target = $region122
        $region121: #{tpu_custom_call.1} parent=113 // pred_region
          %4137 = vsyncadd %s4130, 0
          %s4138 = smul.addr %s35, 2
          %s4139 = sadd.s32 %s36, %s4138
          %s4140 = scalar_lea.hbm %s15, %s4139
          %s4142 = sshll.u32 %s4132, 4
          %s4143 = int_to_ptr.vmem [resolvable:$true] %s4142
          %s4144 = sshll.u32 %s4140, 4
          %s4145 = int_to_ptr.hbm [resolvable:$true] %s4144
          %4147 = dma.vmem_to_hbm [thread:$0]  %s4143, 16, %s4145, %s4130
        $region122: #{tpu_custom_call.1} parent=113 // pred_fallthru
          _
      $region114: #{tpu_custom_call.1} parent=5 // pred_fallthru
        _
      %p4148 = scmp.le.s32.totalorder 2, %s26
      // Predicated region
      $region123: #{tpu_custom_call.1} parent=5 // pred_check
        %p4149 = pneg %p4148
      $region124: #{tpu_custom_call.1} parent=5 // pred_check_branch
        %4151 = sbr.rel (%p4149) target = $region126
      $region125: #{tpu_custom_call.1} parent=5 // pred_region
        %s4152 = ssub.s32 %s26, 2
        // Predicated region
        $region127: #{tpu_custom_call.1} parent=125 // pred_check
          %p4153 = pneg %p403
        $region128: #{tpu_custom_call.1} parent=125 // pred_check_branch
          %4155 = sbr.rel (%p4153) target = $region130
        $region129: #{tpu_custom_call.1} parent=125 // pred_region
          %s4156 = sand.u32 %s388, 1
          %s4157 = scalar_lea.sflag [#allocation5], %s4156
          %s4158 = sand.u32 %s388, 1
          %s4159 = scalar_lea.vmem [#allocation4], %s4158
          %4161 = dma.done %s4157, 16
        $region130: #{tpu_custom_call.1} parent=125 // pred_fallthru
          _
      $region126: #{tpu_custom_call.1} parent=5 // pred_fallthru
        _
    $region6: #{tpu_custom_call.1} parent=1 // loop_footer
      %s30 = sadd.s32 1, %s26
    $region7: #{tpu_custom_call.1} parent=1 // loop_footer_branch
      %25 = sbr.rel target = $region3
    $region8: #{tpu_custom_call.1} parent=1 // loop_exit
      _
    %4162 = vsyncpa [#allocation5], 1
    %s4163 = scalar_lea.sflag [#allocation5], 1
    %4164 = vsyncpa %s4163, 1

</llo_original>
